<compile_context>
chip_gen: v5e
topology: v5e:2x2
jax: 0.10.0
libtpu: 0.0.40
codegen_flags: <defaults>
</compile_context>

<pallas_src>
import functools

import jax
import jax.numpy as jnp
from jax import lax
from jax.experimental import pallas as pl
from jax.experimental.pallas import tpu as pltpu

EPS = 1e-6
_HALO = 8                      # sublane-aligned halo rows supplied to each row tile


def _round_up(x, m):
    return (x + m - 1) // m * m


def _vmem_limit_bytes():
    # ~48 MiB on v7x (64 MiB physical), ~96 MiB on v5e/v6e (128 MiB physical).
    cap = 64 * 1024 * 1024
    try:
        info = pltpu.get_tpu_info()
        cap = int(getattr(info, "vmem_capacity_bytes", cap) or cap)
    except Exception:
        pass
    return min(cap * 3 // 4, 112 * 1024 * 1024)


# --------------------------------------------------------------------------
# In-kernel helpers
# --------------------------------------------------------------------------

def _rgb_to_ycbcr(r, g, b):
    y = 0.299 * r + 0.587 * g + 0.114 * b
    cb = (b - y) * 0.564 + 0.5
    cr = (r - y) * 0.713 + 0.5
    return y, cb, cr


def _conv3x3(x, w_ref, bases, accs):
    """Streamed 3x3 'same' conv of plane x accumulated into len(bases) outputs.

    Taps are generated one at a time (2 lane rolls + 6 sublane rolls per channel) and
    multiplied by SMEM weight scalars w_ref[base + tap]; wrap rows/cols are handled by the
    caller via zero padding / halo slack, so no per-roll masks are needed.
    """
    Hn, Wn = x.shape
    accs = list(accs)
    for dw in (-1, 0, 1):
        v = x if dw == 0 else pltpu.roll(x, shift=(-dw) % Wn, axis=1)
        for dh in (-1, 0, 1):
            t = v if dh == 0 else pltpu.roll(v, shift=(-dh) % Hn, axis=0)
            idx = (dh + 1) * 3 + (dw + 1)
            for j, b0 in enumerate(bases):
                contrib = t * w_ref[b0 + idx]
                accs[j] = contrib if accs[j] is None else accs[j] + contrib
    return accs


# --------------------------------------------------------------------------
# Fused forward kernel (one row tile per grid step)
# --------------------------------------------------------------------------

def _bread_kernel(img_ref, up_ref, dn_ref, gt_ref,
                  wi_ref, bi_ref, wn_ref, bn_ref, wf_ref, bf_ref, wc_ref, bc_ref,
                  illumi_ref, tia_ref, att_ref, ngt_ref, res_ref, nss_ref, fd_ref,
                  out_ref, cb_ref, cr_ref, cbpe_ref, crpe_ref, sse_ref,
                  *, H, W, TH):
    i = pl.program_id(1)
    first = i == 0
    last = i == pl.num_programs(1) - 1

    def ext_plane(c):
        # (TH + 2*_HALO, Wp) extended plane: halo-above | tile | halo-below.
        u = jnp.where(first, 0.0, up_ref[0, c])
        d = jnp.where(last, 0.0, dn_ref[0, c])
        return jnp.concatenate([u, img_ref[0, c], d], axis=0)

    r = ext_plane(0)
    g = ext_plane(1)
    b = ext_plane(2)
    He, We = r.shape

    grow = i * TH - _HALO + lax.broadcasted_iota(jnp.int32, (He, We), 0)
    col = lax.broadcasted_iota(jnp.int32, (He, We), 1)
    valid = jnp.logical_and(jnp.logical_and(grow >= 0, grow < H), col < W)

    y, cb_in, cr_in = _rgb_to_ycbcr(r, g, b)      # y is exactly zero outside the image

    # --- model_ianet: 1 -> 1 ---
    (il,) = _conv3x3(y, wi_ref, (0,), (None,))
    il = il + bi_ref[0]
    ilc = jnp.clip(il, 0.0, 1.0)                  # texture_illumi (clamped)
    tia = y / jnp.maximum(ilc, EPS)               # texture_ia (zero outside the image)
    base = jnp.where(valid, jnp.exp(-ilc) * il, 0.0)   # attention_k = k * base

    # --- model_nsnet: 2 -> 1, shared across k (attention_k = k*base) ---
    (shared,) = _conv3x3(tia, wn_ref, (0,), (None,))
    shared = shared + bn_ref[0]                   # res_k = shared + k * cbase
    (cbase,) = _conv3x3(base, wn_ref, (9,), (None,))

    # --- model_fdnet: 5 -> 1 collapsed to 2 convs with pre-summed weights ---
    A = jnp.where(valid, tia + shared, 0.0)       # valid * nss_k = A + k*B
    B = jnp.where(valid, cbase, 0.0)
    (fa,) = _conv3x3(A, wf_ref, (0,), (None,))    # conv(A; sum_k wf_k)
    (fb,) = _conv3x3(B, wf_ref, (9,), (None,))    # conv(B; sum_k k*wf_k)
    fd = fa + fb + bf_ref[0]                      # texture_fd

    # --- model_canet: 6 -> 2, streamed taps shared by both output channels ---
    inv_ia = 1.0 / (ilc + EPS)
    _, cb_ia, cr_ia = _rgb_to_ycbcr(jnp.clip(r * inv_ia, 0.0, 1.0),
                                    jnp.clip(g * inv_ia, 0.0, 1.0),
                                    jnp.clip(b * inv_ia, 0.0, 1.0))
    chans = (y,
             jnp.where(valid, cb_in, 0.0),
             jnp.where(valid, cr_in, 0.0),
             jnp.where(valid, fd, 0.0),
             jnp.where(valid, cb_ia, 0.0),
             jnp.where(valid, cr_ia, 0.0))
    acc0, acc1 = None, None
    for ci, ch in enumerate(chans):
        acc0, acc1 = _conv3x3(ch, wc_ref, (ci * 9, (6 + ci) * 9), (acc0, acc1))

    # --- slice tile rows and write all outputs ---
    sl = lambda x: x[_HALO:_HALO + TH]
    ilc_t = sl(ilc)
    tia_t = sl(tia)
    base_t = sl(base)
    shared_t = sl(shared)
    cbase_t = sl(cbase)
    fd_t = sl(fd)
    cbout_t = jnp.clip(sl(acc0) + bc_ref[0], 0.0, 1.0)
    crout_t = jnp.clip(sl(acc1) + bc_ref[1], 0.0, 1.0)

    illumi_ref[0, 0] = ilc_t
    tia_ref[0, 0] = tia_t
    fd_ref[0, 0] = fd_t
    cb_ref[0, 0] = cbout_t
    cr_ref[0, 0] = crout_t

    att_ref[0, 0] = jnp.zeros_like(base_t)        # attention_0 (strength 0)
    for k in range(1, 5):
        att_ref[0, k] = float(k) * base_t
    for k in range(5):
        resk = shared_t + float(k) * cbase_t      # noise_k_strength
        res_ref[0, k] = resk
        nss_ref[0, k] = tia_t + resk              # texture_nss

    cbm = cbout_t - 0.5
    crm = crout_t - 0.5
    r_out = jnp.clip(fd_t + 1.403 * crm, 0.0, 1.0)
    g_out = jnp.clip(fd_t - 0.714 * crm - 0.344 * cbm, 0.0, 1.0)
    b_out = jnp.clip(fd_t + 1.773 * cbm, 0.0, 1.0)
    out_ref[0, 0] = r_out
    out_ref[0, 1] = g_out
    out_ref[0, 2] = b_out

    # pre_en colors = rgb_to_ycbcr(image / clamp_min(texture_illumi, eps))
    rt, gt_t, bt = img_ref[0, 0], img_ref[0, 1], img_ref[0, 2]
    inv_pe = 1.0 / jnp.maximum(ilc_t, EPS)
    _, cb_pe, cr_pe = _rgb_to_ycbcr(rt * inv_pe, gt_t * inv_pe, bt * inv_pe)
    cbpe_ref[0, 0] = cb_pe
    crpe_ref[0, 0] = cr_pe

    # noise_gt_ia = texture_gt - texture_ia
    yg, _, _ = _rgb_to_ycbcr(gt_ref[0, 0], gt_ref[0, 1], gt_ref[0, 2])
    ngt_ref[0, 0] = yg - tia_t

    # fused PSNR: per-tile SSE partial over valid pixels (summed host-side in JAX)
    valid_t = sl(valid)
    dr = jnp.where(valid_t, r_out - gt_ref[0, 0], 0.0)
    dg = jnp.where(valid_t, g_out - gt_ref[0, 1], 0.0)
    db = jnp.where(valid_t, b_out - gt_ref[0, 2], 0.0)
    sse = jnp.sum(dr * dr) + jnp.sum(dg * dg) + jnp.sum(db * db)
    sse_ref[0, 0] = jnp.zeros((8, 128), jnp.float32) + sse


# --------------------------------------------------------------------------
# Metrics helpers (SSIM glue stays in plain JAX, but batched into 2 conv passes)
# --------------------------------------------------------------------------

def _gaussian_1d(size=11, sigma=1.5):
    x = jnp.arange(size, dtype=jnp.float32) - (size - 1) / 2.0
    g = jnp.exp(-(x ** 2) / (2.0 * sigma ** 2))
    return g / jnp.sum(g)


def ssim(a, b, max_val=1.0, win=11, sigma=1.5):
    # TODO(synk): SSIM uses zero-padded 'SAME' separable gaussian filtering; border handling
    # may differ slightly from the reference torch SSIM implementation.
    c = a.shape[1]
    g = _gaussian_1d(win, sigma)
    stack = jnp.concatenate([a, b, a * a, b * b, a * b], axis=1)   # one 15-ch pass
    cc = 5 * c
    kh = jnp.broadcast_to(g.reshape(1, 1, win, 1), (cc, 1, win, 1))
    kw = jnp.broadcast_to(g.reshape(1, 1, 1, win), (cc, 1, 1, win))
    f = lax.conv_general_dilated(stack, kh, (1, 1), "SAME",
                                 dimension_numbers=("NCHW", "OIHW", "NCHW"),
                                 feature_group_count=cc)
    f = lax.conv_general_dilated(f, kw, (1, 1), "SAME",
                                 dimension_numbers=("NCHW", "OIHW", "NCHW"),
                                 feature_group_count=cc)
    mu_a, mu_b, e_aa, e_bb, e_ab = jnp.split(f, 5, axis=1)
    c1 = (0.01 * max_val) ** 2
    c2 = (0.03 * max_val) ** 2
    mu_aa, mu_bb, mu_ab = mu_a * mu_a, mu_b * mu_b, mu_a * mu_b
    var_a = e_aa - mu_aa
    var_b = e_bb - mu_bb
    cov = e_ab - mu_ab
    num = (2.0 * mu_ab + c1) * (2.0 * cov + c2)
    den = (mu_aa + mu_bb + c1) * (var_a + var_b + c2)
    return jnp.mean(num / den)


# --------------------------------------------------------------------------
# ModelBreadNet forward (non-mef path, matching the PyTorch reference)
# --------------------------------------------------------------------------

def bread_forward(params, image, image_gt, tile_rows=64):
    N, _, H, W = image.shape

    # Row-tile size (multiple of 8).  Raise on v6e/v5e for bigger frames; lower on v7x
    # for very wide frames so (inputs + 26 output planes) x2 buffers stay within VMEM.
    tr = min(tile_rows, _round_up(H, 8))
    tr = max(8, (tr // 8) * 8)
    R = -(-H // tr)
    Hp = R * tr
    Wp = _round_up(W + 1, 128)         # guarantee >=1 zero pad column (drops wrap masks)
    pad = ((0, 0), (0, 0), (0, Hp - H), (0, Wp - W))
    img_p = jnp.pad(image.astype(jnp.float32), pad)
    gt_p = jnp.pad(image_gt.astype(jnp.float32), pad)

    # Flattened OIHW weights into SMEM.
    wi = params["ianet"]["w"].astype(jnp.float32).reshape(-1)
    bi = params["ianet"]["b"].astype(jnp.float32)
    wn = params["nsnet"]["w"].astype(jnp.float32).reshape(-1)
    bn = params["nsnet"]["b"].astype(jnp.float32)
    wf_full = params["fdnet"]["w"].astype(jnp.float32)                  # (1,5,3,3)
    kvec = jnp.arange(5, dtype=jnp.float32).reshape(1, 5, 1, 1)
    wf2 = jnp.concatenate([jnp.sum(wf_full, axis=1),                    # sum_k wf_k
                           jnp.sum(wf_full * kvec, axis=1)], axis=0).reshape(-1)
    bf = params["fdnet"]["b"].astype(jnp.float32)
    wc = params["canet"]["w"].astype(jnp.float32).reshape(-1)
    bc = params["canet"]["b"].astype(jnp.float32)

    m = tr // 8
    nh8 = Hp // 8
    blk = lambda c: pl.BlockSpec((1, c, tr, Wp), lambda n, i: (n, 0, i, 0))
    up_spec = pl.BlockSpec((1, 3, _HALO, Wp),
                           lambda n, i: (n, 0, jnp.maximum(i * m - 1, 0), 0))
    dn_spec = pl.BlockSpec((1, 3, _HALO, Wp),
                           lambda n, i: (n, 0, jnp.minimum((i + 1) * m, nh8 - 1), 0))
    smem = pl.BlockSpec(memory_space=pltpu.MemorySpace.SMEM)

    kern = functools.partial(_bread_kernel, H=H, W=W, TH=tr)
    plane = lambda c: jax.ShapeDtypeStruct((N, c, Hp, Wp), jnp.float32)

    outs = pl.pallas_call(
        kern,
        out_shape=(
            plane(1),                                            # texture_illumi
            plane(1),                                            # texture_ia
            plane(5),                                            # makeNoise_k_strength
            plane(1),                                            # noise_gt_ia
            plane(5),                                            # noise_k_strength
            plane(5),                                            # texture_nss
            plane(1),                                            # texture_fd
            plane(3),                                            # image_out
            plane(1),                                            # cb_out
            plane(1),                                            # cr_out
            plane(1),                                            # cb_pre_en
            plane(1),                                            # cr_pre_en
            jax.ShapeDtypeStruct((N, R, 8, 128), jnp.float32),   # per-tile SSE partials
        ),
        grid=(N, R),
        in_specs=[blk(3), up_spec, dn_spec, blk(3),
                  smem, smem, smem, smem, smem, smem, smem, smem],
        out_specs=(blk(1), blk(1), blk(5), blk(1), blk(5), blk(5), blk(1),
                   blk(3), blk(1), blk(1), blk(1), blk(1),
                   pl.BlockSpec((1, 1, 8, 128), lambda n, i: (n, i, 0, 0))),
        compiler_params=pltpu.CompilerParams(
            dimension_semantics=("parallel", "parallel"),
            vmem_limit_bytes=_vmem_limit_bytes()),
    )(img_p, img_p, img_p, gt_p, wi, bi, wn, bn, wf2, bf, wc, bc)

    (illumi_p, tia_p, att_p, ngt_p, res_p, nss_p, fd_p, out_p, cb_p, cr_p,
     cbpe_p, crpe_p, sse_p) = outs

    crop = lambda t: t[:, :, :H, :W]
    texture_illumi = crop(illumi_p)
    texture_ia = crop(tia_p)
    makeNoise_k_strength = crop(att_p)
    noise_gt_ia = crop(ngt_p)
    noise_k_strength = crop(res_p)
    texture_nss = crop(nss_p)
    texture_fd = crop(fd_p)
    image_out = crop(out_p)
    cb_out = crop(cb_p)
    cr_out = crop(cr_p)
    cb_pre_en = crop(cbpe_p)
    cr_pre_en = crop(crpe_p)
    texture_res = noise_k_strength[:, 4:5]        # last loop iteration's texture_res

    sse = jnp.sum(sse_p[:, :, 0, 0])
    mse = sse / float(N * 3 * H * W)
    psnr_val = 10.0 * jnp.log10(1.0 / jnp.maximum(mse, 1e-12))
    ssim_val = ssim(image_out, image_gt.astype(jnp.float32), max_val=1.0)

    return (texture_ia, texture_nss, texture_fd, image_out, texture_illumi,
            texture_res, psnr_val, ssim_val, noise_k_strength,
            makeNoise_k_strength, cb_out, cr_out, cb_pre_en, cr_pre_en,
            noise_gt_ia)


# --------------------------------------------------------------------------
# Deterministic parameter init + smoke test
# --------------------------------------------------------------------------

def init_conv(key, cin, cout):
    kw_, kb_ = jax.random.split(key)
    w = 0.1 * jax.random.normal(kw_, (cout, cin, 3, 3), jnp.float32)
    b = 0.01 * jax.random.normal(kb_, (cout,), jnp.float32)
    return {"w": w, "b": b}


if __name__ == "__main__":
    key = jax.random.PRNGKey(0)
    k1, k2, k3, k4, k5, k6 = jax.random.split(key, 6)
    params = {
        "ianet": init_conv(k1, 1, 1),   # model1(in=1, out=1)
        "nsnet": init_conv(k2, 2, 1),   # model2(in=2, out=1)
        "canet": init_conv(k3, 6, 2),   # model3(in=6, out=2)  (non-mef)
        "fdnet": init_conv(k4, 5, 1),   # model4(in=5, out=1)
    }

    N, H, W = 2, 16, 16
    image = jax.random.uniform(k5, (N, 3, H, W), jnp.float32)
    image_gt = jax.random.uniform(k6, (N, 3, H, W), jnp.float32)

    # tile_rows=8 exercises the multi-row-tile + halo-stitching path at this small size.
    outs = bread_forward(params, image, image_gt, tile_rows=8)
    jax.block_until_ready(outs)
    print("KERNEL_OK")
</pallas_src>

<mosaic_0001>
module attributes {stable_mosaic.version = 11 : i64} {
  func.func @_bread_kernel(%arg0: i32, %arg1: i32, %arg2: memref<1x3x8x128xf32, #tpu.memory_space<vmem>>, %arg3: memref<1x3x8x128xf32, #tpu.memory_space<vmem>>, %arg4: memref<1x3x8x128xf32, #tpu.memory_space<vmem>>, %arg5: memref<1x3x8x128xf32, #tpu.memory_space<vmem>>, %arg6: memref<9xf32, #tpu.memory_space<smem>>, %arg7: memref<1xf32, #tpu.memory_space<smem>>, %arg8: memref<18xf32, #tpu.memory_space<smem>>, %arg9: memref<1xf32, #tpu.memory_space<smem>>, %arg10: memref<18xf32, #tpu.memory_space<smem>>, %arg11: memref<1xf32, #tpu.memory_space<smem>>, %arg12: memref<108xf32, #tpu.memory_space<smem>>, %arg13: memref<2xf32, #tpu.memory_space<smem>>, %arg14: memref<1x1x8x128xf32, #tpu.memory_space<vmem>>, %arg15: memref<1x1x8x128xf32, #tpu.memory_space<vmem>>, %arg16: memref<1x5x8x128xf32, #tpu.memory_space<vmem>>, %arg17: memref<1x1x8x128xf32, #tpu.memory_space<vmem>>, %arg18: memref<1x5x8x128xf32, #tpu.memory_space<vmem>>, %arg19: memref<1x5x8x128xf32, #tpu.memory_space<vmem>>, %arg20: memref<1x1x8x128xf32, #tpu.memory_space<vmem>>, %arg21: memref<1x3x8x128xf32, #tpu.memory_space<vmem>>, %arg22: memref<1x1x8x128xf32, #tpu.memory_space<vmem>>, %arg23: memref<1x1x8x128xf32, #tpu.memory_space<vmem>>, %arg24: memref<1x1x8x128xf32, #tpu.memory_space<vmem>>, %arg25: memref<1x1x8x128xf32, #tpu.memory_space<vmem>>, %arg26: memref<1x1x8x128xf32, #tpu.memory_space<vmem>>) attributes {dimension_semantics = [#tpu.dimension_semantics<parallel>, #tpu.dimension_semantics<parallel>], iteration_bounds = array<i64: 2, 2>, scalar_prefetch = 0 : i64, scratch_operands = 0 : i64, tpu.core_type = #tpu.core_type<tc>, window_params = [{transform_indices = @transform_0, window_bounds = array<i64: 1, 3, 8, 128>}, {transform_indices = @transform_1, window_bounds = array<i64: 1, 3, 8, 128>}, {transform_indices = @transform_2, window_bounds = array<i64: 1, 3, 8, 128>}, {transform_indices = @transform_3, window_bounds = array<i64: 1, 3, 8, 128>}, {transform_indices = @transform_4, window_bounds = array<i64: 9>}, {transform_indices = @transform_5, window_bounds = array<i64: 1>}, {transform_indices = @transform_6, window_bounds = array<i64: 18>}, {transform_indices = @transform_7, window_bounds = array<i64: 1>}, {transform_indices = @transform_8, window_bounds = array<i64: 18>}, {transform_indices = @transform_9, window_bounds = array<i64: 1>}, {transform_indices = @transform_10, window_bounds = array<i64: 108>}, {transform_indices = @transform_11, window_bounds = array<i64: 2>}, {transform_indices = @transform_12, window_bounds = array<i64: 1, 1, 8, 128>}, {transform_indices = @transform_13, window_bounds = array<i64: 1, 1, 8, 128>}, {transform_indices = @transform_14, window_bounds = array<i64: 1, 5, 8, 128>}, {transform_indices = @transform_15, window_bounds = array<i64: 1, 1, 8, 128>}, {transform_indices = @transform_16, window_bounds = array<i64: 1, 5, 8, 128>}, {transform_indices = @transform_17, window_bounds = array<i64: 1, 5, 8, 128>}, {transform_indices = @transform_18, window_bounds = array<i64: 1, 1, 8, 128>}, {transform_indices = @transform_19, window_bounds = array<i64: 1, 3, 8, 128>}, {transform_indices = @transform_20, window_bounds = array<i64: 1, 1, 8, 128>}, {transform_indices = @transform_21, window_bounds = array<i64: 1, 1, 8, 128>}, {transform_indices = @transform_22, window_bounds = array<i64: 1, 1, 8, 128>}, {transform_indices = @transform_23, window_bounds = array<i64: 1, 1, 8, 128>}, {transform_indices = @transform_24, window_bounds = array<i64: 1, 1, 8, 128>}]} {
    %c0_i32 = arith.constant 0 : i32
    %0 = arith.cmpi eq, %arg1, %c0_i32 : i32
    %c1_i32 = arith.constant 1 : i32
    %1 = arith.cmpi eq, %arg1, %c1_i32 : i32
    %c0 = arith.constant 0 : index
    %c0_0 = arith.constant 0 : index
    %c0_1 = arith.constant 0 : index
    %c0_2 = arith.constant 0 : index
    %2 = vector.load %arg3[%c0, %c0_0, %c0_1, %c0_2] : memref<1x3x8x128xf32, #tpu.memory_space<vmem>>, vector<1x1x8x128xf32>
    %3 = vector.shape_cast %2 : vector<1x1x8x128xf32> to vector<8x128xf32>
    %cst = arith.constant 0.000000e+00 : f32
    %4 = vector.broadcast %cst : f32 to vector<8x128xf32>
    %5 = arith.select %0, %4, %3 : vector<8x128xf32>
    %c0_3 = arith.constant 0 : index
    %c0_4 = arith.constant 0 : index
    %c0_5 = arith.constant 0 : index
    %c0_6 = arith.constant 0 : index
    %6 = vector.load %arg4[%c0_3, %c0_4, %c0_5, %c0_6] : memref<1x3x8x128xf32, #tpu.memory_space<vmem>>, vector<1x1x8x128xf32>
    %7 = vector.shape_cast %6 : vector<1x1x8x128xf32> to vector<8x128xf32>
    %cst_7 = arith.constant 0.000000e+00 : f32
    %8 = vector.broadcast %cst_7 : f32 to vector<8x128xf32>
    %9 = arith.select %1, %8, %7 : vector<8x128xf32>
    %c0_8 = arith.constant 0 : index
    %c0_9 = arith.constant 0 : index
    %c0_10 = arith.constant 0 : index
    %c0_11 = arith.constant 0 : index
    %10 = vector.load %arg2[%c0_8, %c0_9, %c0_10, %c0_11] : memref<1x3x8x128xf32, #tpu.memory_space<vmem>>, vector<1x1x8x128xf32>
    %11 = vector.shape_cast %10 : vector<1x1x8x128xf32> to vector<8x128xf32>
    %12 = tpu.concatenate %5, %11, %9 in 0 : vector<8x128xf32>, vector<8x128xf32>, vector<8x128xf32> -> vector<24x128xf32>
    %c0_12 = arith.constant 0 : index
    %c1 = arith.constant 1 : index
    %c0_13 = arith.constant 0 : index
    %c0_14 = arith.constant 0 : index
    %13 = vector.load %arg3[%c0_12, %c1, %c0_13, %c0_14] : memref<1x3x8x128xf32, #tpu.memory_space<vmem>>, vector<1x1x8x128xf32>
    %14 = vector.shape_cast %13 : vector<1x1x8x128xf32> to vector<8x128xf32>
    %cst_15 = arith.constant 0.000000e+00 : f32
    %15 = vector.broadcast %cst_15 : f32 to vector<8x128xf32>
    %16 = arith.select %0, %15, %14 : vector<8x128xf32>
    %c0_16 = arith.constant 0 : index
    %c1_17 = arith.constant 1 : index
    %c0_18 = arith.constant 0 : index
    %c0_19 = arith.constant 0 : index
    %17 = vector.load %arg4[%c0_16, %c1_17, %c0_18, %c0_19] : memref<1x3x8x128xf32, #tpu.memory_space<vmem>>, vector<1x1x8x128xf32>
    %18 = vector.shape_cast %17 : vector<1x1x8x128xf32> to vector<8x128xf32>
    %cst_20 = arith.constant 0.000000e+00 : f32
    %19 = vector.broadcast %cst_20 : f32 to vector<8x128xf32>
    %20 = arith.select %1, %19, %18 : vector<8x128xf32>
    %c0_21 = arith.constant 0 : index
    %c1_22 = arith.constant 1 : index
    %c0_23 = arith.constant 0 : index
    %c0_24 = arith.constant 0 : index
    %21 = vector.load %arg2[%c0_21, %c1_22, %c0_23, %c0_24] : memref<1x3x8x128xf32, #tpu.memory_space<vmem>>, vector<1x1x8x128xf32>
    %22 = vector.shape_cast %21 : vector<1x1x8x128xf32> to vector<8x128xf32>
    %23 = tpu.concatenate %16, %22, %20 in 0 : vector<8x128xf32>, vector<8x128xf32>, vector<8x128xf32> -> vector<24x128xf32>
    %c0_25 = arith.constant 0 : index
    %c2 = arith.constant 2 : index
    %c0_26 = arith.constant 0 : index
    %c0_27 = arith.constant 0 : index
    %24 = vector.load %arg3[%c0_25, %c2, %c0_26, %c0_27] : memref<1x3x8x128xf32, #tpu.memory_space<vmem>>, vector<1x1x8x128xf32>
    %25 = vector.shape_cast %24 : vector<1x1x8x128xf32> to vector<8x128xf32>
    %cst_28 = arith.constant 0.000000e+00 : f32
    %26 = vector.broadcast %cst_28 : f32 to vector<8x128xf32>
    %27 = arith.select %0, %26, %25 : vector<8x128xf32>
    %c0_29 = arith.constant 0 : index
    %c2_30 = arith.constant 2 : index
    %c0_31 = arith.constant 0 : index
    %c0_32 = arith.constant 0 : index
    %28 = vector.load %arg4[%c0_29, %c2_30, %c0_31, %c0_32] : memref<1x3x8x128xf32, #tpu.memory_space<vmem>>, vector<1x1x8x128xf32>
    %29 = vector.shape_cast %28 : vector<1x1x8x128xf32> to vector<8x128xf32>
    %cst_33 = arith.constant 0.000000e+00 : f32
    %30 = vector.broadcast %cst_33 : f32 to vector<8x128xf32>
    %31 = arith.select %1, %30, %29 : vector<8x128xf32>
    %c0_34 = arith.constant 0 : index
    %c2_35 = arith.constant 2 : index
    %c0_36 = arith.constant 0 : index
    %c0_37 = arith.constant 0 : index
    %32 = vector.load %arg2[%c0_34, %c2_35, %c0_36, %c0_37] : memref<1x3x8x128xf32, #tpu.memory_space<vmem>>, vector<1x1x8x128xf32>
    %33 = vector.shape_cast %32 : vector<1x1x8x128xf32> to vector<8x128xf32>
    %34 = tpu.concatenate %27, %33, %31 in 0 : vector<8x128xf32>, vector<8x128xf32>, vector<8x128xf32> -> vector<24x128xf32>
    %c8_i32 = arith.constant 8 : i32
    %35 = arith.muli %arg1, %c8_i32 : i32
    %c8_i32_38 = arith.constant 8 : i32
    %36 = arith.subi %35, %c8_i32_38 : i32
    %37 = tpu.iota {dimensions = array<i32: 0>} : vector<24x128xi32>
    %38 = vector.broadcast %36 : i32 to vector<24x128xi32>
    %39 = arith.addi %38, %37 : vector<24x128xi32>
    %40 = tpu.iota {dimensions = array<i32: 1>} : vector<24x128xi32>
    %c0_i32_39 = arith.constant 0 : i32
    %41 = vector.broadcast %c0_i32_39 : i32 to vector<24x128xi32>
    %42 = arith.cmpi sge, %39, %41 : vector<24x128xi32>
    %c16_i32 = arith.constant 16 : i32
    %43 = vector.broadcast %c16_i32 : i32 to vector<24x128xi32>
    %44 = arith.cmpi slt, %39, %43 : vector<24x128xi32>
    %45 = arith.andi %42, %44 : vector<24x128xi1>
    %c16_i32_40 = arith.constant 16 : i32
    %46 = vector.broadcast %c16_i32_40 : i32 to vector<24x128xi32>
    %47 = arith.cmpi slt, %40, %46 : vector<24x128xi32>
    %48 = arith.andi %45, %47 : vector<24x128xi1>
    %cst_41 = arith.constant 2.990000e-01 : f32
    %49 = vector.broadcast %cst_41 : f32 to vector<24x128xf32>
    %50 = arith.mulf %49, %12 : vector<24x128xf32>
    %cst_42 = arith.constant 5.870000e-01 : f32
    %51 = vector.broadcast %cst_42 : f32 to vector<24x128xf32>
    %52 = arith.mulf %51, %23 : vector<24x128xf32>
    %53 = arith.addf %50, %52 : vector<24x128xf32>
    %cst_43 = arith.constant 1.140000e-01 : f32
    %54 = vector.broadcast %cst_43 : f32 to vector<24x128xf32>
    %55 = arith.mulf %54, %34 : vector<24x128xf32>
    %56 = arith.addf %53, %55 : vector<24x128xf32>
    %57 = arith.subf %34, %56 : vector<24x128xf32>
    %cst_44 = arith.constant 5.640000e-01 : f32
    %58 = vector.broadcast %cst_44 : f32 to vector<24x128xf32>
    %59 = arith.mulf %57, %58 : vector<24x128xf32>
    %cst_45 = arith.constant 5.000000e-01 : f32
    %60 = vector.broadcast %cst_45 : f32 to vector<24x128xf32>
    %61 = arith.addf %59, %60 : vector<24x128xf32>
    %62 = arith.subf %12, %56 : vector<24x128xf32>
    %cst_46 = arith.constant 0.712999999 : f32
    %63 = vector.broadcast %cst_46 : f32 to vector<24x128xf32>
    %64 = arith.mulf %62, %63 : vector<24x128xf32>
    %cst_47 = arith.constant 5.000000e-01 : f32
    %65 = vector.broadcast %cst_47 : f32 to vector<24x128xf32>
    %66 = arith.addf %64, %65 : vector<24x128xf32>
    %c1_i32_48 = arith.constant 1 : i32
    %67 = tpu.dynamic_rotate %56 by %c1_i32_48 dim 1 : vector<24x128xf32>, i32 -> vector<24x128xf32>
    %c1_i32_49 = arith.constant 1 : i32
    %68 = tpu.dynamic_rotate %67 by %c1_i32_49 dim 0 : vector<24x128xf32>, i32 -> vector<24x128xf32>
    %c0_50 = arith.constant 0 : index
    %69 = memref.load %arg6[%c0_50] : memref<9xf32, #tpu.memory_space<smem>>
    %70 = vector.broadcast %69 : f32 to vector<24x128xf32>
    %71 = arith.mulf %68, %70 : vector<24x128xf32>
    %c3 = arith.constant 3 : index
    %72 = memref.load %arg6[%c3] : memref<9xf32, #tpu.memory_space<smem>>
    %73 = vector.broadcast %72 : f32 to vector<24x128xf32>
    %74 = arith.mulf %67, %73 : vector<24x128xf32>
    %75 = arith.addf %71, %74 : vector<24x128xf32>
    %c23_i32 = arith.constant 23 : i32
    %76 = tpu.dynamic_rotate %67 by %c23_i32 dim 0 : vector<24x128xf32>, i32 -> vector<24x128xf32>
    %c6 = arith.constant 6 : index
    %77 = memref.load %arg6[%c6] : memref<9xf32, #tpu.memory_space<smem>>
    %78 = vector.broadcast %77 : f32 to vector<24x128xf32>
    %79 = arith.mulf %76, %78 : vector<24x128xf32>
    %80 = arith.addf %75, %79 : vector<24x128xf32>
    %c1_i32_51 = arith.constant 1 : i32
    %81 = tpu.dynamic_rotate %56 by %c1_i32_51 dim 0 : vector<24x128xf32>, i32 -> vector<24x128xf32>
    %c1_52 = arith.constant 1 : index
    %82 = memref.load %arg6[%c1_52] : memref<9xf32, #tpu.memory_space<smem>>
    %83 = vector.broadcast %82 : f32 to vector<24x128xf32>
    %84 = arith.mulf %81, %83 : vector<24x128xf32>
    %85 = arith.addf %80, %84 : vector<24x128xf32>
    %c4 = arith.constant 4 : index
    %86 = memref.load %arg6[%c4] : memref<9xf32, #tpu.memory_space<smem>>
    %87 = vector.broadcast %86 : f32 to vector<24x128xf32>
    %88 = arith.mulf %56, %87 : vector<24x128xf32>
    %89 = arith.addf %85, %88 : vector<24x128xf32>
    %c23_i32_53 = arith.constant 23 : i32
    %90 = tpu.dynamic_rotate %56 by %c23_i32_53 dim 0 : vector<24x128xf32>, i32 -> vector<24x128xf32>
    %c7 = arith.constant 7 : index
    %91 = memref.load %arg6[%c7] : memref<9xf32, #tpu.memory_space<smem>>
    %92 = vector.broadcast %91 : f32 to vector<24x128xf32>
    %93 = arith.mulf %90, %92 : vector<24x128xf32>
    %94 = arith.addf %89, %93 : vector<24x128xf32>
    %c127_i32 = arith.constant 127 : i32
    %95 = tpu.dynamic_rotate %56 by %c127_i32 dim 1 : vector<24x128xf32>, i32 -> vector<24x128xf32>
    %c1_i32_54 = arith.constant 1 : i32
    %96 = tpu.dynamic_rotate %95 by %c1_i32_54 dim 0 : vector<24x128xf32>, i32 -> vector<24x128xf32>
    %c2_55 = arith.constant 2 : index
    %97 = memref.load %arg6[%c2_55] : memref<9xf32, #tpu.memory_space<smem>>
    %98 = vector.broadcast %97 : f32 to vector<24x128xf32>
    %99 = arith.mulf %96, %98 : vector<24x128xf32>
    %100 = arith.addf %94, %99 : vector<24x128xf32>
    %c5 = arith.constant 5 : index
    %101 = memref.load %arg6[%c5] : memref<9xf32, #tpu.memory_space<smem>>
    %102 = vector.broadcast %101 : f32 to vector<24x128xf32>
    %103 = arith.mulf %95, %102 : vector<24x128xf32>
    %104 = arith.addf %100, %103 : vector<24x128xf32>
    %c23_i32_56 = arith.constant 23 : i32
    %105 = tpu.dynamic_rotate %95 by %c23_i32_56 dim 0 : vector<24x128xf32>, i32 -> vector<24x128xf32>
    %c8 = arith.constant 8 : index
    %106 = memref.load %arg6[%c8] : memref<9xf32, #tpu.memory_space<smem>>
    %107 = vector.broadcast %106 : f32 to vector<24x128xf32>
    %108 = arith.mulf %105, %107 : vector<24x128xf32>
    %109 = arith.addf %104, %108 : vector<24x128xf32>
    %c0_57 = arith.constant 0 : index
    %110 = memref.load %arg7[%c0_57] : memref<1xf32, #tpu.memory_space<smem>>
    %111 = vector.broadcast %110 : f32 to vector<24x128xf32>
    %112 = arith.addf %109, %111 : vector<24x128xf32>
    %cst_58 = arith.constant 0.000000e+00 : f32
    %cst_59 = arith.constant 1.000000e+00 : f32
    %113 = vector.broadcast %cst_58 : f32 to vector<24x128xf32>
    %114 = arith.maximumf %113, %112 : vector<24x128xf32>
    %115 = vector.broadcast %cst_59 : f32 to vector<24x128xf32>
    %116 = arith.minimumf %115, %114 : vector<24x128xf32>
    %cst_60 = arith.constant 9.99999997E-7 : f32
    %117 = vector.broadcast %cst_60 : f32 to vector<24x128xf32>
    %118 = arith.maximumf %116, %117 : vector<24x128xf32>
    %119 = arith.divf %56, %118 : vector<24x128xf32>
    %cst_61 = arith.constant 0.000000e+00 : f32
    %120 = vector.broadcast %cst_61 : f32 to vector<24x128xf32>
    %121 = arith.subf %120, %116 : vector<24x128xf32>
    %122 = math.exp %121 : vector<24x128xf32>
    %123 = arith.mulf %122, %112 : vector<24x128xf32>
    %cst_62 = arith.constant 0.000000e+00 : f32
    %124 = vector.broadcast %cst_62 : f32 to vector<24x128xf32>
    %125 = arith.select %48, %123, %124 : vector<24x128xi1>, vector<24x128xf32>
    %c1_i32_63 = arith.constant 1 : i32
    %126 = tpu.dynamic_rotate %119 by %c1_i32_63 dim 1 : vector<24x128xf32>, i32 -> vector<24x128xf32>
    %c1_i32_64 = arith.constant 1 : i32
    %127 = tpu.dynamic_rotate %126 by %c1_i32_64 dim 0 : vector<24x128xf32>, i32 -> vector<24x128xf32>
    %c0_65 = arith.constant 0 : index
    %128 = memref.load %arg8[%c0_65] : memref<18xf32, #tpu.memory_space<smem>>
    %129 = vector.broadcast %128 : f32 to vector<24x128xf32>
    %130 = arith.mulf %127, %129 : vector<24x128xf32>
    %c3_66 = arith.constant 3 : index
    %131 = memref.load %arg8[%c3_66] : memref<18xf32, #tpu.memory_space<smem>>
    %132 = vector.broadcast %131 : f32 to vector<24x128xf32>
    %133 = arith.mulf %126, %132 : vector<24x128xf32>
    %134 = arith.addf %130, %133 : vector<24x128xf32>
    %c23_i32_67 = arith.constant 23 : i32
    %135 = tpu.dynamic_rotate %126 by %c23_i32_67 dim 0 : vector<24x128xf32>, i32 -> vector<24x128xf32>
    %c6_68 = arith.constant 6 : index
    %136 = memref.load %arg8[%c6_68] : memref<18xf32, #tpu.memory_space<smem>>
    %137 = vector.broadcast %136 : f32 to vector<24x128xf32>
    %138 = arith.mulf %135, %137 : vector<24x128xf32>
    %139 = arith.addf %134, %138 : vector<24x128xf32>
    %c1_i32_69 = arith.constant 1 : i32
    %140 = tpu.dynamic_rotate %119 by %c1_i32_69 dim 0 : vector<24x128xf32>, i32 -> vector<24x128xf32>
    %c1_70 = arith.constant 1 : index
    %141 = memref.load %arg8[%c1_70] : memref<18xf32, #tpu.memory_space<smem>>
    %142 = vector.broadcast %141 : f32 to vector<24x128xf32>
    %143 = arith.mulf %140, %142 : vector<24x128xf32>
    %144 = arith.addf %139, %143 : vector<24x128xf32>
    %c4_71 = arith.constant 4 : index
    %145 = memref.load %arg8[%c4_71] : memref<18xf32, #tpu.memory_space<smem>>
    %146 = vector.broadcast %145 : f32 to vector<24x128xf32>
    %147 = arith.mulf %119, %146 : vector<24x128xf32>
    %148 = arith.addf %144, %147 : vector<24x128xf32>
    %c23_i32_72 = arith.constant 23 : i32
    %149 = tpu.dynamic_rotate %119 by %c23_i32_72 dim 0 : vector<24x128xf32>, i32 -> vector<24x128xf32>
    %c7_73 = arith.constant 7 : index
    %150 = memref.load %arg8[%c7_73] : memref<18xf32, #tpu.memory_space<smem>>
    %151 = vector.broadcast %150 : f32 to vector<24x128xf32>
    %152 = arith.mulf %149, %151 : vector<24x128xf32>
    %153 = arith.addf %148, %152 : vector<24x128xf32>
    %c127_i32_74 = arith.constant 127 : i32
    %154 = tpu.dynamic_rotate %119 by %c127_i32_74 dim 1 : vector<24x128xf32>, i32 -> vector<24x128xf32>
    %c1_i32_75 = arith.constant 1 : i32
    %155 = tpu.dynamic_rotate %154 by %c1_i32_75 dim 0 : vector<24x128xf32>, i32 -> vector<24x128xf32>
    %c2_76 = arith.constant 2 : index
    %156 = memref.load %arg8[%c2_76] : memref<18xf32, #tpu.memory_space<smem>>
    %157 = vector.broadcast %156 : f32 to vector<24x128xf32>
    %158 = arith.mulf %155, %157 : vector<24x128xf32>
    %159 = arith.addf %153, %158 : vector<24x128xf32>
    %c5_77 = arith.constant 5 : index
    %160 = memref.load %arg8[%c5_77] : memref<18xf32, #tpu.memory_space<smem>>
    %161 = vector.broadcast %160 : f32 to vector<24x128xf32>
    %162 = arith.mulf %154, %161 : vector<24x128xf32>
    %163 = arith.addf %159, %162 : vector<24x128xf32>
    %c23_i32_78 = arith.constant 23 : i32
    %164 = tpu.dynamic_rotate %154 by %c23_i32_78 dim 0 : vector<24x128xf32>, i32 -> vector<24x128xf32>
    %c8_79 = arith.constant 8 : index
    %165 = memref.load %arg8[%c8_79] : memref<18xf32, #tpu.memory_space<smem>>
    %166 = vector.broadcast %165 : f32 to vector<24x128xf32>
    %167 = arith.mulf %164, %166 : vector<24x128xf32>
    %168 = arith.addf %163, %167 : vector<24x128xf32>
    %c0_80 = arith.constant 0 : index
    %169 = memref.load %arg9[%c0_80] : memref<1xf32, #tpu.memory_space<smem>>
    %170 = vector.broadcast %169 : f32 to vector<24x128xf32>
    %171 = arith.addf %168, %170 : vector<24x128xf32>
    %c1_i32_81 = arith.constant 1 : i32
    %172 = tpu.dynamic_rotate %125 by %c1_i32_81 dim 1 : vector<24x128xf32>, i32 -> vector<24x128xf32>
    %c1_i32_82 = arith.constant 1 : i32
    %173 = tpu.dynamic_rotate %172 by %c1_i32_82 dim 0 : vector<24x128xf32>, i32 -> vector<24x128xf32>
    %c9 = arith.constant 9 : index
    %174 = memref.load %arg8[%c9] : memref<18xf32, #tpu.memory_space<smem>>
    %175 = vector.broadcast %174 : f32 to vector<24x128xf32>
    %176 = arith.mulf %173, %175 : vector<24x128xf32>
    %c12 = arith.constant 12 : index
    %177 = memref.load %arg8[%c12] : memref<18xf32, #tpu.memory_space<smem>>
    %178 = vector.broadcast %177 : f32 to vector<24x128xf32>
    %179 = arith.mulf %172, %178 : vector<24x128xf32>
    %180 = arith.addf %176, %179 : vector<24x128xf32>
    %c23_i32_83 = arith.constant 23 : i32
    %181 = tpu.dynamic_rotate %172 by %c23_i32_83 dim 0 : vector<24x128xf32>, i32 -> vector<24x128xf32>
    %c15 = arith.constant 15 : index
    %182 = memref.load %arg8[%c15] : memref<18xf32, #tpu.memory_space<smem>>
    %183 = vector.broadcast %182 : f32 to vector<24x128xf32>
    %184 = arith.mulf %181, %183 : vector<24x128xf32>
    %185 = arith.addf %180, %184 : vector<24x128xf32>
    %c1_i32_84 = arith.constant 1 : i32
    %186 = tpu.dynamic_rotate %125 by %c1_i32_84 dim 0 : vector<24x128xf32>, i32 -> vector<24x128xf32>
    %c10 = arith.constant 10 : index
    %187 = memref.load %arg8[%c10] : memref<18xf32, #tpu.memory_space<smem>>
    %188 = vector.broadcast %187 : f32 to vector<24x128xf32>
    %189 = arith.mulf %186, %188 : vector<24x128xf32>
    %190 = arith.addf %185, %189 : vector<24x128xf32>
    %c13 = arith.constant 13 : index
    %191 = memref.load %arg8[%c13] : memref<18xf32, #tpu.memory_space<smem>>
    %192 = vector.broadcast %191 : f32 to vector<24x128xf32>
    %193 = arith.mulf %125, %192 : vector<24x128xf32>
    %194 = arith.addf %190, %193 : vector<24x128xf32>
    %c23_i32_85 = arith.constant 23 : i32
    %195 = tpu.dynamic_rotate %125 by %c23_i32_85 dim 0 : vector<24x128xf32>, i32 -> vector<24x128xf32>
    %c16 = arith.constant 16 : index
    %196 = memref.load %arg8[%c16] : memref<18xf32, #tpu.memory_space<smem>>
    %197 = vector.broadcast %196 : f32 to vector<24x128xf32>
    %198 = arith.mulf %195, %197 : vector<24x128xf32>
    %199 = arith.addf %194, %198 : vector<24x128xf32>
    %c127_i32_86 = arith.constant 127 : i32
    %200 = tpu.dynamic_rotate %125 by %c127_i32_86 dim 1 : vector<24x128xf32>, i32 -> vector<24x128xf32>
    %c1_i32_87 = arith.constant 1 : i32
    %201 = tpu.dynamic_rotate %200 by %c1_i32_87 dim 0 : vector<24x128xf32>, i32 -> vector<24x128xf32>
    %c11 = arith.constant 11 : index
    %202 = memref.load %arg8[%c11] : memref<18xf32, #tpu.memory_space<smem>>
    %203 = vector.broadcast %202 : f32 to vector<24x128xf32>
    %204 = arith.mulf %201, %203 : vector<24x128xf32>
    %205 = arith.addf %199, %204 : vector<24x128xf32>
    %c14 = arith.constant 14 : index
    %206 = memref.load %arg8[%c14] : memref<18xf32, #tpu.memory_space<smem>>
    %207 = vector.broadcast %206 : f32 to vector<24x128xf32>
    %208 = arith.mulf %200, %207 : vector<24x128xf32>
    %209 = arith.addf %205, %208 : vector<24x128xf32>
    %c23_i32_88 = arith.constant 23 : i32
    %210 = tpu.dynamic_rotate %200 by %c23_i32_88 dim 0 : vector<24x128xf32>, i32 -> vector<24x128xf32>
    %c17 = arith.constant 17 : index
    %211 = memref.load %arg8[%c17] : memref<18xf32, #tpu.memory_space<smem>>
    %212 = vector.broadcast %211 : f32 to vector<24x128xf32>
    %213 = arith.mulf %210, %212 : vector<24x128xf32>
    %214 = arith.addf %209, %213 : vector<24x128xf32>
    %215 = arith.addf %119, %171 : vector<24x128xf32>
    %cst_89 = arith.constant 0.000000e+00 : f32
    %216 = vector.broadcast %cst_89 : f32 to vector<24x128xf32>
    %217 = arith.select %48, %215, %216 : vector<24x128xi1>, vector<24x128xf32>
    %cst_90 = arith.constant 0.000000e+00 : f32
    %218 = vector.broadcast %cst_90 : f32 to vector<24x128xf32>
    %219 = arith.select %48, %214, %218 : vector<24x128xi1>, vector<24x128xf32>
    %c1_i32_91 = arith.constant 1 : i32
    %220 = tpu.dynamic_rotate %217 by %c1_i32_91 dim 1 : vector<24x128xf32>, i32 -> vector<24x128xf32>
    %c1_i32_92 = arith.constant 1 : i32
    %221 = tpu.dynamic_rotate %220 by %c1_i32_92 dim 0 : vector<24x128xf32>, i32 -> vector<24x128xf32>
    %c0_93 = arith.constant 0 : index
    %222 = memref.load %arg10[%c0_93] : memref<18xf32, #tpu.memory_space<smem>>
    %223 = vector.broadcast %222 : f32 to vector<24x128xf32>
    %224 = arith.mulf %221, %223 : vector<24x128xf32>
    %c3_94 = arith.constant 3 : index
    %225 = memref.load %arg10[%c3_94] : memref<18xf32, #tpu.memory_space<smem>>
    %226 = vector.broadcast %225 : f32 to vector<24x128xf32>
    %227 = arith.mulf %220, %226 : vector<24x128xf32>
    %228 = arith.addf %224, %227 : vector<24x128xf32>
    %c23_i32_95 = arith.constant 23 : i32
    %229 = tpu.dynamic_rotate %220 by %c23_i32_95 dim 0 : vector<24x128xf32>, i32 -> vector<24x128xf32>
    %c6_96 = arith.constant 6 : index
    %230 = memref.load %arg10[%c6_96] : memref<18xf32, #tpu.memory_space<smem>>
    %231 = vector.broadcast %230 : f32 to vector<24x128xf32>
    %232 = arith.mulf %229, %231 : vector<24x128xf32>
    %233 = arith.addf %228, %232 : vector<24x128xf32>
    %c1_i32_97 = arith.constant 1 : i32
    %234 = tpu.dynamic_rotate %217 by %c1_i32_97 dim 0 : vector<24x128xf32>, i32 -> vector<24x128xf32>
    %c1_98 = arith.constant 1 : index
    %235 = memref.load %arg10[%c1_98] : memref<18xf32, #tpu.memory_space<smem>>
    %236 = vector.broadcast %235 : f32 to vector<24x128xf32>
    %237 = arith.mulf %234, %236 : vector<24x128xf32>
    %238 = arith.addf %233, %237 : vector<24x128xf32>
    %c4_99 = arith.constant 4 : index
    %239 = memref.load %arg10[%c4_99] : memref<18xf32, #tpu.memory_space<smem>>
    %240 = vector.broadcast %239 : f32 to vector<24x128xf32>
    %241 = arith.mulf %217, %240 : vector<24x128xf32>
    %242 = arith.addf %238, %241 : vector<24x128xf32>
    %c23_i32_100 = arith.constant 23 : i32
    %243 = tpu.dynamic_rotate %217 by %c23_i32_100 dim 0 : vector<24x128xf32>, i32 -> vector<24x128xf32>
    %c7_101 = arith.constant 7 : index
    %244 = memref.load %arg10[%c7_101] : memref<18xf32, #tpu.memory_space<smem>>
    %245 = vector.broadcast %244 : f32 to vector<24x128xf32>
    %246 = arith.mulf %243, %245 : vector<24x128xf32>
    %247 = arith.addf %242, %246 : vector<24x128xf32>
    %c127_i32_102 = arith.constant 127 : i32
    %248 = tpu.dynamic_rotate %217 by %c127_i32_102 dim 1 : vector<24x128xf32>, i32 -> vector<24x128xf32>
    %c1_i32_103 = arith.constant 1 : i32
    %249 = tpu.dynamic_rotate %248 by %c1_i32_103 dim 0 : vector<24x128xf32>, i32 -> vector<24x128xf32>
    %c2_104 = arith.constant 2 : index
    %250 = memref.load %arg10[%c2_104] : memref<18xf32, #tpu.memory_space<smem>>
    %251 = vector.broadcast %250 : f32 to vector<24x128xf32>
    %252 = arith.mulf %249, %251 : vector<24x128xf32>
    %253 = arith.addf %247, %252 : vector<24x128xf32>
    %c5_105 = arith.constant 5 : index
    %254 = memref.load %arg10[%c5_105] : memref<18xf32, #tpu.memory_space<smem>>
    %255 = vector.broadcast %254 : f32 to vector<24x128xf32>
    %256 = arith.mulf %248, %255 : vector<24x128xf32>
    %257 = arith.addf %253, %256 : vector<24x128xf32>
    %c23_i32_106 = arith.constant 23 : i32
    %258 = tpu.dynamic_rotate %248 by %c23_i32_106 dim 0 : vector<24x128xf32>, i32 -> vector<24x128xf32>
    %c8_107 = arith.constant 8 : index
    %259 = memref.load %arg10[%c8_107] : memref<18xf32, #tpu.memory_space<smem>>
    %260 = vector.broadcast %259 : f32 to vector<24x128xf32>
    %261 = arith.mulf %258, %260 : vector<24x128xf32>
    %262 = arith.addf %257, %261 : vector<24x128xf32>
    %c1_i32_108 = arith.constant 1 : i32
    %263 = tpu.dynamic_rotate %219 by %c1_i32_108 dim 1 : vector<24x128xf32>, i32 -> vector<24x128xf32>
    %c1_i32_109 = arith.constant 1 : i32
    %264 = tpu.dynamic_rotate %263 by %c1_i32_109 dim 0 : vector<24x128xf32>, i32 -> vector<24x128xf32>
    %c9_110 = arith.constant 9 : index
    %265 = memref.load %arg10[%c9_110] : memref<18xf32, #tpu.memory_space<smem>>
    %266 = vector.broadcast %265 : f32 to vector<24x128xf32>
    %267 = arith.mulf %264, %266 : vector<24x128xf32>
    %c12_111 = arith.constant 12 : index
    %268 = memref.load %arg10[%c12_111] : memref<18xf32, #tpu.memory_space<smem>>
    %269 = vector.broadcast %268 : f32 to vector<24x128xf32>
    %270 = arith.mulf %263, %269 : vector<24x128xf32>
    %271 = arith.addf %267, %270 : vector<24x128xf32>
    %c23_i32_112 = arith.constant 23 : i32
    %272 = tpu.dynamic_rotate %263 by %c23_i32_112 dim 0 : vector<24x128xf32>, i32 -> vector<24x128xf32>
    %c15_113 = arith.constant 15 : index
    %273 = memref.load %arg10[%c15_113] : memref<18xf32, #tpu.memory_space<smem>>
    %274 = vector.broadcast %273 : f32 to vector<24x128xf32>
    %275 = arith.mulf %272, %274 : vector<24x128xf32>
    %276 = arith.addf %271, %275 : vector<24x128xf32>
    %c1_i32_114 = arith.constant 1 : i32
    %277 = tpu.dynamic_rotate %219 by %c1_i32_114 dim 0 : vector<24x128xf32>, i32 -> vector<24x128xf32>
    %c10_115 = arith.constant 10 : index
    %278 = memref.load %arg10[%c10_115] : memref<18xf32, #tpu.memory_space<smem>>
    %279 = vector.broadcast %278 : f32 to vector<24x128xf32>
    %280 = arith.mulf %277, %279 : vector<24x128xf32>
    %281 = arith.addf %276, %280 : vector<24x128xf32>
    %c13_116 = arith.constant 13 : index
    %282 = memref.load %arg10[%c13_116] : memref<18xf32, #tpu.memory_space<smem>>
    %283 = vector.broadcast %282 : f32 to vector<24x128xf32>
    %284 = arith.mulf %219, %283 : vector<24x128xf32>
    %285 = arith.addf %281, %284 : vector<24x128xf32>
    %c23_i32_117 = arith.constant 23 : i32
    %286 = tpu.dynamic_rotate %219 by %c23_i32_117 dim 0 : vector<24x128xf32>, i32 -> vector<24x128xf32>
    %c16_118 = arith.constant 16 : index
    %287 = memref.load %arg10[%c16_118] : memref<18xf32, #tpu.memory_space<smem>>
    %288 = vector.broadcast %287 : f32 to vector<24x128xf32>
    %289 = arith.mulf %286, %288 : vector<24x128xf32>
    %290 = arith.addf %285, %289 : vector<24x128xf32>
    %c127_i32_119 = arith.constant 127 : i32
    %291 = tpu.dynamic_rotate %219 by %c127_i32_119 dim 1 : vector<24x128xf32>, i32 -> vector<24x128xf32>
    %c1_i32_120 = arith.constant 1 : i32
    %292 = tpu.dynamic_rotate %291 by %c1_i32_120 dim 0 : vector<24x128xf32>, i32 -> vector<24x128xf32>
    %c11_121 = arith.constant 11 : index
    %293 = memref.load %arg10[%c11_121] : memref<18xf32, #tpu.memory_space<smem>>
    %294 = vector.broadcast %293 : f32 to vector<24x128xf32>
    %295 = arith.mulf %292, %294 : vector<24x128xf32>
    %296 = arith.addf %290, %295 : vector<24x128xf32>
    %c14_122 = arith.constant 14 : index
    %297 = memref.load %arg10[%c14_122] : memref<18xf32, #tpu.memory_space<smem>>
    %298 = vector.broadcast %297 : f32 to vector<24x128xf32>
    %299 = arith.mulf %291, %298 : vector<24x128xf32>
    %300 = arith.addf %296, %299 : vector<24x128xf32>
    %c23_i32_123 = arith.constant 23 : i32
    %301 = tpu.dynamic_rotate %291 by %c23_i32_123 dim 0 : vector<24x128xf32>, i32 -> vector<24x128xf32>
    %c17_124 = arith.constant 17 : index
    %302 = memref.load %arg10[%c17_124] : memref<18xf32, #tpu.memory_space<smem>>
    %303 = vector.broadcast %302 : f32 to vector<24x128xf32>
    %304 = arith.mulf %301, %303 : vector<24x128xf32>
    %305 = arith.addf %300, %304 : vector<24x128xf32>
    %306 = arith.addf %262, %305 : vector<24x128xf32>
    %c0_125 = arith.constant 0 : index
    %307 = memref.load %arg11[%c0_125] : memref<1xf32, #tpu.memory_space<smem>>
    %308 = vector.broadcast %307 : f32 to vector<24x128xf32>
    %309 = arith.addf %306, %308 : vector<24x128xf32>
    %cst_126 = arith.constant 9.99999997E-7 : f32
    %310 = vector.broadcast %cst_126 : f32 to vector<24x128xf32>
    %311 = arith.addf %116, %310 : vector<24x128xf32>
    %cst_127 = arith.constant 1.000000e+00 : f32
    %312 = vector.broadcast %cst_127 : f32 to vector<24x128xf32>
    %313 = arith.divf %312, %311 : vector<24x128xf32>
    %314 = arith.mulf %12, %313 : vector<24x128xf32>
    %cst_128 = arith.constant 0.000000e+00 : f32
    %cst_129 = arith.constant 1.000000e+00 : f32
    %315 = vector.broadcast %cst_128 : f32 to vector<24x128xf32>
    %316 = arith.maximumf %315, %314 : vector<24x128xf32>
    %317 = vector.broadcast %cst_129 : f32 to vector<24x128xf32>
    %318 = arith.minimumf %317, %316 : vector<24x128xf32>
    %319 = arith.mulf %23, %313 : vector<24x128xf32>
    %cst_130 = arith.constant 0.000000e+00 : f32
    %cst_131 = arith.constant 1.000000e+00 : f32
    %320 = vector.broadcast %cst_130 : f32 to vector<24x128xf32>
    %321 = arith.maximumf %320, %319 : vector<24x128xf32>
    %322 = vector.broadcast %cst_131 : f32 to vector<24x128xf32>
    %323 = arith.minimumf %322, %321 : vector<24x128xf32>
    %324 = arith.mulf %34, %313 : vector<24x128xf32>
    %cst_132 = arith.constant 0.000000e+00 : f32
    %cst_133 = arith.constant 1.000000e+00 : f32
    %325 = vector.broadcast %cst_132 : f32 to vector<24x128xf32>
    %326 = arith.maximumf %325, %324 : vector<24x128xf32>
    %327 = vector.broadcast %cst_133 : f32 to vector<24x128xf32>
    %328 = arith.minimumf %327, %326 : vector<24x128xf32>
    %cst_134 = arith.constant 2.990000e-01 : f32
    %329 = vector.broadcast %cst_134 : f32 to vector<24x128xf32>
    %330 = arith.mulf %329, %318 : vector<24x128xf32>
    %cst_135 = arith.constant 5.870000e-01 : f32
    %331 = vector.broadcast %cst_135 : f32 to vector<24x128xf32>
    %332 = arith.mulf %331, %323 : vector<24x128xf32>
    %333 = arith.addf %330, %332 : vector<24x128xf32>
    %cst_136 = arith.constant 1.140000e-01 : f32
    %334 = vector.broadcast %cst_136 : f32 to vector<24x128xf32>
    %335 = arith.mulf %334, %328 : vector<24x128xf32>
    %336 = arith.addf %333, %335 : vector<24x128xf32>
    %337 = arith.subf %328, %336 : vector<24x128xf32>
    %cst_137 = arith.constant 5.640000e-01 : f32
    %338 = vector.broadcast %cst_137 : f32 to vector<24x128xf32>
    %339 = arith.mulf %337, %338 : vector<24x128xf32>
    %cst_138 = arith.constant 5.000000e-01 : f32
    %340 = vector.broadcast %cst_138 : f32 to vector<24x128xf32>
    %341 = arith.addf %339, %340 : vector<24x128xf32>
    %342 = arith.subf %318, %336 : vector<24x128xf32>
    %cst_139 = arith.constant 0.712999999 : f32
    %343 = vector.broadcast %cst_139 : f32 to vector<24x128xf32>
    %344 = arith.mulf %342, %343 : vector<24x128xf32>
    %cst_140 = arith.constant 5.000000e-01 : f32
    %345 = vector.broadcast %cst_140 : f32 to vector<24x128xf32>
    %346 = arith.addf %344, %345 : vector<24x128xf32>
    %cst_141 = arith.constant 0.000000e+00 : f32
    %347 = vector.broadcast %cst_141 : f32 to vector<24x128xf32>
    %348 = arith.select %48, %61, %347 : vector<24x128xi1>, vector<24x128xf32>
    %cst_142 = arith.constant 0.000000e+00 : f32
    %349 = vector.broadcast %cst_142 : f32 to vector<24x128xf32>
    %350 = arith.select %48, %66, %349 : vector<24x128xi1>, vector<24x128xf32>
    %cst_143 = arith.constant 0.000000e+00 : f32
    %351 = vector.broadcast %cst_143 : f32 to vector<24x128xf32>
    %352 = arith.select %48, %309, %351 : vector<24x128xi1>, vector<24x128xf32>
    %cst_144 = arith.constant 0.000000e+00 : f32
    %353 = vector.broadcast %cst_144 : f32 to vector<24x128xf32>
    %354 = arith.select %48, %341, %353 : vector<24x128xi1>, vector<24x128xf32>
    %cst_145 = arith.constant 0.000000e+00 : f32
    %355 = vector.broadcast %cst_145 : f32 to vector<24x128xf32>
    %356 = arith.select %48, %346, %355 : vector<24x128xi1>, vector<24x128xf32>
    %c1_i32_146 = arith.constant 1 : i32
    %357 = tpu.dynamic_rotate %56 by %c1_i32_146 dim 1 : vector<24x128xf32>, i32 -> vector<24x128xf32>
    %c1_i32_147 = arith.constant 1 : i32
    %358 = tpu.dynamic_rotate %357 by %c1_i32_147 dim 0 : vector<24x128xf32>, i32 -> vector<24x128xf32>
    %c0_148 = arith.constant 0 : index
    %359 = memref.load %arg12[%c0_148] : memref<108xf32, #tpu.memory_space<smem>>
    %360 = vector.broadcast %359 : f32 to vector<24x128xf32>
    %361 = arith.mulf %358, %360 : vector<24x128xf32>
    %c54 = arith.constant 54 : index
    %362 = memref.load %arg12[%c54] : memref<108xf32, #tpu.memory_space<smem>>
    %363 = vector.broadcast %362 : f32 to vector<24x128xf32>
    %364 = arith.mulf %358, %363 : vector<24x128xf32>
    %c3_149 = arith.constant 3 : index
    %365 = memref.load %arg12[%c3_149] : memref<108xf32, #tpu.memory_space<smem>>
    %366 = vector.broadcast %365 : f32 to vector<24x128xf32>
    %367 = arith.mulf %357, %366 : vector<24x128xf32>
    %368 = arith.addf %361, %367 : vector<24x128xf32>
    %c57 = arith.constant 57 : index
    %369 = memref.load %arg12[%c57] : memref<108xf32, #tpu.memory_space<smem>>
    %370 = vector.broadcast %369 : f32 to vector<24x128xf32>
    %371 = arith.mulf %357, %370 : vector<24x128xf32>
    %372 = arith.addf %364, %371 : vector<24x128xf32>
    %c23_i32_150 = arith.constant 23 : i32
    %373 = tpu.dynamic_rotate %357 by %c23_i32_150 dim 0 : vector<24x128xf32>, i32 -> vector<24x128xf32>
    %c6_151 = arith.constant 6 : index
    %374 = memref.load %arg12[%c6_151] : memref<108xf32, #tpu.memory_space<smem>>
    %375 = vector.broadcast %374 : f32 to vector<24x128xf32>
    %376 = arith.mulf %373, %375 : vector<24x128xf32>
    %377 = arith.addf %368, %376 : vector<24x128xf32>
    %c60 = arith.constant 60 : index
    %378 = memref.load %arg12[%c60] : memref<108xf32, #tpu.memory_space<smem>>
    %379 = vector.broadcast %378 : f32 to vector<24x128xf32>
    %380 = arith.mulf %373, %379 : vector<24x128xf32>
    %381 = arith.addf %372, %380 : vector<24x128xf32>
    %c1_i32_152 = arith.constant 1 : i32
    %382 = tpu.dynamic_rotate %56 by %c1_i32_152 dim 0 : vector<24x128xf32>, i32 -> vector<24x128xf32>
    %c1_153 = arith.constant 1 : index
    %383 = memref.load %arg12[%c1_153] : memref<108xf32, #tpu.memory_space<smem>>
    %384 = vector.broadcast %383 : f32 to vector<24x128xf32>
    %385 = arith.mulf %382, %384 : vector<24x128xf32>
    %386 = arith.addf %377, %385 : vector<24x128xf32>
    %c55 = arith.constant 55 : index
    %387 = memref.load %arg12[%c55] : memref<108xf32, #tpu.memory_space<smem>>
    %388 = vector.broadcast %387 : f32 to vector<24x128xf32>
    %389 = arith.mulf %382, %388 : vector<24x128xf32>
    %390 = arith.addf %381, %389 : vector<24x128xf32>
    %c4_154 = arith.constant 4 : index
    %391 = memref.load %arg12[%c4_154] : memref<108xf32, #tpu.memory_space<smem>>
    %392 = vector.broadcast %391 : f32 to vector<24x128xf32>
    %393 = arith.mulf %56, %392 : vector<24x128xf32>
    %394 = arith.addf %386, %393 : vector<24x128xf32>
    %c58 = arith.constant 58 : index
    %395 = memref.load %arg12[%c58] : memref<108xf32, #tpu.memory_space<smem>>
    %396 = vector.broadcast %395 : f32 to vector<24x128xf32>
    %397 = arith.mulf %56, %396 : vector<24x128xf32>
    %398 = arith.addf %390, %397 : vector<24x128xf32>
    %c23_i32_155 = arith.constant 23 : i32
    %399 = tpu.dynamic_rotate %56 by %c23_i32_155 dim 0 : vector<24x128xf32>, i32 -> vector<24x128xf32>
    %c7_156 = arith.constant 7 : index
    %400 = memref.load %arg12[%c7_156] : memref<108xf32, #tpu.memory_space<smem>>
    %401 = vector.broadcast %400 : f32 to vector<24x128xf32>
    %402 = arith.mulf %399, %401 : vector<24x128xf32>
    %403 = arith.addf %394, %402 : vector<24x128xf32>
    %c61 = arith.constant 61 : index
    %404 = memref.load %arg12[%c61] : memref<108xf32, #tpu.memory_space<smem>>
    %405 = vector.broadcast %404 : f32 to vector<24x128xf32>
    %406 = arith.mulf %399, %405 : vector<24x128xf32>
    %407 = arith.addf %398, %406 : vector<24x128xf32>
    %c127_i32_157 = arith.constant 127 : i32
    %408 = tpu.dynamic_rotate %56 by %c127_i32_157 dim 1 : vector<24x128xf32>, i32 -> vector<24x128xf32>
    %c1_i32_158 = arith.constant 1 : i32
    %409 = tpu.dynamic_rotate %408 by %c1_i32_158 dim 0 : vector<24x128xf32>, i32 -> vector<24x128xf32>
    %c2_159 = arith.constant 2 : index
    %410 = memref.load %arg12[%c2_159] : memref<108xf32, #tpu.memory_space<smem>>
    %411 = vector.broadcast %410 : f32 to vector<24x128xf32>
    %412 = arith.mulf %409, %411 : vector<24x128xf32>
    %413 = arith.addf %403, %412 : vector<24x128xf32>
    %c56 = arith.constant 56 : index
    %414 = memref.load %arg12[%c56] : memref<108xf32, #tpu.memory_space<smem>>
    %415 = vector.broadcast %414 : f32 to vector<24x128xf32>
    %416 = arith.mulf %409, %415 : vector<24x128xf32>
    %417 = arith.addf %407, %416 : vector<24x128xf32>
    %c5_160 = arith.constant 5 : index
    %418 = memref.load %arg12[%c5_160] : memref<108xf32, #tpu.memory_space<smem>>
    %419 = vector.broadcast %418 : f32 to vector<24x128xf32>
    %420 = arith.mulf %408, %419 : vector<24x128xf32>
    %421 = arith.addf %413, %420 : vector<24x128xf32>
    %c59 = arith.constant 59 : index
    %422 = memref.load %arg12[%c59] : memref<108xf32, #tpu.memory_space<smem>>
    %423 = vector.broadcast %422 : f32 to vector<24x128xf32>
    %424 = arith.mulf %408, %423 : vector<24x128xf32>
    %425 = arith.addf %417, %424 : vector<24x128xf32>
    %c23_i32_161 = arith.constant 23 : i32
    %426 = tpu.dynamic_rotate %408 by %c23_i32_161 dim 0 : vector<24x128xf32>, i32 -> vector<24x128xf32>
    %c8_162 = arith.constant 8 : index
    %427 = memref.load %arg12[%c8_162] : memref<108xf32, #tpu.memory_space<smem>>
    %428 = vector.broadcast %427 : f32 to vector<24x128xf32>
    %429 = arith.mulf %426, %428 : vector<24x128xf32>
    %430 = arith.addf %421, %429 : vector<24x128xf32>
    %c62 = arith.constant 62 : index
    %431 = memref.load %arg12[%c62] : memref<108xf32, #tpu.memory_space<smem>>
    %432 = vector.broadcast %431 : f32 to vector<24x128xf32>
    %433 = arith.mulf %426, %432 : vector<24x128xf32>
    %434 = arith.addf %425, %433 : vector<24x128xf32>
    %c1_i32_163 = arith.constant 1 : i32
    %435 = tpu.dynamic_rotate %348 by %c1_i32_163 dim 1 : vector<24x128xf32>, i32 -> vector<24x128xf32>
    %c1_i32_164 = arith.constant 1 : i32
    %436 = tpu.dynamic_rotate %435 by %c1_i32_164 dim 0 : vector<24x128xf32>, i32 -> vector<24x128xf32>
    %c9_165 = arith.constant 9 : index
    %437 = memref.load %arg12[%c9_165] : memref<108xf32, #tpu.memory_space<smem>>
    %438 = vector.broadcast %437 : f32 to vector<24x128xf32>
    %439 = arith.mulf %436, %438 : vector<24x128xf32>
    %440 = arith.addf %430, %439 : vector<24x128xf32>
    %c63 = arith.constant 63 : index
    %441 = memref.load %arg12[%c63] : memref<108xf32, #tpu.memory_space<smem>>
    %442 = vector.broadcast %441 : f32 to vector<24x128xf32>
    %443 = arith.mulf %436, %442 : vector<24x128xf32>
    %444 = arith.addf %434, %443 : vector<24x128xf32>
    %c12_166 = arith.constant 12 : index
    %445 = memref.load %arg12[%c12_166] : memref<108xf32, #tpu.memory_space<smem>>
    %446 = vector.broadcast %445 : f32 to vector<24x128xf32>
    %447 = arith.mulf %435, %446 : vector<24x128xf32>
    %448 = arith.addf %440, %447 : vector<24x128xf32>
    %c66 = arith.constant 66 : index
    %449 = memref.load %arg12[%c66] : memref<108xf32, #tpu.memory_space<smem>>
    %450 = vector.broadcast %449 : f32 to vector<24x128xf32>
    %451 = arith.mulf %435, %450 : vector<24x128xf32>
    %452 = arith.addf %444, %451 : vector<24x128xf32>
    %c23_i32_167 = arith.constant 23 : i32
    %453 = tpu.dynamic_rotate %435 by %c23_i32_167 dim 0 : vector<24x128xf32>, i32 -> vector<24x128xf32>
    %c15_168 = arith.constant 15 : index
    %454 = memref.load %arg12[%c15_168] : memref<108xf32, #tpu.memory_space<smem>>
    %455 = vector.broadcast %454 : f32 to vector<24x128xf32>
    %456 = arith.mulf %453, %455 : vector<24x128xf32>
    %457 = arith.addf %448, %456 : vector<24x128xf32>
    %c69 = arith.constant 69 : index
    %458 = memref.load %arg12[%c69] : memref<108xf32, #tpu.memory_space<smem>>
    %459 = vector.broadcast %458 : f32 to vector<24x128xf32>
    %460 = arith.mulf %453, %459 : vector<24x128xf32>
    %461 = arith.addf %452, %460 : vector<24x128xf32>
    %c1_i32_169 = arith.constant 1 : i32
    %462 = tpu.dynamic_rotate %348 by %c1_i32_169 dim 0 : vector<24x128xf32>, i32 -> vector<24x128xf32>
    %c10_170 = arith.constant 10 : index
    %463 = memref.load %arg12[%c10_170] : memref<108xf32, #tpu.memory_space<smem>>
    %464 = vector.broadcast %463 : f32 to vector<24x128xf32>
    %465 = arith.mulf %462, %464 : vector<24x128xf32>
    %466 = arith.addf %457, %465 : vector<24x128xf32>
    %c64 = arith.constant 64 : index
    %467 = memref.load %arg12[%c64] : memref<108xf32, #tpu.memory_space<smem>>
    %468 = vector.broadcast %467 : f32 to vector<24x128xf32>
    %469 = arith.mulf %462, %468 : vector<24x128xf32>
    %470 = arith.addf %461, %469 : vector<24x128xf32>
    %c13_171 = arith.constant 13 : index
    %471 = memref.load %arg12[%c13_171] : memref<108xf32, #tpu.memory_space<smem>>
    %472 = vector.broadcast %471 : f32 to vector<24x128xf32>
    %473 = arith.mulf %348, %472 : vector<24x128xf32>
    %474 = arith.addf %466, %473 : vector<24x128xf32>
    %c67 = arith.constant 67 : index
    %475 = memref.load %arg12[%c67] : memref<108xf32, #tpu.memory_space<smem>>
    %476 = vector.broadcast %475 : f32 to vector<24x128xf32>
    %477 = arith.mulf %348, %476 : vector<24x128xf32>
    %478 = arith.addf %470, %477 : vector<24x128xf32>
    %c23_i32_172 = arith.constant 23 : i32
    %479 = tpu.dynamic_rotate %348 by %c23_i32_172 dim 0 : vector<24x128xf32>, i32 -> vector<24x128xf32>
    %c16_173 = arith.constant 16 : index
    %480 = memref.load %arg12[%c16_173] : memref<108xf32, #tpu.memory_space<smem>>
    %481 = vector.broadcast %480 : f32 to vector<24x128xf32>
    %482 = arith.mulf %479, %481 : vector<24x128xf32>
    %483 = arith.addf %474, %482 : vector<24x128xf32>
    %c70 = arith.constant 70 : index
    %484 = memref.load %arg12[%c70] : memref<108xf32, #tpu.memory_space<smem>>
    %485 = vector.broadcast %484 : f32 to vector<24x128xf32>
    %486 = arith.mulf %479, %485 : vector<24x128xf32>
    %487 = arith.addf %478, %486 : vector<24x128xf32>
    %c127_i32_174 = arith.constant 127 : i32
    %488 = tpu.dynamic_rotate %348 by %c127_i32_174 dim 1 : vector<24x128xf32>, i32 -> vector<24x128xf32>
    %c1_i32_175 = arith.constant 1 : i32
    %489 = tpu.dynamic_rotate %488 by %c1_i32_175 dim 0 : vector<24x128xf32>, i32 -> vector<24x128xf32>
    %c11_176 = arith.constant 11 : index
    %490 = memref.load %arg12[%c11_176] : memref<108xf32, #tpu.memory_space<smem>>
    %491 = vector.broadcast %490 : f32 to vector<24x128xf32>
    %492 = arith.mulf %489, %491 : vector<24x128xf32>
    %493 = arith.addf %483, %492 : vector<24x128xf32>
    %c65 = arith.constant 65 : index
    %494 = memref.load %arg12[%c65] : memref<108xf32, #tpu.memory_space<smem>>
    %495 = vector.broadcast %494 : f32 to vector<24x128xf32>
    %496 = arith.mulf %489, %495 : vector<24x128xf32>
    %497 = arith.addf %487, %496 : vector<24x128xf32>
    %c14_177 = arith.constant 14 : index
    %498 = memref.load %arg12[%c14_177] : memref<108xf32, #tpu.memory_space<smem>>
    %499 = vector.broadcast %498 : f32 to vector<24x128xf32>
    %500 = arith.mulf %488, %499 : vector<24x128xf32>
    %501 = arith.addf %493, %500 : vector<24x128xf32>
    %c68 = arith.constant 68 : index
    %502 = memref.load %arg12[%c68] : memref<108xf32, #tpu.memory_space<smem>>
    %503 = vector.broadcast %502 : f32 to vector<24x128xf32>
    %504 = arith.mulf %488, %503 : vector<24x128xf32>
    %505 = arith.addf %497, %504 : vector<24x128xf32>
    %c23_i32_178 = arith.constant 23 : i32
    %506 = tpu.dynamic_rotate %488 by %c23_i32_178 dim 0 : vector<24x128xf32>, i32 -> vector<24x128xf32>
    %c17_179 = arith.constant 17 : index
    %507 = memref.load %arg12[%c17_179] : memref<108xf32, #tpu.memory_space<smem>>
    %508 = vector.broadcast %507 : f32 to vector<24x128xf32>
    %509 = arith.mulf %506, %508 : vector<24x128xf32>
    %510 = arith.addf %501, %509 : vector<24x128xf32>
    %c71 = arith.constant 71 : index
    %511 = memref.load %arg12[%c71] : memref<108xf32, #tpu.memory_space<smem>>
    %512 = vector.broadcast %511 : f32 to vector<24x128xf32>
    %513 = arith.mulf %506, %512 : vector<24x128xf32>
    %514 = arith.addf %505, %513 : vector<24x128xf32>
    %c1_i32_180 = arith.constant 1 : i32
    %515 = tpu.dynamic_rotate %350 by %c1_i32_180 dim 1 : vector<24x128xf32>, i32 -> vector<24x128xf32>
    %c1_i32_181 = arith.constant 1 : i32
    %516 = tpu.dynamic_rotate %515 by %c1_i32_181 dim 0 : vector<24x128xf32>, i32 -> vector<24x128xf32>
    %c18 = arith.constant 18 : index
    %517 = memref.load %arg12[%c18] : memref<108xf32, #tpu.memory_space<smem>>
    %518 = vector.broadcast %517 : f32 to vector<24x128xf32>
    %519 = arith.mulf %516, %518 : vector<24x128xf32>
    %520 = arith.addf %510, %519 : vector<24x128xf32>
    %c72 = arith.constant 72 : index
    %521 = memref.load %arg12[%c72] : memref<108xf32, #tpu.memory_space<smem>>
    %522 = vector.broadcast %521 : f32 to vector<24x128xf32>
    %523 = arith.mulf %516, %522 : vector<24x128xf32>
    %524 = arith.addf %514, %523 : vector<24x128xf32>
    %c21 = arith.constant 21 : index
    %525 = memref.load %arg12[%c21] : memref<108xf32, #tpu.memory_space<smem>>
    %526 = vector.broadcast %525 : f32 to vector<24x128xf32>
    %527 = arith.mulf %515, %526 : vector<24x128xf32>
    %528 = arith.addf %520, %527 : vector<24x128xf32>
    %c75 = arith.constant 75 : index
    %529 = memref.load %arg12[%c75] : memref<108xf32, #tpu.memory_space<smem>>
    %530 = vector.broadcast %529 : f32 to vector<24x128xf32>
    %531 = arith.mulf %515, %530 : vector<24x128xf32>
    %532 = arith.addf %524, %531 : vector<24x128xf32>
    %c23_i32_182 = arith.constant 23 : i32
    %533 = tpu.dynamic_rotate %515 by %c23_i32_182 dim 0 : vector<24x128xf32>, i32 -> vector<24x128xf32>
    %c24 = arith.constant 24 : index
    %534 = memref.load %arg12[%c24] : memref<108xf32, #tpu.memory_space<smem>>
    %535 = vector.broadcast %534 : f32 to vector<24x128xf32>
    %536 = arith.mulf %533, %535 : vector<24x128xf32>
    %537 = arith.addf %528, %536 : vector<24x128xf32>
    %c78 = arith.constant 78 : index
    %538 = memref.load %arg12[%c78] : memref<108xf32, #tpu.memory_space<smem>>
    %539 = vector.broadcast %538 : f32 to vector<24x128xf32>
    %540 = arith.mulf %533, %539 : vector<24x128xf32>
    %541 = arith.addf %532, %540 : vector<24x128xf32>
    %c1_i32_183 = arith.constant 1 : i32
    %542 = tpu.dynamic_rotate %350 by %c1_i32_183 dim 0 : vector<24x128xf32>, i32 -> vector<24x128xf32>
    %c19 = arith.constant 19 : index
    %543 = memref.load %arg12[%c19] : memref<108xf32, #tpu.memory_space<smem>>
    %544 = vector.broadcast %543 : f32 to vector<24x128xf32>
    %545 = arith.mulf %542, %544 : vector<24x128xf32>
    %546 = arith.addf %537, %545 : vector<24x128xf32>
    %c73 = arith.constant 73 : index
    %547 = memref.load %arg12[%c73] : memref<108xf32, #tpu.memory_space<smem>>
    %548 = vector.broadcast %547 : f32 to vector<24x128xf32>
    %549 = arith.mulf %542, %548 : vector<24x128xf32>
    %550 = arith.addf %541, %549 : vector<24x128xf32>
    %c22 = arith.constant 22 : index
    %551 = memref.load %arg12[%c22] : memref<108xf32, #tpu.memory_space<smem>>
    %552 = vector.broadcast %551 : f32 to vector<24x128xf32>
    %553 = arith.mulf %350, %552 : vector<24x128xf32>
    %554 = arith.addf %546, %553 : vector<24x128xf32>
    %c76 = arith.constant 76 : index
    %555 = memref.load %arg12[%c76] : memref<108xf32, #tpu.memory_space<smem>>
    %556 = vector.broadcast %555 : f32 to vector<24x128xf32>
    %557 = arith.mulf %350, %556 : vector<24x128xf32>
    %558 = arith.addf %550, %557 : vector<24x128xf32>
    %c23_i32_184 = arith.constant 23 : i32
    %559 = tpu.dynamic_rotate %350 by %c23_i32_184 dim 0 : vector<24x128xf32>, i32 -> vector<24x128xf32>
    %c25 = arith.constant 25 : index
    %560 = memref.load %arg12[%c25] : memref<108xf32, #tpu.memory_space<smem>>
    %561 = vector.broadcast %560 : f32 to vector<24x128xf32>
    %562 = arith.mulf %559, %561 : vector<24x128xf32>
    %563 = arith.addf %554, %562 : vector<24x128xf32>
    %c79 = arith.constant 79 : index
    %564 = memref.load %arg12[%c79] : memref<108xf32, #tpu.memory_space<smem>>
    %565 = vector.broadcast %564 : f32 to vector<24x128xf32>
    %566 = arith.mulf %559, %565 : vector<24x128xf32>
    %567 = arith.addf %558, %566 : vector<24x128xf32>
    %c127_i32_185 = arith.constant 127 : i32
    %568 = tpu.dynamic_rotate %350 by %c127_i32_185 dim 1 : vector<24x128xf32>, i32 -> vector<24x128xf32>
    %c1_i32_186 = arith.constant 1 : i32
    %569 = tpu.dynamic_rotate %568 by %c1_i32_186 dim 0 : vector<24x128xf32>, i32 -> vector<24x128xf32>
    %c20 = arith.constant 20 : index
    %570 = memref.load %arg12[%c20] : memref<108xf32, #tpu.memory_space<smem>>
    %571 = vector.broadcast %570 : f32 to vector<24x128xf32>
    %572 = arith.mulf %569, %571 : vector<24x128xf32>
    %573 = arith.addf %563, %572 : vector<24x128xf32>
    %c74 = arith.constant 74 : index
    %574 = memref.load %arg12[%c74] : memref<108xf32, #tpu.memory_space<smem>>
    %575 = vector.broadcast %574 : f32 to vector<24x128xf32>
    %576 = arith.mulf %569, %575 : vector<24x128xf32>
    %577 = arith.addf %567, %576 : vector<24x128xf32>
    %c23 = arith.constant 23 : index
    %578 = memref.load %arg12[%c23] : memref<108xf32, #tpu.memory_space<smem>>
    %579 = vector.broadcast %578 : f32 to vector<24x128xf32>
    %580 = arith.mulf %568, %579 : vector<24x128xf32>
    %581 = arith.addf %573, %580 : vector<24x128xf32>
    %c77 = arith.constant 77 : index
    %582 = memref.load %arg12[%c77] : memref<108xf32, #tpu.memory_space<smem>>
    %583 = vector.broadcast %582 : f32 to vector<24x128xf32>
    %584 = arith.mulf %568, %583 : vector<24x128xf32>
    %585 = arith.addf %577, %584 : vector<24x128xf32>
    %c23_i32_187 = arith.constant 23 : i32
    %586 = tpu.dynamic_rotate %568 by %c23_i32_187 dim 0 : vector<24x128xf32>, i32 -> vector<24x128xf32>
    %c26 = arith.constant 26 : index
    %587 = memref.load %arg12[%c26] : memref<108xf32, #tpu.memory_space<smem>>
    %588 = vector.broadcast %587 : f32 to vector<24x128xf32>
    %589 = arith.mulf %586, %588 : vector<24x128xf32>
    %590 = arith.addf %581, %589 : vector<24x128xf32>
    %c80 = arith.constant 80 : index
    %591 = memref.load %arg12[%c80] : memref<108xf32, #tpu.memory_space<smem>>
    %592 = vector.broadcast %591 : f32 to vector<24x128xf32>
    %593 = arith.mulf %586, %592 : vector<24x128xf32>
    %594 = arith.addf %585, %593 : vector<24x128xf32>
    %c1_i32_188 = arith.constant 1 : i32
    %595 = tpu.dynamic_rotate %352 by %c1_i32_188 dim 1 : vector<24x128xf32>, i32 -> vector<24x128xf32>
    %c1_i32_189 = arith.constant 1 : i32
    %596 = tpu.dynamic_rotate %595 by %c1_i32_189 dim 0 : vector<24x128xf32>, i32 -> vector<24x128xf32>
    %c27 = arith.constant 27 : index
    %597 = memref.load %arg12[%c27] : memref<108xf32, #tpu.memory_space<smem>>
    %598 = vector.broadcast %597 : f32 to vector<24x128xf32>
    %599 = arith.mulf %596, %598 : vector<24x128xf32>
    %600 = arith.addf %590, %599 : vector<24x128xf32>
    %c81 = arith.constant 81 : index
    %601 = memref.load %arg12[%c81] : memref<108xf32, #tpu.memory_space<smem>>
    %602 = vector.broadcast %601 : f32 to vector<24x128xf32>
    %603 = arith.mulf %596, %602 : vector<24x128xf32>
    %604 = arith.addf %594, %603 : vector<24x128xf32>
    %c30 = arith.constant 30 : index
    %605 = memref.load %arg12[%c30] : memref<108xf32, #tpu.memory_space<smem>>
    %606 = vector.broadcast %605 : f32 to vector<24x128xf32>
    %607 = arith.mulf %595, %606 : vector<24x128xf32>
    %608 = arith.addf %600, %607 : vector<24x128xf32>
    %c84 = arith.constant 84 : index
    %609 = memref.load %arg12[%c84] : memref<108xf32, #tpu.memory_space<smem>>
    %610 = vector.broadcast %609 : f32 to vector<24x128xf32>
    %611 = arith.mulf %595, %610 : vector<24x128xf32>
    %612 = arith.addf %604, %611 : vector<24x128xf32>
    %c23_i32_190 = arith.constant 23 : i32
    %613 = tpu.dynamic_rotate %595 by %c23_i32_190 dim 0 : vector<24x128xf32>, i32 -> vector<24x128xf32>
    %c33 = arith.constant 33 : index
    %614 = memref.load %arg12[%c33] : memref<108xf32, #tpu.memory_space<smem>>
    %615 = vector.broadcast %614 : f32 to vector<24x128xf32>
    %616 = arith.mulf %613, %615 : vector<24x128xf32>
    %617 = arith.addf %608, %616 : vector<24x128xf32>
    %c87 = arith.constant 87 : index
    %618 = memref.load %arg12[%c87] : memref<108xf32, #tpu.memory_space<smem>>
    %619 = vector.broadcast %618 : f32 to vector<24x128xf32>
    %620 = arith.mulf %613, %619 : vector<24x128xf32>
    %621 = arith.addf %612, %620 : vector<24x128xf32>
    %c1_i32_191 = arith.constant 1 : i32
    %622 = tpu.dynamic_rotate %352 by %c1_i32_191 dim 0 : vector<24x128xf32>, i32 -> vector<24x128xf32>
    %c28 = arith.constant 28 : index
    %623 = memref.load %arg12[%c28] : memref<108xf32, #tpu.memory_space<smem>>
    %624 = vector.broadcast %623 : f32 to vector<24x128xf32>
    %625 = arith.mulf %622, %624 : vector<24x128xf32>
    %626 = arith.addf %617, %625 : vector<24x128xf32>
    %c82 = arith.constant 82 : index
    %627 = memref.load %arg12[%c82] : memref<108xf32, #tpu.memory_space<smem>>
    %628 = vector.broadcast %627 : f32 to vector<24x128xf32>
    %629 = arith.mulf %622, %628 : vector<24x128xf32>
    %630 = arith.addf %621, %629 : vector<24x128xf32>
    %c31 = arith.constant 31 : index
    %631 = memref.load %arg12[%c31] : memref<108xf32, #tpu.memory_space<smem>>
    %632 = vector.broadcast %631 : f32 to vector<24x128xf32>
    %633 = arith.mulf %352, %632 : vector<24x128xf32>
    %634 = arith.addf %626, %633 : vector<24x128xf32>
    %c85 = arith.constant 85 : index
    %635 = memref.load %arg12[%c85] : memref<108xf32, #tpu.memory_space<smem>>
    %636 = vector.broadcast %635 : f32 to vector<24x128xf32>
    %637 = arith.mulf %352, %636 : vector<24x128xf32>
    %638 = arith.addf %630, %637 : vector<24x128xf32>
    %c23_i32_192 = arith.constant 23 : i32
    %639 = tpu.dynamic_rotate %352 by %c23_i32_192 dim 0 : vector<24x128xf32>, i32 -> vector<24x128xf32>
    %c34 = arith.constant 34 : index
    %640 = memref.load %arg12[%c34] : memref<108xf32, #tpu.memory_space<smem>>
    %641 = vector.broadcast %640 : f32 to vector<24x128xf32>
    %642 = arith.mulf %639, %641 : vector<24x128xf32>
    %643 = arith.addf %634, %642 : vector<24x128xf32>
    %c88 = arith.constant 88 : index
    %644 = memref.load %arg12[%c88] : memref<108xf32, #tpu.memory_space<smem>>
    %645 = vector.broadcast %644 : f32 to vector<24x128xf32>
    %646 = arith.mulf %639, %645 : vector<24x128xf32>
    %647 = arith.addf %638, %646 : vector<24x128xf32>
    %c127_i32_193 = arith.constant 127 : i32
    %648 = tpu.dynamic_rotate %352 by %c127_i32_193 dim 1 : vector<24x128xf32>, i32 -> vector<24x128xf32>
    %c1_i32_194 = arith.constant 1 : i32
    %649 = tpu.dynamic_rotate %648 by %c1_i32_194 dim 0 : vector<24x128xf32>, i32 -> vector<24x128xf32>
    %c29 = arith.constant 29 : index
    %650 = memref.load %arg12[%c29] : memref<108xf32, #tpu.memory_space<smem>>
    %651 = vector.broadcast %650 : f32 to vector<24x128xf32>
    %652 = arith.mulf %649, %651 : vector<24x128xf32>
    %653 = arith.addf %643, %652 : vector<24x128xf32>
    %c83 = arith.constant 83 : index
    %654 = memref.load %arg12[%c83] : memref<108xf32, #tpu.memory_space<smem>>
    %655 = vector.broadcast %654 : f32 to vector<24x128xf32>
    %656 = arith.mulf %649, %655 : vector<24x128xf32>
    %657 = arith.addf %647, %656 : vector<24x128xf32>
    %c32 = arith.constant 32 : index
    %658 = memref.load %arg12[%c32] : memref<108xf32, #tpu.memory_space<smem>>
    %659 = vector.broadcast %658 : f32 to vector<24x128xf32>
    %660 = arith.mulf %648, %659 : vector<24x128xf32>
    %661 = arith.addf %653, %660 : vector<24x128xf32>
    %c86 = arith.constant 86 : index
    %662 = memref.load %arg12[%c86] : memref<108xf32, #tpu.memory_space<smem>>
    %663 = vector.broadcast %662 : f32 to vector<24x128xf32>
    %664 = arith.mulf %648, %663 : vector<24x128xf32>
    %665 = arith.addf %657, %664 : vector<24x128xf32>
    %c23_i32_195 = arith.constant 23 : i32
    %666 = tpu.dynamic_rotate %648 by %c23_i32_195 dim 0 : vector<24x128xf32>, i32 -> vector<24x128xf32>
    %c35 = arith.constant 35 : index
    %667 = memref.load %arg12[%c35] : memref<108xf32, #tpu.memory_space<smem>>
    %668 = vector.broadcast %667 : f32 to vector<24x128xf32>
    %669 = arith.mulf %666, %668 : vector<24x128xf32>
    %670 = arith.addf %661, %669 : vector<24x128xf32>
    %c89 = arith.constant 89 : index
    %671 = memref.load %arg12[%c89] : memref<108xf32, #tpu.memory_space<smem>>
    %672 = vector.broadcast %671 : f32 to vector<24x128xf32>
    %673 = arith.mulf %666, %672 : vector<24x128xf32>
    %674 = arith.addf %665, %673 : vector<24x128xf32>
    %c1_i32_196 = arith.constant 1 : i32
    %675 = tpu.dynamic_rotate %354 by %c1_i32_196 dim 1 : vector<24x128xf32>, i32 -> vector<24x128xf32>
    %c1_i32_197 = arith.constant 1 : i32
    %676 = tpu.dynamic_rotate %675 by %c1_i32_197 dim 0 : vector<24x128xf32>, i32 -> vector<24x128xf32>
    %c36 = arith.constant 36 : index
    %677 = memref.load %arg12[%c36] : memref<108xf32, #tpu.memory_space<smem>>
    %678 = vector.broadcast %677 : f32 to vector<24x128xf32>
    %679 = arith.mulf %676, %678 : vector<24x128xf32>
    %680 = arith.addf %670, %679 : vector<24x128xf32>
    %c90 = arith.constant 90 : index
    %681 = memref.load %arg12[%c90] : memref<108xf32, #tpu.memory_space<smem>>
    %682 = vector.broadcast %681 : f32 to vector<24x128xf32>
    %683 = arith.mulf %676, %682 : vector<24x128xf32>
    %684 = arith.addf %674, %683 : vector<24x128xf32>
    %c39 = arith.constant 39 : index
    %685 = memref.load %arg12[%c39] : memref<108xf32, #tpu.memory_space<smem>>
    %686 = vector.broadcast %685 : f32 to vector<24x128xf32>
    %687 = arith.mulf %675, %686 : vector<24x128xf32>
    %688 = arith.addf %680, %687 : vector<24x128xf32>
    %c93 = arith.constant 93 : index
    %689 = memref.load %arg12[%c93] : memref<108xf32, #tpu.memory_space<smem>>
    %690 = vector.broadcast %689 : f32 to vector<24x128xf32>
    %691 = arith.mulf %675, %690 : vector<24x128xf32>
    %692 = arith.addf %684, %691 : vector<24x128xf32>
    %c23_i32_198 = arith.constant 23 : i32
    %693 = tpu.dynamic_rotate %675 by %c23_i32_198 dim 0 : vector<24x128xf32>, i32 -> vector<24x128xf32>
    %c42 = arith.constant 42 : index
    %694 = memref.load %arg12[%c42] : memref<108xf32, #tpu.memory_space<smem>>
    %695 = vector.broadcast %694 : f32 to vector<24x128xf32>
    %696 = arith.mulf %693, %695 : vector<24x128xf32>
    %697 = arith.addf %688, %696 : vector<24x128xf32>
    %c96 = arith.constant 96 : index
    %698 = memref.load %arg12[%c96] : memref<108xf32, #tpu.memory_space<smem>>
    %699 = vector.broadcast %698 : f32 to vector<24x128xf32>
    %700 = arith.mulf %693, %699 : vector<24x128xf32>
    %701 = arith.addf %692, %700 : vector<24x128xf32>
    %c1_i32_199 = arith.constant 1 : i32
    %702 = tpu.dynamic_rotate %354 by %c1_i32_199 dim 0 : vector<24x128xf32>, i32 -> vector<24x128xf32>
    %c37 = arith.constant 37 : index
    %703 = memref.load %arg12[%c37] : memref<108xf32, #tpu.memory_space<smem>>
    %704 = vector.broadcast %703 : f32 to vector<24x128xf32>
    %705 = arith.mulf %702, %704 : vector<24x128xf32>
    %706 = arith.addf %697, %705 : vector<24x128xf32>
    %c91 = arith.constant 91 : index
    %707 = memref.load %arg12[%c91] : memref<108xf32, #tpu.memory_space<smem>>
    %708 = vector.broadcast %707 : f32 to vector<24x128xf32>
    %709 = arith.mulf %702, %708 : vector<24x128xf32>
    %710 = arith.addf %701, %709 : vector<24x128xf32>
    %c40 = arith.constant 40 : index
    %711 = memref.load %arg12[%c40] : memref<108xf32, #tpu.memory_space<smem>>
    %712 = vector.broadcast %711 : f32 to vector<24x128xf32>
    %713 = arith.mulf %354, %712 : vector<24x128xf32>
    %714 = arith.addf %706, %713 : vector<24x128xf32>
    %c94 = arith.constant 94 : index
    %715 = memref.load %arg12[%c94] : memref<108xf32, #tpu.memory_space<smem>>
    %716 = vector.broadcast %715 : f32 to vector<24x128xf32>
    %717 = arith.mulf %354, %716 : vector<24x128xf32>
    %718 = arith.addf %710, %717 : vector<24x128xf32>
    %c23_i32_200 = arith.constant 23 : i32
    %719 = tpu.dynamic_rotate %354 by %c23_i32_200 dim 0 : vector<24x128xf32>, i32 -> vector<24x128xf32>
    %c43 = arith.constant 43 : index
    %720 = memref.load %arg12[%c43] : memref<108xf32, #tpu.memory_space<smem>>
    %721 = vector.broadcast %720 : f32 to vector<24x128xf32>
    %722 = arith.mulf %719, %721 : vector<24x128xf32>
    %723 = arith.addf %714, %722 : vector<24x128xf32>
    %c97 = arith.constant 97 : index
    %724 = memref.load %arg12[%c97] : memref<108xf32, #tpu.memory_space<smem>>
    %725 = vector.broadcast %724 : f32 to vector<24x128xf32>
    %726 = arith.mulf %719, %725 : vector<24x128xf32>
    %727 = arith.addf %718, %726 : vector<24x128xf32>
    %c127_i32_201 = arith.constant 127 : i32
    %728 = tpu.dynamic_rotate %354 by %c127_i32_201 dim 1 : vector<24x128xf32>, i32 -> vector<24x128xf32>
    %c1_i32_202 = arith.constant 1 : i32
    %729 = tpu.dynamic_rotate %728 by %c1_i32_202 dim 0 : vector<24x128xf32>, i32 -> vector<24x128xf32>
    %c38 = arith.constant 38 : index
    %730 = memref.load %arg12[%c38] : memref<108xf32, #tpu.memory_space<smem>>
    %731 = vector.broadcast %730 : f32 to vector<24x128xf32>
    %732 = arith.mulf %729, %731 : vector<24x128xf32>
    %733 = arith.addf %723, %732 : vector<24x128xf32>
    %c92 = arith.constant 92 : index
    %734 = memref.load %arg12[%c92] : memref<108xf32, #tpu.memory_space<smem>>
    %735 = vector.broadcast %734 : f32 to vector<24x128xf32>
    %736 = arith.mulf %729, %735 : vector<24x128xf32>
    %737 = arith.addf %727, %736 : vector<24x128xf32>
    %c41 = arith.constant 41 : index
    %738 = memref.load %arg12[%c41] : memref<108xf32, #tpu.memory_space<smem>>
    %739 = vector.broadcast %738 : f32 to vector<24x128xf32>
    %740 = arith.mulf %728, %739 : vector<24x128xf32>
    %741 = arith.addf %733, %740 : vector<24x128xf32>
    %c95 = arith.constant 95 : index
    %742 = memref.load %arg12[%c95] : memref<108xf32, #tpu.memory_space<smem>>
    %743 = vector.broadcast %742 : f32 to vector<24x128xf32>
    %744 = arith.mulf %728, %743 : vector<24x128xf32>
    %745 = arith.addf %737, %744 : vector<24x128xf32>
    %c23_i32_203 = arith.constant 23 : i32
    %746 = tpu.dynamic_rotate %728 by %c23_i32_203 dim 0 : vector<24x128xf32>, i32 -> vector<24x128xf32>
    %c44 = arith.constant 44 : index
    %747 = memref.load %arg12[%c44] : memref<108xf32, #tpu.memory_space<smem>>
    %748 = vector.broadcast %747 : f32 to vector<24x128xf32>
    %749 = arith.mulf %746, %748 : vector<24x128xf32>
    %750 = arith.addf %741, %749 : vector<24x128xf32>
    %c98 = arith.constant 98 : index
    %751 = memref.load %arg12[%c98] : memref<108xf32, #tpu.memory_space<smem>>
    %752 = vector.broadcast %751 : f32 to vector<24x128xf32>
    %753 = arith.mulf %746, %752 : vector<24x128xf32>
    %754 = arith.addf %745, %753 : vector<24x128xf32>
    %c1_i32_204 = arith.constant 1 : i32
    %755 = tpu.dynamic_rotate %356 by %c1_i32_204 dim 1 : vector<24x128xf32>, i32 -> vector<24x128xf32>
    %c1_i32_205 = arith.constant 1 : i32
    %756 = tpu.dynamic_rotate %755 by %c1_i32_205 dim 0 : vector<24x128xf32>, i32 -> vector<24x128xf32>
    %c45 = arith.constant 45 : index
    %757 = memref.load %arg12[%c45] : memref<108xf32, #tpu.memory_space<smem>>
    %758 = vector.broadcast %757 : f32 to vector<24x128xf32>
    %759 = arith.mulf %756, %758 : vector<24x128xf32>
    %760 = arith.addf %750, %759 : vector<24x128xf32>
    %c99 = arith.constant 99 : index
    %761 = memref.load %arg12[%c99] : memref<108xf32, #tpu.memory_space<smem>>
    %762 = vector.broadcast %761 : f32 to vector<24x128xf32>
    %763 = arith.mulf %756, %762 : vector<24x128xf32>
    %764 = arith.addf %754, %763 : vector<24x128xf32>
    %c48 = arith.constant 48 : index
    %765 = memref.load %arg12[%c48] : memref<108xf32, #tpu.memory_space<smem>>
    %766 = vector.broadcast %765 : f32 to vector<24x128xf32>
    %767 = arith.mulf %755, %766 : vector<24x128xf32>
    %768 = arith.addf %760, %767 : vector<24x128xf32>
    %c102 = arith.constant 102 : index
    %769 = memref.load %arg12[%c102] : memref<108xf32, #tpu.memory_space<smem>>
    %770 = vector.broadcast %769 : f32 to vector<24x128xf32>
    %771 = arith.mulf %755, %770 : vector<24x128xf32>
    %772 = arith.addf %764, %771 : vector<24x128xf32>
    %c23_i32_206 = arith.constant 23 : i32
    %773 = tpu.dynamic_rotate %755 by %c23_i32_206 dim 0 : vector<24x128xf32>, i32 -> vector<24x128xf32>
    %c51 = arith.constant 51 : index
    %774 = memref.load %arg12[%c51] : memref<108xf32, #tpu.memory_space<smem>>
    %775 = vector.broadcast %774 : f32 to vector<24x128xf32>
    %776 = arith.mulf %773, %775 : vector<24x128xf32>
    %777 = arith.addf %768, %776 : vector<24x128xf32>
    %c105 = arith.constant 105 : index
    %778 = memref.load %arg12[%c105] : memref<108xf32, #tpu.memory_space<smem>>
    %779 = vector.broadcast %778 : f32 to vector<24x128xf32>
    %780 = arith.mulf %773, %779 : vector<24x128xf32>
    %781 = arith.addf %772, %780 : vector<24x128xf32>
    %c1_i32_207 = arith.constant 1 : i32
    %782 = tpu.dynamic_rotate %356 by %c1_i32_207 dim 0 : vector<24x128xf32>, i32 -> vector<24x128xf32>
    %c46 = arith.constant 46 : index
    %783 = memref.load %arg12[%c46] : memref<108xf32, #tpu.memory_space<smem>>
    %784 = vector.broadcast %783 : f32 to vector<24x128xf32>
    %785 = arith.mulf %782, %784 : vector<24x128xf32>
    %786 = arith.addf %777, %785 : vector<24x128xf32>
    %c100 = arith.constant 100 : index
    %787 = memref.load %arg12[%c100] : memref<108xf32, #tpu.memory_space<smem>>
    %788 = vector.broadcast %787 : f32 to vector<24x128xf32>
    %789 = arith.mulf %782, %788 : vector<24x128xf32>
    %790 = arith.addf %781, %789 : vector<24x128xf32>
    %c49 = arith.constant 49 : index
    %791 = memref.load %arg12[%c49] : memref<108xf32, #tpu.memory_space<smem>>
    %792 = vector.broadcast %791 : f32 to vector<24x128xf32>
    %793 = arith.mulf %356, %792 : vector<24x128xf32>
    %794 = arith.addf %786, %793 : vector<24x128xf32>
    %c103 = arith.constant 103 : index
    %795 = memref.load %arg12[%c103] : memref<108xf32, #tpu.memory_space<smem>>
    %796 = vector.broadcast %795 : f32 to vector<24x128xf32>
    %797 = arith.mulf %356, %796 : vector<24x128xf32>
    %798 = arith.addf %790, %797 : vector<24x128xf32>
    %c23_i32_208 = arith.constant 23 : i32
    %799 = tpu.dynamic_rotate %356 by %c23_i32_208 dim 0 : vector<24x128xf32>, i32 -> vector<24x128xf32>
    %c52 = arith.constant 52 : index
    %800 = memref.load %arg12[%c52] : memref<108xf32, #tpu.memory_space<smem>>
    %801 = vector.broadcast %800 : f32 to vector<24x128xf32>
    %802 = arith.mulf %799, %801 : vector<24x128xf32>
    %803 = arith.addf %794, %802 : vector<24x128xf32>
    %c106 = arith.constant 106 : index
    %804 = memref.load %arg12[%c106] : memref<108xf32, #tpu.memory_space<smem>>
    %805 = vector.broadcast %804 : f32 to vector<24x128xf32>
    %806 = arith.mulf %799, %805 : vector<24x128xf32>
    %807 = arith.addf %798, %806 : vector<24x128xf32>
    %c127_i32_209 = arith.constant 127 : i32
    %808 = tpu.dynamic_rotate %356 by %c127_i32_209 dim 1 : vector<24x128xf32>, i32 -> vector<24x128xf32>
    %c1_i32_210 = arith.constant 1 : i32
    %809 = tpu.dynamic_rotate %808 by %c1_i32_210 dim 0 : vector<24x128xf32>, i32 -> vector<24x128xf32>
    %c47 = arith.constant 47 : index
    %810 = memref.load %arg12[%c47] : memref<108xf32, #tpu.memory_space<smem>>
    %811 = vector.broadcast %810 : f32 to vector<24x128xf32>
    %812 = arith.mulf %809, %811 : vector<24x128xf32>
    %813 = arith.addf %803, %812 : vector<24x128xf32>
    %c101 = arith.constant 101 : index
    %814 = memref.load %arg12[%c101] : memref<108xf32, #tpu.memory_space<smem>>
    %815 = vector.broadcast %814 : f32 to vector<24x128xf32>
    %816 = arith.mulf %809, %815 : vector<24x128xf32>
    %817 = arith.addf %807, %816 : vector<24x128xf32>
    %c50 = arith.constant 50 : index
    %818 = memref.load %arg12[%c50] : memref<108xf32, #tpu.memory_space<smem>>
    %819 = vector.broadcast %818 : f32 to vector<24x128xf32>
    %820 = arith.mulf %808, %819 : vector<24x128xf32>
    %821 = arith.addf %813, %820 : vector<24x128xf32>
    %c104 = arith.constant 104 : index
    %822 = memref.load %arg12[%c104] : memref<108xf32, #tpu.memory_space<smem>>
    %823 = vector.broadcast %822 : f32 to vector<24x128xf32>
    %824 = arith.mulf %808, %823 : vector<24x128xf32>
    %825 = arith.addf %817, %824 : vector<24x128xf32>
    %c23_i32_211 = arith.constant 23 : i32
    %826 = tpu.dynamic_rotate %808 by %c23_i32_211 dim 0 : vector<24x128xf32>, i32 -> vector<24x128xf32>
    %c53 = arith.constant 53 : index
    %827 = memref.load %arg12[%c53] : memref<108xf32, #tpu.memory_space<smem>>
    %828 = vector.broadcast %827 : f32 to vector<24x128xf32>
    %829 = arith.mulf %826, %828 : vector<24x128xf32>
    %830 = arith.addf %821, %829 : vector<24x128xf32>
    %c107 = arith.constant 107 : index
    %831 = memref.load %arg12[%c107] : memref<108xf32, #tpu.memory_space<smem>>
    %832 = vector.broadcast %831 : f32 to vector<24x128xf32>
    %833 = arith.mulf %826, %832 : vector<24x128xf32>
    %834 = arith.addf %825, %833 : vector<24x128xf32>
    %835 = vector.extract_strided_slice %116 {offsets = [8, 0], sizes = [8, 128], strides = [1, 1]} : vector<24x128xf32> to vector<8x128xf32>
    %836 = vector.extract_strided_slice %119 {offsets = [8, 0], sizes = [8, 128], strides = [1, 1]} : vector<24x128xf32> to vector<8x128xf32>
    %837 = vector.extract_strided_slice %125 {offsets = [8, 0], sizes = [8, 128], strides = [1, 1]} : vector<24x128xf32> to vector<8x128xf32>
    %838 = vector.extract_strided_slice %171 {offsets = [8, 0], sizes = [8, 128], strides = [1, 1]} : vector<24x128xf32> to vector<8x128xf32>
    %839 = vector.extract_strided_slice %214 {offsets = [8, 0], sizes = [8, 128], strides = [1, 1]} : vector<24x128xf32> to vector<8x128xf32>
    %840 = vector.extract_strided_slice %309 {offsets = [8, 0], sizes = [8, 128], strides = [1, 1]} : vector<24x128xf32> to vector<8x128xf32>
    %841 = vector.extract_strided_slice %830 {offsets = [8, 0], sizes = [8, 128], strides = [1, 1]} : vector<24x128xf32> to vector<8x128xf32>
    %c0_212 = arith.constant 0 : index
    %842 = memref.load %arg13[%c0_212] : memref<2xf32, #tpu.memory_space<smem>>
    %843 = vector.broadcast %842 : f32 to vector<8x128xf32>
    %844 = arith.addf %841, %843 : vector<8x128xf32>
    %cst_213 = arith.constant 0.000000e+00 : f32
    %cst_214 = arith.constant 1.000000e+00 : f32
    %845 = vector.broadcast %cst_213 : f32 to vector<8x128xf32>
    %846 = arith.maximumf %845, %844 : vector<8x128xf32>
    %847 = vector.broadcast %cst_214 : f32 to vector<8x128xf32>
    %848 = arith.minimumf %847, %846 : vector<8x128xf32>
    %849 = vector.extract_strided_slice %834 {offsets = [8, 0], sizes = [8, 128], strides = [1, 1]} : vector<24x128xf32> to vector<8x128xf32>
    %c1_215 = arith.constant 1 : index
    %850 = memref.load %arg13[%c1_215] : memref<2xf32, #tpu.memory_space<smem>>
    %851 = vector.broadcast %850 : f32 to vector<8x128xf32>
    %852 = arith.addf %849, %851 : vector<8x128xf32>
    %cst_216 = arith.constant 0.000000e+00 : f32
    %cst_217 = arith.constant 1.000000e+00 : f32
    %853 = vector.broadcast %cst_216 : f32 to vector<8x128xf32>
    %854 = arith.maximumf %853, %852 : vector<8x128xf32>
    %855 = vector.broadcast %cst_217 : f32 to vector<8x128xf32>
    %856 = arith.minimumf %855, %854 : vector<8x128xf32>
    %c0_218 = arith.constant 0 : index
    %c0_219 = arith.constant 0 : index
    %c0_220 = arith.constant 0 : index
    %c0_221 = arith.constant 0 : index
    %857 = vector.load %arg14[%c0_218, %c0_219, %c0_220, %c0_221] : memref<1x1x8x128xf32, #tpu.memory_space<vmem>>, vector<1x1x8x128xf32>
    %858 = vector.shape_cast %857 : vector<1x1x8x128xf32> to vector<8x128xf32>
    %859 = vector.shape_cast %835 : vector<8x128xf32> to vector<1x1x8x128xf32>
    tpu.vector_store %arg14[%c0_218, %c0_219, %c0_220, %c0_221], %859 {strides = array<i32>} : memref<1x1x8x128xf32, #tpu.memory_space<vmem>>, vector<1x1x8x128xf32>,
    %c0_222 = arith.constant 0 : index
    %c0_223 = arith.constant 0 : index
    %c0_224 = arith.constant 0 : index
    %c0_225 = arith.constant 0 : index
    %860 = vector.load %arg15[%c0_222, %c0_223, %c0_224, %c0_225] : memref<1x1x8x128xf32, #tpu.memory_space<vmem>>, vector<1x1x8x128xf32>
    %861 = vector.shape_cast %860 : vector<1x1x8x128xf32> to vector<8x128xf32>
    %862 = vector.shape_cast %836 : vector<8x128xf32> to vector<1x1x8x128xf32>
    tpu.vector_store %arg15[%c0_222, %c0_223, %c0_224, %c0_225], %862 {strides = array<i32>} : memref<1x1x8x128xf32, #tpu.memory_space<vmem>>, vector<1x1x8x128xf32>,
    %c0_226 = arith.constant 0 : index
    %c0_227 = arith.constant 0 : index
    %c0_228 = arith.constant 0 : index
    %c0_229 = arith.constant 0 : index
    %863 = vector.load %arg20[%c0_226, %c0_227, %c0_228, %c0_229] : memref<1x1x8x128xf32, #tpu.memory_space<vmem>>, vector<1x1x8x128xf32>
    %864 = vector.shape_cast %863 : vector<1x1x8x128xf32> to vector<8x128xf32>
    %865 = vector.shape_cast %840 : vector<8x128xf32> to vector<1x1x8x128xf32>
    tpu.vector_store %arg20[%c0_226, %c0_227, %c0_228, %c0_229], %865 {strides = array<i32>} : memref<1x1x8x128xf32, #tpu.memory_space<vmem>>, vector<1x1x8x128xf32>,
    %c0_230 = arith.constant 0 : index
    %c0_231 = arith.constant 0 : index
    %c0_232 = arith.constant 0 : index
    %c0_233 = arith.constant 0 : index
    %866 = vector.load %arg22[%c0_230, %c0_231, %c0_232, %c0_233] : memref<1x1x8x128xf32, #tpu.memory_space<vmem>>, vector<1x1x8x128xf32>
    %867 = vector.shape_cast %866 : vector<1x1x8x128xf32> to vector<8x128xf32>
    %868 = vector.shape_cast %848 : vector<8x128xf32> to vector<1x1x8x128xf32>
    tpu.vector_store %arg22[%c0_230, %c0_231, %c0_232, %c0_233], %868 {strides = array<i32>} : memref<1x1x8x128xf32, #tpu.memory_space<vmem>>, vector<1x1x8x128xf32>,
    %c0_234 = arith.constant 0 : index
    %c0_235 = arith.constant 0 : index
    %c0_236 = arith.constant 0 : index
    %c0_237 = arith.constant 0 : index
    %869 = vector.load %arg23[%c0_234, %c0_235, %c0_236, %c0_237] : memref<1x1x8x128xf32, #tpu.memory_space<vmem>>, vector<1x1x8x128xf32>
    %870 = vector.shape_cast %869 : vector<1x1x8x128xf32> to vector<8x128xf32>
    %871 = vector.shape_cast %856 : vector<8x128xf32> to vector<1x1x8x128xf32>
    tpu.vector_store %arg23[%c0_234, %c0_235, %c0_236, %c0_237], %871 {strides = array<i32>} : memref<1x1x8x128xf32, #tpu.memory_space<vmem>>, vector<1x1x8x128xf32>,
    %cst_238 = arith.constant 0.000000e+00 : f32
    %872 = vector.broadcast %cst_238 : f32 to vector<8x128xf32>
    %c0_239 = arith.constant 0 : index
    %c0_240 = arith.constant 0 : index
    %c0_241 = arith.constant 0 : index
    %c0_242 = arith.constant 0 : index
    %873 = vector.load %arg16[%c0_239, %c0_240, %c0_241, %c0_242] : memref<1x5x8x128xf32, #tpu.memory_space<vmem>>, vector<1x1x8x128xf32>
    %874 = vector.shape_cast %873 : vector<1x1x8x128xf32> to vector<8x128xf32>
    %875 = vector.shape_cast %872 : vector<8x128xf32> to vector<1x1x8x128xf32>
    tpu.vector_store %arg16[%c0_239, %c0_240, %c0_241, %c0_242], %875 {strides = array<i32>} : memref<1x5x8x128xf32, #tpu.memory_space<vmem>>, vector<1x1x8x128xf32>,
    %cst_243 = arith.constant 1.000000e+00 : f32
    %876 = vector.broadcast %cst_243 : f32 to vector<8x128xf32>
    %877 = arith.mulf %876, %837 : vector<8x128xf32>
    %c0_244 = arith.constant 0 : index
    %c1_245 = arith.constant 1 : index
    %c0_246 = arith.constant 0 : index
    %c0_247 = arith.constant 0 : index
    %878 = vector.load %arg16[%c0_244, %c1_245, %c0_246, %c0_247] : memref<1x5x8x128xf32, #tpu.memory_space<vmem>>, vector<1x1x8x128xf32>
    %879 = vector.shape_cast %878 : vector<1x1x8x128xf32> to vector<8x128xf32>
    %880 = vector.shape_cast %877 : vector<8x128xf32> to vector<1x1x8x128xf32>
    tpu.vector_store %arg16[%c0_244, %c1_245, %c0_246, %c0_247], %880 {strides = array<i32>} : memref<1x5x8x128xf32, #tpu.memory_space<vmem>>, vector<1x1x8x128xf32>,
    %cst_248 = arith.constant 2.000000e+00 : f32
    %881 = vector.broadcast %cst_248 : f32 to vector<8x128xf32>
    %882 = arith.mulf %881, %837 : vector<8x128xf32>
    %c0_249 = arith.constant 0 : index
    %c2_250 = arith.constant 2 : index
    %c0_251 = arith.constant 0 : index
    %c0_252 = arith.constant 0 : index
    %883 = vector.load %arg16[%c0_249, %c2_250, %c0_251, %c0_252] : memref<1x5x8x128xf32, #tpu.memory_space<vmem>>, vector<1x1x8x128xf32>
    %884 = vector.shape_cast %883 : vector<1x1x8x128xf32> to vector<8x128xf32>
    %885 = vector.shape_cast %882 : vector<8x128xf32> to vector<1x1x8x128xf32>
    tpu.vector_store %arg16[%c0_249, %c2_250, %c0_251, %c0_252], %885 {strides = array<i32>} : memref<1x5x8x128xf32, #tpu.memory_space<vmem>>, vector<1x1x8x128xf32>,
    %cst_253 = arith.constant 3.000000e+00 : f32
    %886 = vector.broadcast %cst_253 : f32 to vector<8x128xf32>
    %887 = arith.mulf %886, %837 : vector<8x128xf32>
    %c0_254 = arith.constant 0 : index
    %c3_255 = arith.constant 3 : index
    %c0_256 = arith.constant 0 : index
    %c0_257 = arith.constant 0 : index
    %888 = vector.load %arg16[%c0_254, %c3_255, %c0_256, %c0_257] : memref<1x5x8x128xf32, #tpu.memory_space<vmem>>, vector<1x1x8x128xf32>
    %889 = vector.shape_cast %888 : vector<1x1x8x128xf32> to vector<8x128xf32>
    %890 = vector.shape_cast %887 : vector<8x128xf32> to vector<1x1x8x128xf32>
    tpu.vector_store %arg16[%c0_254, %c3_255, %c0_256, %c0_257], %890 {strides = array<i32>} : memref<1x5x8x128xf32, #tpu.memory_space<vmem>>, vector<1x1x8x128xf32>,
    %cst_258 = arith.constant 4.000000e+00 : f32
    %891 = vector.broadcast %cst_258 : f32 to vector<8x128xf32>
    %892 = arith.mulf %891, %837 : vector<8x128xf32>
    %c0_259 = arith.constant 0 : index
    %c4_260 = arith.constant 4 : index
    %c0_261 = arith.constant 0 : index
    %c0_262 = arith.constant 0 : index
    %893 = vector.load %arg16[%c0_259, %c4_260, %c0_261, %c0_262] : memref<1x5x8x128xf32, #tpu.memory_space<vmem>>, vector<1x1x8x128xf32>
    %894 = vector.shape_cast %893 : vector<1x1x8x128xf32> to vector<8x128xf32>
    %895 = vector.shape_cast %892 : vector<8x128xf32> to vector<1x1x8x128xf32>
    tpu.vector_store %arg16[%c0_259, %c4_260, %c0_261, %c0_262], %895 {strides = array<i32>} : memref<1x5x8x128xf32, #tpu.memory_space<vmem>>, vector<1x1x8x128xf32>,
    %cst_263 = arith.constant 0.000000e+00 : f32
    %896 = vector.broadcast %cst_263 : f32 to vector<8x128xf32>
    %897 = arith.mulf %896, %839 : vector<8x128xf32>
    %898 = arith.addf %838, %897 : vector<8x128xf32>
    %c0_264 = arith.constant 0 : index
    %c0_265 = arith.constant 0 : index
    %c0_266 = arith.constant 0 : index
    %c0_267 = arith.constant 0 : index
    %899 = vector.load %arg18[%c0_264, %c0_265, %c0_266, %c0_267] : memref<1x5x8x128xf32, #tpu.memory_space<vmem>>, vector<1x1x8x128xf32>
    %900 = vector.shape_cast %899 : vector<1x1x8x128xf32> to vector<8x128xf32>
    %901 = vector.shape_cast %898 : vector<8x128xf32> to vector<1x1x8x128xf32>
    tpu.vector_store %arg18[%c0_264, %c0_265, %c0_266, %c0_267], %901 {strides = array<i32>} : memref<1x5x8x128xf32, #tpu.memory_space<vmem>>, vector<1x1x8x128xf32>,
    %902 = arith.addf %836, %898 : vector<8x128xf32>
    %c0_268 = arith.constant 0 : index
    %c0_269 = arith.constant 0 : index
    %c0_270 = arith.constant 0 : index
    %c0_271 = arith.constant 0 : index
    %903 = vector.load %arg19[%c0_268, %c0_269, %c0_270, %c0_271] : memref<1x5x8x128xf32, #tpu.memory_space<vmem>>, vector<1x1x8x128xf32>
    %904 = vector.shape_cast %903 : vector<1x1x8x128xf32> to vector<8x128xf32>
    %905 = vector.shape_cast %902 : vector<8x128xf32> to vector<1x1x8x128xf32>
    tpu.vector_store %arg19[%c0_268, %c0_269, %c0_270, %c0_271], %905 {strides = array<i32>} : memref<1x5x8x128xf32, #tpu.memory_space<vmem>>, vector<1x1x8x128xf32>,
    %cst_272 = arith.constant 1.000000e+00 : f32
    %906 = vector.broadcast %cst_272 : f32 to vector<8x128xf32>
    %907 = arith.mulf %906, %839 : vector<8x128xf32>
    %908 = arith.addf %838, %907 : vector<8x128xf32>
    %c0_273 = arith.constant 0 : index
    %c1_274 = arith.constant 1 : index
    %c0_275 = arith.constant 0 : index
    %c0_276 = arith.constant 0 : index
    %909 = vector.load %arg18[%c0_273, %c1_274, %c0_275, %c0_276] : memref<1x5x8x128xf32, #tpu.memory_space<vmem>>, vector<1x1x8x128xf32>
    %910 = vector.shape_cast %909 : vector<1x1x8x128xf32> to vector<8x128xf32>
    %911 = vector.shape_cast %908 : vector<8x128xf32> to vector<1x1x8x128xf32>
    tpu.vector_store %arg18[%c0_273, %c1_274, %c0_275, %c0_276], %911 {strides = array<i32>} : memref<1x5x8x128xf32, #tpu.memory_space<vmem>>, vector<1x1x8x128xf32>,
    %912 = arith.addf %836, %908 : vector<8x128xf32>
    %c0_277 = arith.constant 0 : index
    %c1_278 = arith.constant 1 : index
    %c0_279 = arith.constant 0 : index
    %c0_280 = arith.constant 0 : index
    %913 = vector.load %arg19[%c0_277, %c1_278, %c0_279, %c0_280] : memref<1x5x8x128xf32, #tpu.memory_space<vmem>>, vector<1x1x8x128xf32>
    %914 = vector.shape_cast %913 : vector<1x1x8x128xf32> to vector<8x128xf32>
    %915 = vector.shape_cast %912 : vector<8x128xf32> to vector<1x1x8x128xf32>
    tpu.vector_store %arg19[%c0_277, %c1_278, %c0_279, %c0_280], %915 {strides = array<i32>} : memref<1x5x8x128xf32, #tpu.memory_space<vmem>>, vector<1x1x8x128xf32>,
    %cst_281 = arith.constant 2.000000e+00 : f32
    %916 = vector.broadcast %cst_281 : f32 to vector<8x128xf32>
    %917 = arith.mulf %916, %839 : vector<8x128xf32>
    %918 = arith.addf %838, %917 : vector<8x128xf32>
    %c0_282 = arith.constant 0 : index
    %c2_283 = arith.constant 2 : index
    %c0_284 = arith.constant 0 : index
    %c0_285 = arith.constant 0 : index
    %919 = vector.load %arg18[%c0_282, %c2_283, %c0_284, %c0_285] : memref<1x5x8x128xf32, #tpu.memory_space<vmem>>, vector<1x1x8x128xf32>
    %920 = vector.shape_cast %919 : vector<1x1x8x128xf32> to vector<8x128xf32>
    %921 = vector.shape_cast %918 : vector<8x128xf32> to vector<1x1x8x128xf32>
    tpu.vector_store %arg18[%c0_282, %c2_283, %c0_284, %c0_285], %921 {strides = array<i32>} : memref<1x5x8x128xf32, #tpu.memory_space<vmem>>, vector<1x1x8x128xf32>,
    %922 = arith.addf %836, %918 : vector<8x128xf32>
    %c0_286 = arith.constant 0 : index
    %c2_287 = arith.constant 2 : index
    %c0_288 = arith.constant 0 : index
    %c0_289 = arith.constant 0 : index
    %923 = vector.load %arg19[%c0_286, %c2_287, %c0_288, %c0_289] : memref<1x5x8x128xf32, #tpu.memory_space<vmem>>, vector<1x1x8x128xf32>
    %924 = vector.shape_cast %923 : vector<1x1x8x128xf32> to vector<8x128xf32>
    %925 = vector.shape_cast %922 : vector<8x128xf32> to vector<1x1x8x128xf32>
    tpu.vector_store %arg19[%c0_286, %c2_287, %c0_288, %c0_289], %925 {strides = array<i32>} : memref<1x5x8x128xf32, #tpu.memory_space<vmem>>, vector<1x1x8x128xf32>,
    %cst_290 = arith.constant 3.000000e+00 : f32
    %926 = vector.broadcast %cst_290 : f32 to vector<8x128xf32>
    %927 = arith.mulf %926, %839 : vector<8x128xf32>
    %928 = arith.addf %838, %927 : vector<8x128xf32>
    %c0_291 = arith.constant 0 : index
    %c3_292 = arith.constant 3 : index
    %c0_293 = arith.constant 0 : index
    %c0_294 = arith.constant 0 : index
    %929 = vector.load %arg18[%c0_291, %c3_292, %c0_293, %c0_294] : memref<1x5x8x128xf32, #tpu.memory_space<vmem>>, vector<1x1x8x128xf32>
    %930 = vector.shape_cast %929 : vector<1x1x8x128xf32> to vector<8x128xf32>
    %931 = vector.shape_cast %928 : vector<8x128xf32> to vector<1x1x8x128xf32>
    tpu.vector_store %arg18[%c0_291, %c3_292, %c0_293, %c0_294], %931 {strides = array<i32>} : memref<1x5x8x128xf32, #tpu.memory_space<vmem>>, vector<1x1x8x128xf32>,
    %932 = arith.addf %836, %928 : vector<8x128xf32>
    %c0_295 = arith.constant 0 : index
    %c3_296 = arith.constant 3 : index
    %c0_297 = arith.constant 0 : index
    %c0_298 = arith.constant 0 : index
    %933 = vector.load %arg19[%c0_295, %c3_296, %c0_297, %c0_298] : memref<1x5x8x128xf32, #tpu.memory_space<vmem>>, vector<1x1x8x128xf32>
    %934 = vector.shape_cast %933 : vector<1x1x8x128xf32> to vector<8x128xf32>
    %935 = vector.shape_cast %932 : vector<8x128xf32> to vector<1x1x8x128xf32>
    tpu.vector_store %arg19[%c0_295, %c3_296, %c0_297, %c0_298], %935 {strides = array<i32>} : memref<1x5x8x128xf32, #tpu.memory_space<vmem>>, vector<1x1x8x128xf32>,
    %cst_299 = arith.constant 4.000000e+00 : f32
    %936 = vector.broadcast %cst_299 : f32 to vector<8x128xf32>
    %937 = arith.mulf %936, %839 : vector<8x128xf32>
    %938 = arith.addf %838, %937 : vector<8x128xf32>
    %c0_300 = arith.constant 0 : index
    %c4_301 = arith.constant 4 : index
    %c0_302 = arith.constant 0 : index
    %c0_303 = arith.constant 0 : index
    %939 = vector.load %arg18[%c0_300, %c4_301, %c0_302, %c0_303] : memref<1x5x8x128xf32, #tpu.memory_space<vmem>>, vector<1x1x8x128xf32>
    %940 = vector.shape_cast %939 : vector<1x1x8x128xf32> to vector<8x128xf32>
    %941 = vector.shape_cast %938 : vector<8x128xf32> to vector<1x1x8x128xf32>
    tpu.vector_store %arg18[%c0_300, %c4_301, %c0_302, %c0_303], %941 {strides = array<i32>} : memref<1x5x8x128xf32, #tpu.memory_space<vmem>>, vector<1x1x8x128xf32>,
    %942 = arith.addf %836, %938 : vector<8x128xf32>
    %c0_304 = arith.constant 0 : index
    %c4_305 = arith.constant 4 : index
    %c0_306 = arith.constant 0 : index
    %c0_307 = arith.constant 0 : index
    %943 = vector.load %arg19[%c0_304, %c4_305, %c0_306, %c0_307] : memref<1x5x8x128xf32, #tpu.memory_space<vmem>>, vector<1x1x8x128xf32>
    %944 = vector.shape_cast %943 : vector<1x1x8x128xf32> to vector<8x128xf32>
    %945 = vector.shape_cast %942 : vector<8x128xf32> to vector<1x1x8x128xf32>
    tpu.vector_store %arg19[%c0_304, %c4_305, %c0_306, %c0_307], %945 {strides = array<i32>} : memref<1x5x8x128xf32, #tpu.memory_space<vmem>>, vector<1x1x8x128xf32>,
    %cst_308 = arith.constant 5.000000e-01 : f32
    %946 = vector.broadcast %cst_308 : f32 to vector<8x128xf32>
    %947 = arith.subf %848, %946 : vector<8x128xf32>
    %cst_309 = arith.constant 5.000000e-01 : f32
    %948 = vector.broadcast %cst_309 : f32 to vector<8x128xf32>
    %949 = arith.subf %856, %948 : vector<8x128xf32>
    %cst_310 = arith.constant 1.403000e+00 : f32
    %950 = vector.broadcast %cst_310 : f32 to vector<8x128xf32>
    %951 = arith.mulf %950, %949 : vector<8x128xf32>
    %952 = arith.addf %840, %951 : vector<8x128xf32>
    %cst_311 = arith.constant 0.000000e+00 : f32
    %cst_312 = arith.constant 1.000000e+00 : f32
    %953 = vector.broadcast %cst_311 : f32 to vector<8x128xf32>
    %954 = arith.maximumf %953, %952 : vector<8x128xf32>
    %955 = vector.broadcast %cst_312 : f32 to vector<8x128xf32>
    %956 = arith.minimumf %955, %954 : vector<8x128xf32>
    %cst_313 = arith.constant 7.140000e-01 : f32
    %957 = vector.broadcast %cst_313 : f32 to vector<8x128xf32>
    %958 = arith.mulf %957, %949 : vector<8x128xf32>
    %959 = arith.subf %840, %958 : vector<8x128xf32>
    %cst_314 = arith.constant 3.440000e-01 : f32
    %960 = vector.broadcast %cst_314 : f32 to vector<8x128xf32>
    %961 = arith.mulf %960, %947 : vector<8x128xf32>
    %962 = arith.subf %959, %961 : vector<8x128xf32>
    %cst_315 = arith.constant 0.000000e+00 : f32
    %cst_316 = arith.constant 1.000000e+00 : f32
    %963 = vector.broadcast %cst_315 : f32 to vector<8x128xf32>
    %964 = arith.maximumf %963, %962 : vector<8x128xf32>
    %965 = vector.broadcast %cst_316 : f32 to vector<8x128xf32>
    %966 = arith.minimumf %965, %964 : vector<8x128xf32>
    %cst_317 = arith.constant 1.773000e+00 : f32
    %967 = vector.broadcast %cst_317 : f32 to vector<8x128xf32>
    %968 = arith.mulf %967, %947 : vector<8x128xf32>
    %969 = arith.addf %840, %968 : vector<8x128xf32>
    %cst_318 = arith.constant 0.000000e+00 : f32
    %cst_319 = arith.constant 1.000000e+00 : f32
    %970 = vector.broadcast %cst_318 : f32 to vector<8x128xf32>
    %971 = arith.maximumf %970, %969 : vector<8x128xf32>
    %972 = vector.broadcast %cst_319 : f32 to vector<8x128xf32>
    %973 = arith.minimumf %972, %971 : vector<8x128xf32>
    %c0_320 = arith.constant 0 : index
    %c0_321 = arith.constant 0 : index
    %c0_322 = arith.constant 0 : index
    %c0_323 = arith.constant 0 : index
    %974 = vector.load %arg21[%c0_320, %c0_321, %c0_322, %c0_323] : memref<1x3x8x128xf32, #tpu.memory_space<vmem>>, vector<1x1x8x128xf32>
    %975 = vector.shape_cast %974 : vector<1x1x8x128xf32> to vector<8x128xf32>
    %976 = vector.shape_cast %956 : vector<8x128xf32> to vector<1x1x8x128xf32>
    tpu.vector_store %arg21[%c0_320, %c0_321, %c0_322, %c0_323], %976 {strides = array<i32>} : memref<1x3x8x128xf32, #tpu.memory_space<vmem>>, vector<1x1x8x128xf32>,
    %c0_324 = arith.constant 0 : index
    %c1_325 = arith.constant 1 : index
    %c0_326 = arith.constant 0 : index
    %c0_327 = arith.constant 0 : index
    %977 = vector.load %arg21[%c0_324, %c1_325, %c0_326, %c0_327] : memref<1x3x8x128xf32, #tpu.memory_space<vmem>>, vector<1x1x8x128xf32>
    %978 = vector.shape_cast %977 : vector<1x1x8x128xf32> to vector<8x128xf32>
    %979 = vector.shape_cast %966 : vector<8x128xf32> to vector<1x1x8x128xf32>
    tpu.vector_store %arg21[%c0_324, %c1_325, %c0_326, %c0_327], %979 {strides = array<i32>} : memref<1x3x8x128xf32, #tpu.memory_space<vmem>>, vector<1x1x8x128xf32>,
    %c0_328 = arith.constant 0 : index
    %c2_329 = arith.constant 2 : index
    %c0_330 = arith.constant 0 : index
    %c0_331 = arith.constant 0 : index
    %980 = vector.load %arg21[%c0_328, %c2_329, %c0_330, %c0_331] : memref<1x3x8x128xf32, #tpu.memory_space<vmem>>, vector<1x1x8x128xf32>
    %981 = vector.shape_cast %980 : vector<1x1x8x128xf32> to vector<8x128xf32>
    %982 = vector.shape_cast %973 : vector<8x128xf32> to vector<1x1x8x128xf32>
    tpu.vector_store %arg21[%c0_328, %c2_329, %c0_330, %c0_331], %982 {strides = array<i32>} : memref<1x3x8x128xf32, #tpu.memory_space<vmem>>, vector<1x1x8x128xf32>,
    %c0_332 = arith.constant 0 : index
    %c0_333 = arith.constant 0 : index
    %c0_334 = arith.constant 0 : index
    %c0_335 = arith.constant 0 : index
    %983 = vector.load %arg2[%c0_332, %c0_333, %c0_334, %c0_335] : memref<1x3x8x128xf32, #tpu.memory_space<vmem>>, vector<1x1x8x128xf32>
    %984 = vector.shape_cast %983 : vector<1x1x8x128xf32> to vector<8x128xf32>
    %c0_336 = arith.constant 0 : index
    %c1_337 = arith.constant 1 : index
    %c0_338 = arith.constant 0 : index
    %c0_339 = arith.constant 0 : index
    %985 = vector.load %arg2[%c0_336, %c1_337, %c0_338, %c0_339] : memref<1x3x8x128xf32, #tpu.memory_space<vmem>>, vector<1x1x8x128xf32>
    %986 = vector.shape_cast %985 : vector<1x1x8x128xf32> to vector<8x128xf32>
    %c0_340 = arith.constant 0 : index
    %c2_341 = arith.constant 2 : index
    %c0_342 = arith.constant 0 : index
    %c0_343 = arith.constant 0 : index
    %987 = vector.load %arg2[%c0_340, %c2_341, %c0_342, %c0_343] : memref<1x3x8x128xf32, #tpu.memory_space<vmem>>, vector<1x1x8x128xf32>
    %988 = vector.shape_cast %987 : vector<1x1x8x128xf32> to vector<8x128xf32>
    %cst_344 = arith.constant 9.99999997E-7 : f32
    %989 = vector.broadcast %cst_344 : f32 to vector<8x128xf32>
    %990 = arith.maximumf %835, %989 : vector<8x128xf32>
    %cst_345 = arith.constant 1.000000e+00 : f32
    %991 = vector.broadcast %cst_345 : f32 to vector<8x128xf32>
    %992 = arith.divf %991, %990 : vector<8x128xf32>
    %993 = arith.mulf %984, %992 : vector<8x128xf32>
    %994 = arith.mulf %986, %992 : vector<8x128xf32>
    %995 = arith.mulf %988, %992 : vector<8x128xf32>
    %cst_346 = arith.constant 2.990000e-01 : f32
    %996 = vector.broadcast %cst_346 : f32 to vector<8x128xf32>
    %997 = arith.mulf %996, %993 : vector<8x128xf32>
    %cst_347 = arith.constant 5.870000e-01 : f32
    %998 = vector.broadcast %cst_347 : f32 to vector<8x128xf32>
    %999 = arith.mulf %998, %994 : vector<8x128xf32>
    %1000 = arith.addf %997, %999 : vector<8x128xf32>
    %cst_348 = arith.constant 1.140000e-01 : f32
    %1001 = vector.broadcast %cst_348 : f32 to vector<8x128xf32>
    %1002 = arith.mulf %1001, %995 : vector<8x128xf32>
    %1003 = arith.addf %1000, %1002 : vector<8x128xf32>
    %1004 = arith.subf %995, %1003 : vector<8x128xf32>
    %cst_349 = arith.constant 5.640000e-01 : f32
    %1005 = vector.broadcast %cst_349 : f32 to vector<8x128xf32>
    %1006 = arith.mulf %1004, %1005 : vector<8x128xf32>
    %cst_350 = arith.constant 5.000000e-01 : f32
    %1007 = vector.broadcast %cst_350 : f32 to vector<8x128xf32>
    %1008 = arith.addf %1006, %1007 : vector<8x128xf32>
    %1009 = arith.subf %993, %1003 : vector<8x128xf32>
    %cst_351 = arith.constant 0.712999999 : f32
    %1010 = vector.broadcast %cst_351 : f32 to vector<8x128xf32>
    %1011 = arith.mulf %1009, %1010 : vector<8x128xf32>
    %cst_352 = arith.constant 5.000000e-01 : f32
    %1012 = vector.broadcast %cst_352 : f32 to vector<8x128xf32>
    %1013 = arith.addf %1011, %1012 : vector<8x128xf32>
    %c0_353 = arith.constant 0 : index
    %c0_354 = arith.constant 0 : index
    %c0_355 = arith.constant 0 : index
    %c0_356 = arith.constant 0 : index
    %1014 = vector.load %arg24[%c0_353, %c0_354, %c0_355, %c0_356] : memref<1x1x8x128xf32, #tpu.memory_space<vmem>>, vector<1x1x8x128xf32>
    %1015 = vector.shape_cast %1014 : vector<1x1x8x128xf32> to vector<8x128xf32>
    %1016 = vector.shape_cast %1008 : vector<8x128xf32> to vector<1x1x8x128xf32>
    tpu.vector_store %arg24[%c0_353, %c0_354, %c0_355, %c0_356], %1016 {strides = array<i32>} : memref<1x1x8x128xf32, #tpu.memory_space<vmem>>, vector<1x1x8x128xf32>,
    %c0_357 = arith.constant 0 : index
    %c0_358 = arith.constant 0 : index
    %c0_359 = arith.constant 0 : index
    %c0_360 = arith.constant 0 : index
    %1017 = vector.load %arg25[%c0_357, %c0_358, %c0_359, %c0_360] : memref<1x1x8x128xf32, #tpu.memory_space<vmem>>, vector<1x1x8x128xf32>
    %1018 = vector.shape_cast %1017 : vector<1x1x8x128xf32> to vector<8x128xf32>
    %1019 = vector.shape_cast %1013 : vector<8x128xf32> to vector<1x1x8x128xf32>
    tpu.vector_store %arg25[%c0_357, %c0_358, %c0_359, %c0_360], %1019 {strides = array<i32>} : memref<1x1x8x128xf32, #tpu.memory_space<vmem>>, vector<1x1x8x128xf32>,
    %c0_361 = arith.constant 0 : index
    %c0_362 = arith.constant 0 : index
    %c0_363 = arith.constant 0 : index
    %c0_364 = arith.constant 0 : index
    %1020 = vector.load %arg5[%c0_361, %c0_362, %c0_363, %c0_364] : memref<1x3x8x128xf32, #tpu.memory_space<vmem>>, vector<1x1x8x128xf32>
    %1021 = vector.shape_cast %1020 : vector<1x1x8x128xf32> to vector<8x128xf32>
    %c0_365 = arith.constant 0 : index
    %c1_366 = arith.constant 1 : index
    %c0_367 = arith.constant 0 : index
    %c0_368 = arith.constant 0 : index
    %1022 = vector.load %arg5[%c0_365, %c1_366, %c0_367, %c0_368] : memref<1x3x8x128xf32, #tpu.memory_space<vmem>>, vector<1x1x8x128xf32>
    %1023 = vector.shape_cast %1022 : vector<1x1x8x128xf32> to vector<8x128xf32>
    %c0_369 = arith.constant 0 : index
    %c2_370 = arith.constant 2 : index
    %c0_371 = arith.constant 0 : index
    %c0_372 = arith.constant 0 : index
    %1024 = vector.load %arg5[%c0_369, %c2_370, %c0_371, %c0_372] : memref<1x3x8x128xf32, #tpu.memory_space<vmem>>, vector<1x1x8x128xf32>
    %1025 = vector.shape_cast %1024 : vector<1x1x8x128xf32> to vector<8x128xf32>
    %cst_373 = arith.constant 2.990000e-01 : f32
    %1026 = vector.broadcast %cst_373 : f32 to vector<8x128xf32>
    %1027 = arith.mulf %1026, %1021 : vector<8x128xf32>
    %cst_374 = arith.constant 5.870000e-01 : f32
    %1028 = vector.broadcast %cst_374 : f32 to vector<8x128xf32>
    %1029 = arith.mulf %1028, %1023 : vector<8x128xf32>
    %1030 = arith.addf %1027, %1029 : vector<8x128xf32>
    %cst_375 = arith.constant 1.140000e-01 : f32
    %1031 = vector.broadcast %cst_375 : f32 to vector<8x128xf32>
    %1032 = arith.mulf %1031, %1025 : vector<8x128xf32>
    %1033 = arith.addf %1030, %1032 : vector<8x128xf32>
    %1034 = arith.subf %1033, %836 : vector<8x128xf32>
    %c0_376 = arith.constant 0 : index
    %c0_377 = arith.constant 0 : index
    %c0_378 = arith.constant 0 : index
    %c0_379 = arith.constant 0 : index
    %1035 = vector.load %arg17[%c0_376, %c0_377, %c0_378, %c0_379] : memref<1x1x8x128xf32, #tpu.memory_space<vmem>>, vector<1x1x8x128xf32>
    %1036 = vector.shape_cast %1035 : vector<1x1x8x128xf32> to vector<8x128xf32>
    %1037 = vector.shape_cast %1034 : vector<8x128xf32> to vector<1x1x8x128xf32>
    tpu.vector_store %arg17[%c0_376, %c0_377, %c0_378, %c0_379], %1037 {strides = array<i32>} : memref<1x1x8x128xf32, #tpu.memory_space<vmem>>, vector<1x1x8x128xf32>,
    %1038 = vector.extract_strided_slice %48 {offsets = [8, 0], sizes = [8, 128], strides = [1, 1]} : vector<24x128xi1> to vector<8x128xi1>
    %c0_380 = arith.constant 0 : index
    %c0_381 = arith.constant 0 : index
    %c0_382 = arith.constant 0 : index
    %c0_383 = arith.constant 0 : index
    %1039 = vector.load %arg5[%c0_380, %c0_381, %c0_382, %c0_383] : memref<1x3x8x128xf32, #tpu.memory_space<vmem>>, vector<1x1x8x128xf32>
    %1040 = vector.shape_cast %1039 : vector<1x1x8x128xf32> to vector<8x128xf32>
    %1041 = arith.subf %956, %1040 : vector<8x128xf32>
    %cst_384 = arith.constant 0.000000e+00 : f32
    %1042 = vector.broadcast %cst_384 : f32 to vector<8x128xf32>
    %1043 = arith.select %1038, %1041, %1042 : vector<8x128xi1>, vector<8x128xf32>
    %c0_385 = arith.constant 0 : index
    %c1_386 = arith.constant 1 : index
    %c0_387 = arith.constant 0 : index
    %c0_388 = arith.constant 0 : index
    %1044 = vector.load %arg5[%c0_385, %c1_386, %c0_387, %c0_388] : memref<1x3x8x128xf32, #tpu.memory_space<vmem>>, vector<1x1x8x128xf32>
    %1045 = vector.shape_cast %1044 : vector<1x1x8x128xf32> to vector<8x128xf32>
    %1046 = arith.subf %966, %1045 : vector<8x128xf32>
    %cst_389 = arith.constant 0.000000e+00 : f32
    %1047 = vector.broadcast %cst_389 : f32 to vector<8x128xf32>
    %1048 = arith.select %1038, %1046, %1047 : vector<8x128xi1>, vector<8x128xf32>
    %c0_390 = arith.constant 0 : index
    %c2_391 = arith.constant 2 : index
    %c0_392 = arith.constant 0 : index
    %c0_393 = arith.constant 0 : index
    %1049 = vector.load %arg5[%c0_390, %c2_391, %c0_392, %c0_393] : memref<1x3x8x128xf32, #tpu.memory_space<vmem>>, vector<1x1x8x128xf32>
    %1050 = vector.shape_cast %1049 : vector<1x1x8x128xf32> to vector<8x128xf32>
    %1051 = arith.subf %973, %1050 : vector<8x128xf32>
    %cst_394 = arith.constant 0.000000e+00 : f32
    %1052 = vector.broadcast %cst_394 : f32 to vector<8x128xf32>
    %1053 = arith.select %1038, %1051, %1052 : vector<8x128xi1>, vector<8x128xf32>
    %1054 = arith.mulf %1043, %1043 : vector<8x128xf32>
    %1055 = vector.shape_cast %1054 : vector<8x128xf32> to vector<1x8x128xf32>
    %cst_395 = arith.constant dense<0.000000e+00> : vector<1xf32>
    %1056 = vector.multi_reduction <add>, %1055, %cst_395 [1, 2] : vector<1x8x128xf32> to vector<1xf32>
    %1057 = vector.shape_cast %1056 : vector<1xf32> to vector<1x1x1xf32>
    %1058 = vector.extract %1057[0, 0, 0] : f32 from vector<1x1x1xf32>
    %1059 = arith.mulf %1048, %1048 : vector<8x128xf32>
    %1060 = vector.shape_cast %1059 : vector<8x128xf32> to vector<1x8x128xf32>
    %cst_396 = arith.constant dense<0.000000e+00> : vector<1xf32>
    %1061 = vector.multi_reduction <add>, %1060, %cst_396 [1, 2] : vector<1x8x128xf32> to vector<1xf32>
    %1062 = vector.shape_cast %1061 : vector<1xf32> to vector<1x1x1xf32>
    %1063 = vector.extract %1062[0, 0, 0] : f32 from vector<1x1x1xf32>
    %1064 = arith.addf %1058, %1063 : f32
    %1065 = arith.mulf %1053, %1053 : vector<8x128xf32>
    %1066 = vector.shape_cast %1065 : vector<8x128xf32> to vector<1x8x128xf32>
    %cst_397 = arith.constant dense<0.000000e+00> : vector<1xf32>
    %1067 = vector.multi_reduction <add>, %1066, %cst_397 [1, 2] : vector<1x8x128xf32> to vector<1xf32>
    %1068 = vector.shape_cast %1067 : vector<1xf32> to vector<1x1x1xf32>
    %1069 = vector.extract %1068[0, 0, 0] : f32 from vector<1x1x1xf32>
    %1070 = arith.addf %1064, %1069 : f32
    %cst_398 = arith.constant 0.000000e+00 : f32
    %1071 = vector.broadcast %cst_398 : f32 to vector<8x128xf32>
    %1072 = vector.broadcast %1070 : f32 to vector<8x128xf32>
    %1073 = arith.addf %1071, %1072 : vector<8x128xf32>
    %c0_399 = arith.constant 0 : index
    %c0_400 = arith.constant 0 : index
    %c0_401 = arith.constant 0 : index
    %c0_402 = arith.constant 0 : index
    %1074 = vector.load %arg26[%c0_399, %c0_400, %c0_401, %c0_402] : memref<1x1x8x128xf32, #tpu.memory_space<vmem>>, vector<1x1x8x128xf32>
    %1075 = vector.shape_cast %1074 : vector<1x1x8x128xf32> to vector<8x128xf32>
    %1076 = vector.shape_cast %1073 : vector<8x128xf32> to vector<1x1x8x128xf32>
    tpu.vector_store %arg26[%c0_399, %c0_400, %c0_401, %c0_402], %1076 {strides = array<i32>} : memref<1x1x8x128xf32, #tpu.memory_space<vmem>>, vector<1x1x8x128xf32>,
    return
  }
  func.func @transform_0(%arg0: i32, %arg1: i32) -> (i32, i32, i32, i32) {
    %c0_i32 = arith.constant 0 : i32
    %c0_i32_0 = arith.constant 0 : i32
    %c0_i32_1 = arith.constant 0 : i32
    return %arg0, %c0_i32, %arg1, %c0_i32_0 : i32, i32, i32, i32
  }
  func.func @transform_1(%arg0: i32, %arg1: i32) -> (i32, i32, i32, i32) {
    %c1_i32 = arith.constant 1 : i32
    %0 = arith.muli %arg1, %c1_i32 : i32
    %c1_i32_0 = arith.constant 1 : i32
    %1 = arith.subi %0, %c1_i32_0 : i32
    %c0_i32 = arith.constant 0 : i32
    %2 = arith.maxsi %1, %c0_i32 : i32
    %c0_i32_1 = arith.constant 0 : i32
    %c0_i32_2 = arith.constant 0 : i32
    %c0_i32_3 = arith.constant 0 : i32
    return %arg0, %c0_i32_1, %2, %c0_i32_2 : i32, i32, i32, i32
  }
  func.func @transform_2(%arg0: i32, %arg1: i32) -> (i32, i32, i32, i32) {
    %c1_i32 = arith.constant 1 : i32
    %0 = arith.addi %arg1, %c1_i32 : i32
    %c1_i32_0 = arith.constant 1 : i32
    %1 = arith.muli %0, %c1_i32_0 : i32
    %c1_i32_1 = arith.constant 1 : i32
    %2 = arith.minsi %1, %c1_i32_1 : i32
    %c0_i32 = arith.constant 0 : i32
    %c0_i32_2 = arith.constant 0 : i32
    %c0_i32_3 = arith.constant 0 : i32
    return %arg0, %c0_i32, %2, %c0_i32_2 : i32, i32, i32, i32
  }
  func.func @transform_3(%arg0: i32, %arg1: i32) -> (i32, i32, i32, i32) {
    %c0_i32 = arith.constant 0 : i32
    %c0_i32_0 = arith.constant 0 : i32
    %c0_i32_1 = arith.constant 0 : i32
    return %arg0, %c0_i32, %arg1, %c0_i32_0 : i32, i32, i32, i32
  }
  func.func @transform_4(%arg0: i32, %arg1: i32) -> i32 {
    %c0_i32 = arith.constant 0 : i32
    %c0_i32_0 = arith.constant 0 : i32
    return %c0_i32 : i32
  }
  func.func @transform_5(%arg0: i32, %arg1: i32) -> i32 {
    %c0_i32 = arith.constant 0 : i32
    %c0_i32_0 = arith.constant 0 : i32
    return %c0_i32 : i32
  }
  func.func @transform_6(%arg0: i32, %arg1: i32) -> i32 {
    %c0_i32 = arith.constant 0 : i32
    %c0_i32_0 = arith.constant 0 : i32
    return %c0_i32 : i32
  }
  func.func @transform_7(%arg0: i32, %arg1: i32) -> i32 {
    %c0_i32 = arith.constant 0 : i32
    %c0_i32_0 = arith.constant 0 : i32
    return %c0_i32 : i32
  }
  func.func @transform_8(%arg0: i32, %arg1: i32) -> i32 {
    %c0_i32 = arith.constant 0 : i32
    %c0_i32_0 = arith.constant 0 : i32
    return %c0_i32 : i32
  }
  func.func @transform_9(%arg0: i32, %arg1: i32) -> i32 {
    %c0_i32 = arith.constant 0 : i32
    %c0_i32_0 = arith.constant 0 : i32
    return %c0_i32 : i32
  }
  func.func @transform_10(%arg0: i32, %arg1: i32) -> i32 {
    %c0_i32 = arith.constant 0 : i32
    %c0_i32_0 = arith.constant 0 : i32
    return %c0_i32 : i32
  }
  func.func @transform_11(%arg0: i32, %arg1: i32) -> i32 {
    %c0_i32 = arith.constant 0 : i32
    %c0_i32_0 = arith.constant 0 : i32
    return %c0_i32 : i32
  }
  func.func @transform_12(%arg0: i32, %arg1: i32) -> (i32, i32, i32, i32) {
    %c0_i32 = arith.constant 0 : i32
    %c0_i32_0 = arith.constant 0 : i32
    %c0_i32_1 = arith.constant 0 : i32
    return %arg0, %c0_i32, %arg1, %c0_i32_0 : i32, i32, i32, i32
  }
  func.func @transform_13(%arg0: i32, %arg1: i32) -> (i32, i32, i32, i32) {
    %c0_i32 = arith.constant 0 : i32
    %c0_i32_0 = arith.constant 0 : i32
    %c0_i32_1 = arith.constant 0 : i32
    return %arg0, %c0_i32, %arg1, %c0_i32_0 : i32, i32, i32, i32
  }
  func.func @transform_14(%arg0: i32, %arg1: i32) -> (i32, i32, i32, i32) {
    %c0_i32 = arith.constant 0 : i32
    %c0_i32_0 = arith.constant 0 : i32
    %c0_i32_1 = arith.constant 0 : i32
    return %arg0, %c0_i32, %arg1, %c0_i32_0 : i32, i32, i32, i32
  }
  func.func @transform_15(%arg0: i32, %arg1: i32) -> (i32, i32, i32, i32) {
    %c0_i32 = arith.constant 0 : i32
    %c0_i32_0 = arith.constant 0 : i32
    %c0_i32_1 = arith.constant 0 : i32
    return %arg0, %c0_i32, %arg1, %c0_i32_0 : i32, i32, i32, i32
  }
  func.func @transform_16(%arg0: i32, %arg1: i32) -> (i32, i32, i32, i32) {
    %c0_i32 = arith.constant 0 : i32
    %c0_i32_0 = arith.constant 0 : i32
    %c0_i32_1 = arith.constant 0 : i32
    return %arg0, %c0_i32, %arg1, %c0_i32_0 : i32, i32, i32, i32
  }
  func.func @transform_17(%arg0: i32, %arg1: i32) -> (i32, i32, i32, i32) {
    %c0_i32 = arith.constant 0 : i32
    %c0_i32_0 = arith.constant 0 : i32
    %c0_i32_1 = arith.constant 0 : i32
    return %arg0, %c0_i32, %arg1, %c0_i32_0 : i32, i32, i32, i32
  }
  func.func @transform_18(%arg0: i32, %arg1: i32) -> (i32, i32, i32, i32) {
    %c0_i32 = arith.constant 0 : i32
    %c0_i32_0 = arith.constant 0 : i32
    %c0_i32_1 = arith.constant 0 : i32
    return %arg0, %c0_i32, %arg1, %c0_i32_0 : i32, i32, i32, i32
  }
  func.func @transform_19(%arg0: i32, %arg1: i32) -> (i32, i32, i32, i32) {
    %c0_i32 = arith.constant 0 : i32
    %c0_i32_0 = arith.constant 0 : i32
    %c0_i32_1 = arith.constant 0 : i32
    return %arg0, %c0_i32, %arg1, %c0_i32_0 : i32, i32, i32, i32
  }
  func.func @transform_20(%arg0: i32, %arg1: i32) -> (i32, i32, i32, i32) {
    %c0_i32 = arith.constant 0 : i32
    %c0_i32_0 = arith.constant 0 : i32
    %c0_i32_1 = arith.constant 0 : i32
    return %arg0, %c0_i32, %arg1, %c0_i32_0 : i32, i32, i32, i32
  }
  func.func @transform_21(%arg0: i32, %arg1: i32) -> (i32, i32, i32, i32) {
    %c0_i32 = arith.constant 0 : i32
    %c0_i32_0 = arith.constant 0 : i32
    %c0_i32_1 = arith.constant 0 : i32
    return %arg0, %c0_i32, %arg1, %c0_i32_0 : i32, i32, i32, i32
  }
  func.func @transform_22(%arg0: i32, %arg1: i32) -> (i32, i32, i32, i32) {
    %c0_i32 = arith.constant 0 : i32
    %c0_i32_0 = arith.constant 0 : i32
    %c0_i32_1 = arith.constant 0 : i32
    return %arg0, %c0_i32, %arg1, %c0_i32_0 : i32, i32, i32, i32
  }
  func.func @transform_23(%arg0: i32, %arg1: i32) -> (i32, i32, i32, i32) {
    %c0_i32 = arith.constant 0 : i32
    %c0_i32_0 = arith.constant 0 : i32
    %c0_i32_1 = arith.constant 0 : i32
    return %arg0, %c0_i32, %arg1, %c0_i32_0 : i32, i32, i32, i32
  }
  func.func @transform_24(%arg0: i32, %arg1: i32) -> (i32, i32, i32, i32) {
    %c0_i32 = arith.constant 0 : i32
    %c0_i32_0 = arith.constant 0 : i32
    %c0_i32_1 = arith.constant 0 : i32
    return %arg0, %arg1, %c0_i32, %c0_i32_0 : i32, i32, i32, i32
  }
}

</mosaic_0001>

<llo_original>
// kernel: tpu_custom_call.1
$region0: #{tpu_custom_call.1}
  #allocation0 [shape = 'u32[]', space=smem, size = 0x4, offset = 0x4, fixed_abs, tag = 'smem constant byte address 0x4 - core index']
  #allocation1 [shape = 'u32[72,128]{1,0:T(1,128)}', space=vmem, size = 0x9000, scoped, tag = 'internal scratch']
  #allocation2 [shape = 'f32[1]{0:T(128)S(6)}', space=smem, size = 0x200, scoped, tag = 'scoped memory for tpu_custom_call.1']
  #allocation3 [shape = 'f32[1]{0:T(128)S(6)}', space=smem, size = 0x200, scoped, tag = 'scoped memory for tpu_custom_call.1']
  #allocation4 [shape = 'f32[1]{0:T(128)S(6)}', space=smem, size = 0x200, scoped, tag = 'scoped memory for tpu_custom_call.1']
  %s0 = inlined_call_operand.hbm [shape: f32[2,3,16,128], index: 0, kind: input, shape index: {}]
  %s1 = inlined_call_operand.hbm [shape: f32[2,3,16,128], index: 1, kind: input, shape index: {}]
  %s2 = inlined_call_operand.hbm [shape: f32[2,3,16,128], index: 2, kind: input, shape index: {}]
  %s3 = inlined_call_operand.hbm [shape: f32[2,3,16,128], index: 3, kind: input, shape index: {}]
  %s4 = inlined_call_operand.vmem [shape: f32[9], index: 4, kind: input, shape index: {}]
  %s5 = inlined_call_operand.<no memory space> [shape: f32[1], index: 5, kind: input, shape index: {}]
  %s6 = inlined_call_operand.vmem [shape: f32[18], index: 6, kind: input, shape index: {}]
  %s7 = inlined_call_operand.<no memory space> [shape: f32[1], index: 7, kind: input, shape index: {}]
  %s8 = inlined_call_operand.vmem [shape: f32[18], index: 8, kind: input, shape index: {}]
  %s9 = inlined_call_operand.<no memory space> [shape: f32[1], index: 9, kind: input, shape index: {}]
  %s10 = inlined_call_operand.vmem [shape: f32[108], index: 10, kind: input, shape index: {}]
  %s11 = inlined_call_operand.vmem [shape: f32[2], index: 11, kind: input, shape index: {}]
  %s12 = inlined_call_operand.hbm [shape: f32[2,1,16,128], index: 12, kind: output, shape index: {0}]
  %s13 = inlined_call_operand.hbm [shape: f32[2,1,16,128], index: 13, kind: output, shape index: {1}]
  %s14 = inlined_call_operand.hbm [shape: f32[2,5,16,128], index: 14, kind: output, shape index: {2}]
  %s15 = inlined_call_operand.hbm [shape: f32[2,1,16,128], index: 15, kind: output, shape index: {3}]
  %s16 = inlined_call_operand.hbm [shape: f32[2,5,16,128], index: 16, kind: output, shape index: {4}]
  %s17 = inlined_call_operand.hbm [shape: f32[2,5,16,128], index: 17, kind: output, shape index: {5}]
  %s18 = inlined_call_operand.hbm [shape: f32[2,1,16,128], index: 18, kind: output, shape index: {6}]
  %s19 = inlined_call_operand.hbm [shape: f32[2,3,16,128], index: 19, kind: output, shape index: {7}]
  %s20 = inlined_call_operand.hbm [shape: f32[2,1,16,128], index: 20, kind: output, shape index: {8}]
  %s21 = inlined_call_operand.hbm [shape: f32[2,1,16,128], index: 21, kind: output, shape index: {9}]
  %s22 = inlined_call_operand.hbm [shape: f32[2,1,16,128], index: 22, kind: output, shape index: {10}]
  %s23 = inlined_call_operand.hbm [shape: f32[2,1,16,128], index: 23, kind: output, shape index: {11}]
  %s24 = inlined_call_operand.hbm [shape: f32[2,2,8,128], index: 24, kind: output, shape index: {12}]
  %25 = xla_tuple %s12, %s13, %s14, %s15, %s16, %s17, %s18, %s19, %s20, %s21, %s22, %s23, %s24
  %s26 = sld [smem:[#allocation0]]
  $region213: #{tpu_custom_call.1} parent=0
    _
  %s28 = ssub.s32 1, %s26
  %s29 = scalar_select 0, %s28, %s26
  %30 = sst [smem:[#allocation2]] %s5
  %31 = sst [smem:[#allocation3]] %s7
  %32 = sst [smem:[#allocation4]] %s9
  $region1: #{tpu_custom_call.1} parent=0
    #allocation5 [shape = 'u8[24576]{0}', space=vmem, size = 0x6000, scoped, tag = 'input window, operand 0']
    #allocation6 [shape = 's32[2]{0}', space=sflag, size = 0x8, scoped, tag = 'scoped memory for tpu_custom_call.1']
    #allocation7 [shape = 's32[2]{0}', space=sflag, size = 0x8, scoped, tag = 'scoped memory for tpu_custom_call.1']
    #allocation8 [shape = 's32[2]{0}', space=sflag, size = 0x8, scoped, tag = 'scoped memory for tpu_custom_call.1']
    #allocation9 [shape = 'u8[24576]{0}', space=vmem, size = 0x6000, scoped, tag = 'input window, operand 1']
    #allocation10 [shape = 's32[2]{0}', space=sflag, size = 0x8, scoped, tag = 'scoped memory for tpu_custom_call.1']
    #allocation11 [shape = 'u8[24576]{0}', space=vmem, size = 0x6000, scoped, tag = 'input window, operand 2']
    #allocation12 [shape = 'u8[24576]{0}', space=vmem, size = 0x6000, scoped, tag = 'input window, operand 3']
    #allocation13 [shape = 's32[2]{0}', space=sflag, size = 0x8, scoped, tag = 'scoped memory for tpu_custom_call.1']
    #allocation14 [shape = 'u8[512]{0}', space=smem, size = 0x200, scoped, tag = 'input window, operand 4, single buffered']
    #allocation15 [shape = 'u8[512]{0}', space=smem, size = 0x200, scoped, tag = 'input window, operand 6, single buffered']
    #allocation16 [shape = 's32[1]{0}', space=sflag, size = 0x4, scoped, tag = 'scoped memory for tpu_custom_call.1']
    #allocation17 [shape = 'u8[512]{0}', space=smem, size = 0x200, scoped, tag = 'input window, operand 8, single buffered']
    #allocation18 [shape = 'u8[512]{0}', space=smem, size = 0x200, scoped, tag = 'input window, operand 10, single buffered']
    #allocation19 [shape = 's32[1]{0}', space=sflag, size = 0x4, scoped, tag = 'scoped memory for tpu_custom_call.1']
    #allocation20 [shape = 'u8[512]{0}', space=smem, size = 0x200, scoped, tag = 'input window, operand 11, single buffered']
    #allocation21 [shape = 'u8[8192]{0}', space=vmem, size = 0x2000, scoped, tag = 'output window, operand 0']
    #allocation22 [shape = 'u8[8192]{0}', space=vmem, size = 0x2000, scoped, tag = 'output window, operand 1']
    #allocation23 [shape = 's32[2]{0}', space=sflag, size = 0x8, scoped, tag = 'scoped memory for tpu_custom_call.1']
    #allocation24 [shape = 'u8[40960]{0}', space=vmem, size = 0xa000, scoped, tag = 'output window, operand 2']
    #allocation25 [shape = 'u8[8192]{0}', space=vmem, size = 0x2000, scoped, tag = 'output window, operand 3']
    #allocation26 [shape = 's32[2]{0}', space=sflag, size = 0x8, scoped, tag = 'scoped memory for tpu_custom_call.1']
    #allocation27 [shape = 'u8[40960]{0}', space=vmem, size = 0xa000, scoped, tag = 'output window, operand 4']
    #allocation28 [shape = 'u8[40960]{0}', space=vmem, size = 0xa000, scoped, tag = 'output window, operand 5']
    #allocation29 [shape = 's32[2]{0}', space=sflag, size = 0x8, scoped, tag = 'scoped memory for tpu_custom_call.1']
    #allocation30 [shape = 'u8[8192]{0}', space=vmem, size = 0x2000, scoped, tag = 'output window, operand 6']
    #allocation31 [shape = 'u8[24576]{0}', space=vmem, size = 0x6000, scoped, tag = 'output window, operand 7']
    #allocation32 [shape = 's32[2]{0}', space=sflag, size = 0x8, scoped, tag = 'scoped memory for tpu_custom_call.1']
    #allocation33 [shape = 'u8[8192]{0}', space=vmem, size = 0x2000, scoped, tag = 'output window, operand 8']
    #allocation34 [shape = 'u8[8192]{0}', space=vmem, size = 0x2000, scoped, tag = 'output window, operand 9']
    #allocation35 [shape = 's32[2]{0}', space=sflag, size = 0x8, scoped, tag = 'scoped memory for tpu_custom_call.1']
    #allocation36 [shape = 'u8[8192]{0}', space=vmem, size = 0x2000, scoped, tag = 'output window, operand 10']
    #allocation37 [shape = 'u8[8192]{0}', space=vmem, size = 0x2000, scoped, tag = 'output window, operand 11']
    #allocation38 [shape = 's32[2]{0}', space=sflag, size = 0x8, scoped, tag = 'scoped memory for tpu_custom_call.1']
    #allocation39 [shape = 'u8[8192]{0}', space=vmem, size = 0x2000, scoped, tag = 'output window, operand 12']
    %33 = vsyncpa [#allocation6], 0
    %s34 = scalar_lea.sflag [#allocation6], 1
    %35 = vsyncpa %s34, 0
    %36 = vsyncpa [#allocation10], 0
    %s37 = scalar_lea.sflag [#allocation10], 1
    %38 = vsyncpa %s37, 0
    %39 = vsyncpa [#allocation13], 0
    %s40 = scalar_lea.sflag [#allocation13], 1
    %41 = vsyncpa %s40, 0
    %42 = vsyncpa [#allocation8], 0
    %43 = vsyncpa [#allocation16], 0
    %44 = vsyncpa [#allocation19], 0
    %45 = vsyncpa [#allocation7], 0
    %s46 = scalar_lea.sflag [#allocation7], 1
    %47 = vsyncpa %s46, 0
    %48 = vsyncpa [#allocation23], 0
    %s49 = scalar_lea.sflag [#allocation23], 1
    %50 = vsyncpa %s49, 0
    %51 = vsyncpa [#allocation26], 0
    %s52 = scalar_lea.sflag [#allocation26], 1
    %53 = vsyncpa %s52, 0
    %54 = vsyncpa [#allocation29], 0
    %s55 = scalar_lea.sflag [#allocation29], 1
    %56 = vsyncpa %s55, 0
    %57 = vsyncpa [#allocation32], 0
    %s58 = scalar_lea.sflag [#allocation32], 1
    %59 = vsyncpa %s58, 0
    %60 = vsyncpa [#allocation35], 0
    %s61 = scalar_lea.sflag [#allocation35], 1
    %62 = vsyncpa %s61, 0
    %63 = vsyncpa [#allocation38], 0
    %s64 = scalar_lea.sflag [#allocation38], 1
    %65 = vsyncpa %s64, 0
    loop: start=0, step=1, limit=6
    $region2: #{tpu_custom_call.1} parent=1 // loop_pre_header
      _
    $region3: #{tpu_custom_call.1} parent=1 // loop_header
      %s67 = sphi 0, %s71
      %p68 = scmp.ge.s32.totalorder %s67, 6
      %s74 = sphi 0, %s86
      %s75 = sphi 0, %s82
      %s76 = sphi 0, %s74
      %s77 = sphi 0, %s75
      %s78 = sphi 0, %s76
      %s79 = sphi 0, %s77
      %s91 = sphi 0, %s93
      %s94 = sphi 0, %s91
      %s95 = sphi 0, %s94
      %s111 = sphi 0, %s95
      %s125 = sphi 0, %s127
      %s128 = sphi 0, %s125
      %s129 = sphi 0, %s128
      %s145 = sphi 0, %s129
      %s159 = sphi 0, %s161
      %s162 = sphi 0, %s159
      %s163 = sphi 0, %s162
      %s179 = sphi 0, %s163
      %s187 = sphi 0, %s189
      %s190 = sphi 0, %s187
      %s191 = sphi 0, %s190
      %s207 = sphi 0, %s191
      %s211 = sphi 0, %s211
      %s213 = sphi 0, %s211
      %s214 = sphi 0, %s213
      %s228 = sphi 0, %s214
      %s232 = sphi 0, %s232
      %s234 = sphi 0, %s232
      %s235 = sphi 0, %s234
      %s249 = sphi 0, %s235
      %s253 = sphi 0, %s253
      %s255 = sphi 0, %s253
      %s256 = sphi 0, %s255
      %s270 = sphi 0, %s256
      %s274 = sphi 0, %s274
      %s276 = sphi 0, %s274
      %s277 = sphi 0, %s276
      %s291 = sphi 0, %s277
      %s295 = sphi 0, %s295
      %s297 = sphi 0, %s295
      %s298 = sphi 0, %s297
      %s312 = sphi 0, %s298
      %s316 = sphi 0, %s316
      %s318 = sphi 0, %s316
      %s319 = sphi 0, %s318
      %s333 = sphi 0, %s319
      %s337 = sphi 0, %s337
      %s339 = sphi 0, %s337
      %s340 = sphi 0, %s339
      %s354 = sphi 0, %s340
      %s358 = sphi 0, %s358
      %s360 = sphi 0, %s358
      %s361 = sphi 0, %s360
      %s375 = sphi 0, %s361
      %s383 = sphi 0, %s385
      %s386 = sphi 0, %s383
      %s387 = sphi 0, %s386
      %s403 = sphi 0, %s387
      %s411 = sphi 0, %s413
      %s414 = sphi 0, %s411
      %s415 = sphi 0, %s414
      %s431 = sphi 0, %s415
      %s439 = sphi 0, %s441
      %s442 = sphi 0, %s439
      %s443 = sphi 0, %s442
      %s459 = sphi 0, %s443
      %s467 = sphi 0, %s469
      %s470 = sphi 0, %s467
      %s471 = sphi 0, %s470
      %s487 = sphi 0, %s471
      %s495 = sphi 0, %s497
      %s498 = sphi 0, %s495
      %s499 = sphi 0, %s498
      %s515 = sphi 0, %s499
      %s523 = sphi 0, %s525
      %s526 = sphi 0, %s523
      %s527 = sphi 0, %s526
      %s543 = sphi 0, %s527
      %s551 = sphi 0, %s553
      %s554 = sphi 0, %s551
      %s555 = sphi 0, %s554
      %s571 = sphi 0, %s555
      %s579 = sphi 0, %s581
      %s582 = sphi 0, %s579
      %s583 = sphi 0, %s582
      %s599 = sphi 0, %s583
      %s607 = sphi 0, %s609
      %s610 = sphi 0, %s607
      %s611 = sphi 0, %s610
      %s627 = sphi 0, %s611
      %s635 = sphi 0, %s637
      %s638 = sphi 0, %s635
      %s639 = sphi 0, %s638
      %s655 = sphi 0, %s639
      %s663 = sphi 0, %s665
      %s666 = sphi 0, %s663
      %s667 = sphi 0, %s666
      %s683 = sphi 0, %s667
      %s691 = sphi 0, %s693
      %s694 = sphi 0, %s691
      %s695 = sphi 0, %s694
      %s711 = sphi 0, %s695
      %s719 = sphi 0, %s721
      %s722 = sphi 0, %s719
      %s723 = sphi 0, %s722
      %s739 = sphi 0, %s723
    $region4: #{tpu_custom_call.1} parent=1 // loop_header_branch
      %70 = sbr.rel (%p68) target = $region8
    $region5: #{tpu_custom_call.1} parent=1 // loop_body
      %s72 = ssub.s32 %s67, 1
      %s73 = ssub.s32 %s67, 2
      %s80 = sadd.s32 1, %s75
      %p81 = scmp.ge.s32.totalorder %s80, 2
      %s82 = scalar_select %p81, 0, %s80
      %s83 = sadd.s32 1, %s74
      %s84 = scalar_select %p81, %s83, %s74
      %p85 = scmp.ge.s32.totalorder %s84, 2
      %s86 = scalar_select %p85, 0, %s84
      %s87 = ssub.s32 %s74, %s86
      %s88 = ssub.s32 %s75, %s82
      %s89 = sor.u32 %s87, %s88
      %p90 = scmp.eq.s32.totalorder %s89, 0
      %s92 = sadd.s32 %s91, 1
      %s93 = scalar_select %p90, %s91, %s92
      %p96 = pneg %p90
      %p97 = scmp.eq.s32.totalorder %s67, 3
      %p98 = por %p96, %p97
      %p99 = scmp.ne.s32.totalorder %s91, %s94
      %p100 = scmp.eq.s32.totalorder %s67, 0
      %p101 = por %p99, %p100
      %p102 = scmp.ne.s32.totalorder %s91, %s94
      %p103 = scmp.eq.s32.totalorder %s72, 3
      %p104 = por %p102, %p103
      %p105 = scmp.ne.s32.totalorder %s94, %s95
      %p106 = scmp.eq.s32.totalorder %s72, 0
      %p107 = por %p105, %p106
      %p108 = scmp.ne.s32.totalorder %s94, %s95
      %p109 = scmp.eq.s32.totalorder %s73, 3
      %p110 = por %p108, %p109
      %p112 = scmp.ne.s32.totalorder %s95, %s111
      %p113 = scmp.eq.s32.totalorder %s73, 0
      %p114 = por %p112, %p113
      %s115 = ssub.s32 %s75, 1
      %p116 = scmp.gt.s32.totalorder %s115, 0
      %s117 = scalar_select %p116, %s115, 0
      %s118 = ssub.s32 %s82, 1
      %p119 = scmp.gt.s32.totalorder %s118, 0
      %s120 = scalar_select %p119, %s118, 0
      %s121 = ssub.s32 %s74, %s86
      %s122 = ssub.s32 %s117, %s120
      %s123 = sor.u32 %s121, %s122
      %p124 = scmp.eq.s32.totalorder %s123, 0
      %s126 = sadd.s32 %s125, 1
      %s127 = scalar_select %p124, %s125, %s126
      %p130 = pneg %p124
      %p131 = scmp.eq.s32.totalorder %s67, 3
      %p132 = por %p130, %p131
      %p133 = scmp.ne.s32.totalorder %s125, %s128
      %p134 = scmp.eq.s32.totalorder %s67, 0
      %p135 = por %p133, %p134
      %p136 = scmp.ne.s32.totalorder %s125, %s128
      %p137 = scmp.eq.s32.totalorder %s72, 3
      %p138 = por %p136, %p137
      %p139 = scmp.ne.s32.totalorder %s128, %s129
      %p140 = scmp.eq.s32.totalorder %s72, 0
      %p141 = por %p139, %p140
      %p142 = scmp.ne.s32.totalorder %s128, %s129
      %p143 = scmp.eq.s32.totalorder %s73, 3
      %p144 = por %p142, %p143
      %p146 = scmp.ne.s32.totalorder %s129, %s145
      %p147 = scmp.eq.s32.totalorder %s73, 0
      %p148 = por %p146, %p147
      %s149 = sadd.s32 %s75, 1
      %p150 = scmp.lt.s32.totalorder %s149, 1
      %s151 = scalar_select %p150, %s149, 1
      %s152 = sadd.s32 %s82, 1
      %p153 = scmp.lt.s32.totalorder %s152, 1
      %s154 = scalar_select %p153, %s152, 1
      %s155 = ssub.s32 %s74, %s86
      %s156 = ssub.s32 %s151, %s154
      %s157 = sor.u32 %s155, %s156
      %p158 = scmp.eq.s32.totalorder %s157, 0
      %s160 = sadd.s32 %s159, 1
      %s161 = scalar_select %p158, %s159, %s160
      %p164 = pneg %p158
      %p165 = scmp.eq.s32.totalorder %s67, 3
      %p166 = por %p164, %p165
      %p167 = scmp.ne.s32.totalorder %s159, %s162
      %p168 = scmp.eq.s32.totalorder %s67, 0
      %p169 = por %p167, %p168
      %p170 = scmp.ne.s32.totalorder %s159, %s162
      %p171 = scmp.eq.s32.totalorder %s72, 3
      %p172 = por %p170, %p171
      %p173 = scmp.ne.s32.totalorder %s162, %s163
      %p174 = scmp.eq.s32.totalorder %s72, 0
      %p175 = por %p173, %p174
      %p176 = scmp.ne.s32.totalorder %s162, %s163
      %p177 = scmp.eq.s32.totalorder %s73, 3
      %p178 = por %p176, %p177
      %p180 = scmp.ne.s32.totalorder %s163, %s179
      %p181 = scmp.eq.s32.totalorder %s73, 0
      %p182 = por %p180, %p181
      %s183 = ssub.s32 %s74, %s86
      %s184 = ssub.s32 %s75, %s82
      %s185 = sor.u32 %s183, %s184
      %p186 = scmp.eq.s32.totalorder %s185, 0
      %s188 = sadd.s32 %s187, 1
      %s189 = scalar_select %p186, %s187, %s188
      %p192 = pneg %p186
      %p193 = scmp.eq.s32.totalorder %s67, 3
      %p194 = por %p192, %p193
      %p195 = scmp.ne.s32.totalorder %s187, %s190
      %p196 = scmp.eq.s32.totalorder %s67, 0
      %p197 = por %p195, %p196
      %p198 = scmp.ne.s32.totalorder %s187, %s190
      %p199 = scmp.eq.s32.totalorder %s72, 3
      %p200 = por %p198, %p199
      %p201 = scmp.ne.s32.totalorder %s190, %s191
      %p202 = scmp.eq.s32.totalorder %s72, 0
      %p203 = por %p201, %p202
      %p204 = scmp.ne.s32.totalorder %s190, %s191
      %p205 = scmp.eq.s32.totalorder %s73, 3
      %p206 = por %p204, %p205
      %p208 = scmp.ne.s32.totalorder %s191, %s207
      %p209 = scmp.eq.s32.totalorder %s73, 0
      %p210 = por %p208, %p209
      %s212 = sadd.s32 %s211, 1
      %p215 = scmp.eq.s32.totalorder %s67, 3
      %p216 = scmp.ne.s32.totalorder %s211, %s213
      %p217 = scmp.eq.s32.totalorder %s67, 0
      %p218 = por %p216, %p217
      %p219 = scmp.ne.s32.totalorder %s211, %s213
      %p220 = scmp.eq.s32.totalorder %s72, 3
      %p221 = por %p219, %p220
      %p222 = scmp.ne.s32.totalorder %s213, %s214
      %p223 = scmp.eq.s32.totalorder %s72, 0
      %p224 = por %p222, %p223
      %p225 = scmp.ne.s32.totalorder %s213, %s214
      %p226 = scmp.eq.s32.totalorder %s73, 3
      %p227 = por %p225, %p226
      %p229 = scmp.ne.s32.totalorder %s214, %s228
      %p230 = scmp.eq.s32.totalorder %s73, 0
      %p231 = por %p229, %p230
      %s233 = sadd.s32 %s232, 1
      %p236 = scmp.eq.s32.totalorder %s67, 3
      %p237 = scmp.ne.s32.totalorder %s232, %s234
      %p238 = scmp.eq.s32.totalorder %s67, 0
      %p239 = por %p237, %p238
      %p240 = scmp.ne.s32.totalorder %s232, %s234
      %p241 = scmp.eq.s32.totalorder %s72, 3
      %p242 = por %p240, %p241
      %p243 = scmp.ne.s32.totalorder %s234, %s235
      %p244 = scmp.eq.s32.totalorder %s72, 0
      %p245 = por %p243, %p244
      %p246 = scmp.ne.s32.totalorder %s234, %s235
      %p247 = scmp.eq.s32.totalorder %s73, 3
      %p248 = por %p246, %p247
      %p250 = scmp.ne.s32.totalorder %s235, %s249
      %p251 = scmp.eq.s32.totalorder %s73, 0
      %p252 = por %p250, %p251
      %s254 = sadd.s32 %s253, 1
      %p257 = scmp.eq.s32.totalorder %s67, 3
      %p258 = scmp.ne.s32.totalorder %s253, %s255
      %p259 = scmp.eq.s32.totalorder %s67, 0
      %p260 = por %p258, %p259
      %p261 = scmp.ne.s32.totalorder %s253, %s255
      %p262 = scmp.eq.s32.totalorder %s72, 3
      %p263 = por %p261, %p262
      %p264 = scmp.ne.s32.totalorder %s255, %s256
      %p265 = scmp.eq.s32.totalorder %s72, 0
      %p266 = por %p264, %p265
      %p267 = scmp.ne.s32.totalorder %s255, %s256
      %p268 = scmp.eq.s32.totalorder %s73, 3
      %p269 = por %p267, %p268
      %p271 = scmp.ne.s32.totalorder %s256, %s270
      %p272 = scmp.eq.s32.totalorder %s73, 0
      %p273 = por %p271, %p272
      %s275 = sadd.s32 %s274, 1
      %p278 = scmp.eq.s32.totalorder %s67, 3
      %p279 = scmp.ne.s32.totalorder %s274, %s276
      %p280 = scmp.eq.s32.totalorder %s67, 0
      %p281 = por %p279, %p280
      %p282 = scmp.ne.s32.totalorder %s274, %s276
      %p283 = scmp.eq.s32.totalorder %s72, 3
      %p284 = por %p282, %p283
      %p285 = scmp.ne.s32.totalorder %s276, %s277
      %p286 = scmp.eq.s32.totalorder %s72, 0
      %p287 = por %p285, %p286
      %p288 = scmp.ne.s32.totalorder %s276, %s277
      %p289 = scmp.eq.s32.totalorder %s73, 3
      %p290 = por %p288, %p289
      %p292 = scmp.ne.s32.totalorder %s277, %s291
      %p293 = scmp.eq.s32.totalorder %s73, 0
      %p294 = por %p292, %p293
      %s296 = sadd.s32 %s295, 1
      %p299 = scmp.eq.s32.totalorder %s67, 3
      %p300 = scmp.ne.s32.totalorder %s295, %s297
      %p301 = scmp.eq.s32.totalorder %s67, 0
      %p302 = por %p300, %p301
      %p303 = scmp.ne.s32.totalorder %s295, %s297
      %p304 = scmp.eq.s32.totalorder %s72, 3
      %p305 = por %p303, %p304
      %p306 = scmp.ne.s32.totalorder %s297, %s298
      %p307 = scmp.eq.s32.totalorder %s72, 0
      %p308 = por %p306, %p307
      %p309 = scmp.ne.s32.totalorder %s297, %s298
      %p310 = scmp.eq.s32.totalorder %s73, 3
      %p311 = por %p309, %p310
      %p313 = scmp.ne.s32.totalorder %s298, %s312
      %p314 = scmp.eq.s32.totalorder %s73, 0
      %p315 = por %p313, %p314
      %s317 = sadd.s32 %s316, 1
      %p320 = scmp.eq.s32.totalorder %s67, 3
      %p321 = scmp.ne.s32.totalorder %s316, %s318
      %p322 = scmp.eq.s32.totalorder %s67, 0
      %p323 = por %p321, %p322
      %p324 = scmp.ne.s32.totalorder %s316, %s318
      %p325 = scmp.eq.s32.totalorder %s72, 3
      %p326 = por %p324, %p325
      %p327 = scmp.ne.s32.totalorder %s318, %s319
      %p328 = scmp.eq.s32.totalorder %s72, 0
      %p329 = por %p327, %p328
      %p330 = scmp.ne.s32.totalorder %s318, %s319
      %p331 = scmp.eq.s32.totalorder %s73, 3
      %p332 = por %p330, %p331
      %p334 = scmp.ne.s32.totalorder %s319, %s333
      %p335 = scmp.eq.s32.totalorder %s73, 0
      %p336 = por %p334, %p335
      %s338 = sadd.s32 %s337, 1
      %p341 = scmp.eq.s32.totalorder %s67, 3
      %p342 = scmp.ne.s32.totalorder %s337, %s339
      %p343 = scmp.eq.s32.totalorder %s67, 0
      %p344 = por %p342, %p343
      %p345 = scmp.ne.s32.totalorder %s337, %s339
      %p346 = scmp.eq.s32.totalorder %s72, 3
      %p347 = por %p345, %p346
      %p348 = scmp.ne.s32.totalorder %s339, %s340
      %p349 = scmp.eq.s32.totalorder %s72, 0
      %p350 = por %p348, %p349
      %p351 = scmp.ne.s32.totalorder %s339, %s340
      %p352 = scmp.eq.s32.totalorder %s73, 3
      %p353 = por %p351, %p352
      %p355 = scmp.ne.s32.totalorder %s340, %s354
      %p356 = scmp.eq.s32.totalorder %s73, 0
      %p357 = por %p355, %p356
      %s359 = sadd.s32 %s358, 1
      %p362 = scmp.eq.s32.totalorder %s67, 3
      %p363 = scmp.ne.s32.totalorder %s358, %s360
      %p364 = scmp.eq.s32.totalorder %s67, 0
      %p365 = por %p363, %p364
      %p366 = scmp.ne.s32.totalorder %s358, %s360
      %p367 = scmp.eq.s32.totalorder %s72, 3
      %p368 = por %p366, %p367
      %p369 = scmp.ne.s32.totalorder %s360, %s361
      %p370 = scmp.eq.s32.totalorder %s72, 0
      %p371 = por %p369, %p370
      %p372 = scmp.ne.s32.totalorder %s360, %s361
      %p373 = scmp.eq.s32.totalorder %s73, 3
      %p374 = por %p372, %p373
      %p376 = scmp.ne.s32.totalorder %s361, %s375
      %p377 = scmp.eq.s32.totalorder %s73, 0
      %p378 = por %p376, %p377
      %s379 = ssub.s32 %s74, %s86
      %s380 = ssub.s32 %s75, %s82
      %s381 = sor.u32 %s379, %s380
      %p382 = scmp.eq.s32.totalorder %s381, 0
      %s384 = sadd.s32 %s383, 1
      %s385 = scalar_select %p382, %s383, %s384
      %p388 = pneg %p382
      %p389 = scmp.eq.s32.totalorder %s67, 3
      %p390 = por %p388, %p389
      %p391 = scmp.ne.s32.totalorder %s383, %s386
      %p392 = scmp.eq.s32.totalorder %s67, 0
      %p393 = por %p391, %p392
      %p394 = scmp.ne.s32.totalorder %s383, %s386
      %p395 = scmp.eq.s32.totalorder %s72, 3
      %p396 = por %p394, %p395
      %p397 = scmp.ne.s32.totalorder %s386, %s387
      %p398 = scmp.eq.s32.totalorder %s72, 0
      %p399 = por %p397, %p398
      %p400 = scmp.ne.s32.totalorder %s386, %s387
      %p401 = scmp.eq.s32.totalorder %s73, 3
      %p402 = por %p400, %p401
      %p404 = scmp.ne.s32.totalorder %s387, %s403
      %p405 = scmp.eq.s32.totalorder %s73, 0
      %p406 = por %p404, %p405
      %s407 = ssub.s32 %s74, %s86
      %s408 = ssub.s32 %s75, %s82
      %s409 = sor.u32 %s407, %s408
      %p410 = scmp.eq.s32.totalorder %s409, 0
      %s412 = sadd.s32 %s411, 1
      %s413 = scalar_select %p410, %s411, %s412
      %p416 = pneg %p410
      %p417 = scmp.eq.s32.totalorder %s67, 3
      %p418 = por %p416, %p417
      %p419 = scmp.ne.s32.totalorder %s411, %s414
      %p420 = scmp.eq.s32.totalorder %s67, 0
      %p421 = por %p419, %p420
      %p422 = scmp.ne.s32.totalorder %s411, %s414
      %p423 = scmp.eq.s32.totalorder %s72, 3
      %p424 = por %p422, %p423
      %p425 = scmp.ne.s32.totalorder %s414, %s415
      %p426 = scmp.eq.s32.totalorder %s72, 0
      %p427 = por %p425, %p426
      %p428 = scmp.ne.s32.totalorder %s414, %s415
      %p429 = scmp.eq.s32.totalorder %s73, 3
      %p430 = por %p428, %p429
      %p432 = scmp.ne.s32.totalorder %s415, %s431
      %p433 = scmp.eq.s32.totalorder %s73, 0
      %p434 = por %p432, %p433
      %s435 = ssub.s32 %s74, %s86
      %s436 = ssub.s32 %s75, %s82
      %s437 = sor.u32 %s435, %s436
      %p438 = scmp.eq.s32.totalorder %s437, 0
      %s440 = sadd.s32 %s439, 1
      %s441 = scalar_select %p438, %s439, %s440
      %p444 = pneg %p438
      %p445 = scmp.eq.s32.totalorder %s67, 3
      %p446 = por %p444, %p445
      %p447 = scmp.ne.s32.totalorder %s439, %s442
      %p448 = scmp.eq.s32.totalorder %s67, 0
      %p449 = por %p447, %p448
      %p450 = scmp.ne.s32.totalorder %s439, %s442
      %p451 = scmp.eq.s32.totalorder %s72, 3
      %p452 = por %p450, %p451
      %p453 = scmp.ne.s32.totalorder %s442, %s443
      %p454 = scmp.eq.s32.totalorder %s72, 0
      %p455 = por %p453, %p454
      %p456 = scmp.ne.s32.totalorder %s442, %s443
      %p457 = scmp.eq.s32.totalorder %s73, 3
      %p458 = por %p456, %p457
      %p460 = scmp.ne.s32.totalorder %s443, %s459
      %p461 = scmp.eq.s32.totalorder %s73, 0
      %p462 = por %p460, %p461
      %s463 = ssub.s32 %s74, %s86
      %s464 = ssub.s32 %s75, %s82
      %s465 = sor.u32 %s463, %s464
      %p466 = scmp.eq.s32.totalorder %s465, 0
      %s468 = sadd.s32 %s467, 1
      %s469 = scalar_select %p466, %s467, %s468
      %p472 = pneg %p466
      %p473 = scmp.eq.s32.totalorder %s67, 3
      %p474 = por %p472, %p473
      %p475 = scmp.ne.s32.totalorder %s467, %s470
      %p476 = scmp.eq.s32.totalorder %s67, 0
      %p477 = por %p475, %p476
      %p478 = scmp.ne.s32.totalorder %s467, %s470
      %p479 = scmp.eq.s32.totalorder %s72, 3
      %p480 = por %p478, %p479
      %p481 = scmp.ne.s32.totalorder %s470, %s471
      %p482 = scmp.eq.s32.totalorder %s72, 0
      %p483 = por %p481, %p482
      %p484 = scmp.ne.s32.totalorder %s470, %s471
      %p485 = scmp.eq.s32.totalorder %s73, 3
      %p486 = por %p484, %p485
      %p488 = scmp.ne.s32.totalorder %s471, %s487
      %p489 = scmp.eq.s32.totalorder %s73, 0
      %p490 = por %p488, %p489
      %s491 = ssub.s32 %s74, %s86
      %s492 = ssub.s32 %s75, %s82
      %s493 = sor.u32 %s491, %s492
      %p494 = scmp.eq.s32.totalorder %s493, 0
      %s496 = sadd.s32 %s495, 1
      %s497 = scalar_select %p494, %s495, %s496
      %p500 = pneg %p494
      %p501 = scmp.eq.s32.totalorder %s67, 3
      %p502 = por %p500, %p501
      %p503 = scmp.ne.s32.totalorder %s495, %s498
      %p504 = scmp.eq.s32.totalorder %s67, 0
      %p505 = por %p503, %p504
      %p506 = scmp.ne.s32.totalorder %s495, %s498
      %p507 = scmp.eq.s32.totalorder %s72, 3
      %p508 = por %p506, %p507
      %p509 = scmp.ne.s32.totalorder %s498, %s499
      %p510 = scmp.eq.s32.totalorder %s72, 0
      %p511 = por %p509, %p510
      %p512 = scmp.ne.s32.totalorder %s498, %s499
      %p513 = scmp.eq.s32.totalorder %s73, 3
      %p514 = por %p512, %p513
      %p516 = scmp.ne.s32.totalorder %s499, %s515
      %p517 = scmp.eq.s32.totalorder %s73, 0
      %p518 = por %p516, %p517
      %s519 = ssub.s32 %s74, %s86
      %s520 = ssub.s32 %s75, %s82
      %s521 = sor.u32 %s519, %s520
      %p522 = scmp.eq.s32.totalorder %s521, 0
      %s524 = sadd.s32 %s523, 1
      %s525 = scalar_select %p522, %s523, %s524
      %p528 = pneg %p522
      %p529 = scmp.eq.s32.totalorder %s67, 3
      %p530 = por %p528, %p529
      %p531 = scmp.ne.s32.totalorder %s523, %s526
      %p532 = scmp.eq.s32.totalorder %s67, 0
      %p533 = por %p531, %p532
      %p534 = scmp.ne.s32.totalorder %s523, %s526
      %p535 = scmp.eq.s32.totalorder %s72, 3
      %p536 = por %p534, %p535
      %p537 = scmp.ne.s32.totalorder %s526, %s527
      %p538 = scmp.eq.s32.totalorder %s72, 0
      %p539 = por %p537, %p538
      %p540 = scmp.ne.s32.totalorder %s526, %s527
      %p541 = scmp.eq.s32.totalorder %s73, 3
      %p542 = por %p540, %p541
      %p544 = scmp.ne.s32.totalorder %s527, %s543
      %p545 = scmp.eq.s32.totalorder %s73, 0
      %p546 = por %p544, %p545
      %s547 = ssub.s32 %s74, %s86
      %s548 = ssub.s32 %s75, %s82
      %s549 = sor.u32 %s547, %s548
      %p550 = scmp.eq.s32.totalorder %s549, 0
      %s552 = sadd.s32 %s551, 1
      %s553 = scalar_select %p550, %s551, %s552
      %p556 = pneg %p550
      %p557 = scmp.eq.s32.totalorder %s67, 3
      %p558 = por %p556, %p557
      %p559 = scmp.ne.s32.totalorder %s551, %s554
      %p560 = scmp.eq.s32.totalorder %s67, 0
      %p561 = por %p559, %p560
      %p562 = scmp.ne.s32.totalorder %s551, %s554
      %p563 = scmp.eq.s32.totalorder %s72, 3
      %p564 = por %p562, %p563
      %p565 = scmp.ne.s32.totalorder %s554, %s555
      %p566 = scmp.eq.s32.totalorder %s72, 0
      %p567 = por %p565, %p566
      %p568 = scmp.ne.s32.totalorder %s554, %s555
      %p569 = scmp.eq.s32.totalorder %s73, 3
      %p570 = por %p568, %p569
      %p572 = scmp.ne.s32.totalorder %s555, %s571
      %p573 = scmp.eq.s32.totalorder %s73, 0
      %p574 = por %p572, %p573
      %s575 = ssub.s32 %s74, %s86
      %s576 = ssub.s32 %s75, %s82
      %s577 = sor.u32 %s575, %s576
      %p578 = scmp.eq.s32.totalorder %s577, 0
      %s580 = sadd.s32 %s579, 1
      %s581 = scalar_select %p578, %s579, %s580
      %p584 = pneg %p578
      %p585 = scmp.eq.s32.totalorder %s67, 3
      %p586 = por %p584, %p585
      %p587 = scmp.ne.s32.totalorder %s579, %s582
      %p588 = scmp.eq.s32.totalorder %s67, 0
      %p589 = por %p587, %p588
      %p590 = scmp.ne.s32.totalorder %s579, %s582
      %p591 = scmp.eq.s32.totalorder %s72, 3
      %p592 = por %p590, %p591
      %p593 = scmp.ne.s32.totalorder %s582, %s583
      %p594 = scmp.eq.s32.totalorder %s72, 0
      %p595 = por %p593, %p594
      %p596 = scmp.ne.s32.totalorder %s582, %s583
      %p597 = scmp.eq.s32.totalorder %s73, 3
      %p598 = por %p596, %p597
      %p600 = scmp.ne.s32.totalorder %s583, %s599
      %p601 = scmp.eq.s32.totalorder %s73, 0
      %p602 = por %p600, %p601
      %s603 = ssub.s32 %s74, %s86
      %s604 = ssub.s32 %s75, %s82
      %s605 = sor.u32 %s603, %s604
      %p606 = scmp.eq.s32.totalorder %s605, 0
      %s608 = sadd.s32 %s607, 1
      %s609 = scalar_select %p606, %s607, %s608
      %p612 = pneg %p606
      %p613 = scmp.eq.s32.totalorder %s67, 3
      %p614 = por %p612, %p613
      %p615 = scmp.ne.s32.totalorder %s607, %s610
      %p616 = scmp.eq.s32.totalorder %s67, 0
      %p617 = por %p615, %p616
      %p618 = scmp.ne.s32.totalorder %s607, %s610
      %p619 = scmp.eq.s32.totalorder %s72, 3
      %p620 = por %p618, %p619
      %p621 = scmp.ne.s32.totalorder %s610, %s611
      %p622 = scmp.eq.s32.totalorder %s72, 0
      %p623 = por %p621, %p622
      %p624 = scmp.ne.s32.totalorder %s610, %s611
      %p625 = scmp.eq.s32.totalorder %s73, 3
      %p626 = por %p624, %p625
      %p628 = scmp.ne.s32.totalorder %s611, %s627
      %p629 = scmp.eq.s32.totalorder %s73, 0
      %p630 = por %p628, %p629
      %s631 = ssub.s32 %s74, %s86
      %s632 = ssub.s32 %s75, %s82
      %s633 = sor.u32 %s631, %s632
      %p634 = scmp.eq.s32.totalorder %s633, 0
      %s636 = sadd.s32 %s635, 1
      %s637 = scalar_select %p634, %s635, %s636
      %p640 = pneg %p634
      %p641 = scmp.eq.s32.totalorder %s67, 3
      %p642 = por %p640, %p641
      %p643 = scmp.ne.s32.totalorder %s635, %s638
      %p644 = scmp.eq.s32.totalorder %s67, 0
      %p645 = por %p643, %p644
      %p646 = scmp.ne.s32.totalorder %s635, %s638
      %p647 = scmp.eq.s32.totalorder %s72, 3
      %p648 = por %p646, %p647
      %p649 = scmp.ne.s32.totalorder %s638, %s639
      %p650 = scmp.eq.s32.totalorder %s72, 0
      %p651 = por %p649, %p650
      %p652 = scmp.ne.s32.totalorder %s638, %s639
      %p653 = scmp.eq.s32.totalorder %s73, 3
      %p654 = por %p652, %p653
      %p656 = scmp.ne.s32.totalorder %s639, %s655
      %p657 = scmp.eq.s32.totalorder %s73, 0
      %p658 = por %p656, %p657
      %s659 = ssub.s32 %s74, %s86
      %s660 = ssub.s32 %s75, %s82
      %s661 = sor.u32 %s659, %s660
      %p662 = scmp.eq.s32.totalorder %s661, 0
      %s664 = sadd.s32 %s663, 1
      %s665 = scalar_select %p662, %s663, %s664
      %p668 = pneg %p662
      %p669 = scmp.eq.s32.totalorder %s67, 3
      %p670 = por %p668, %p669
      %p671 = scmp.ne.s32.totalorder %s663, %s666
      %p672 = scmp.eq.s32.totalorder %s67, 0
      %p673 = por %p671, %p672
      %p674 = scmp.ne.s32.totalorder %s663, %s666
      %p675 = scmp.eq.s32.totalorder %s72, 3
      %p676 = por %p674, %p675
      %p677 = scmp.ne.s32.totalorder %s666, %s667
      %p678 = scmp.eq.s32.totalorder %s72, 0
      %p679 = por %p677, %p678
      %p680 = scmp.ne.s32.totalorder %s666, %s667
      %p681 = scmp.eq.s32.totalorder %s73, 3
      %p682 = por %p680, %p681
      %p684 = scmp.ne.s32.totalorder %s667, %s683
      %p685 = scmp.eq.s32.totalorder %s73, 0
      %p686 = por %p684, %p685
      %s687 = ssub.s32 %s74, %s86
      %s688 = ssub.s32 %s75, %s82
      %s689 = sor.u32 %s687, %s688
      %p690 = scmp.eq.s32.totalorder %s689, 0
      %s692 = sadd.s32 %s691, 1
      %s693 = scalar_select %p690, %s691, %s692
      %p696 = pneg %p690
      %p697 = scmp.eq.s32.totalorder %s67, 3
      %p698 = por %p696, %p697
      %p699 = scmp.ne.s32.totalorder %s691, %s694
      %p700 = scmp.eq.s32.totalorder %s67, 0
      %p701 = por %p699, %p700
      %p702 = scmp.ne.s32.totalorder %s691, %s694
      %p703 = scmp.eq.s32.totalorder %s72, 3
      %p704 = por %p702, %p703
      %p705 = scmp.ne.s32.totalorder %s694, %s695
      %p706 = scmp.eq.s32.totalorder %s72, 0
      %p707 = por %p705, %p706
      %p708 = scmp.ne.s32.totalorder %s694, %s695
      %p709 = scmp.eq.s32.totalorder %s73, 3
      %p710 = por %p708, %p709
      %p712 = scmp.ne.s32.totalorder %s695, %s711
      %p713 = scmp.eq.s32.totalorder %s73, 0
      %p714 = por %p712, %p713
      %s715 = ssub.s32 %s74, %s86
      %s716 = ssub.s32 %s75, %s82
      %s717 = sor.u32 %s715, %s716
      %p718 = scmp.eq.s32.totalorder %s717, 0
      %s720 = sadd.s32 %s719, 1
      %s721 = scalar_select %p718, %s719, %s720
      %p724 = pneg %p718
      %p725 = scmp.eq.s32.totalorder %s67, 3
      %p726 = por %p724, %p725
      %p727 = scmp.ne.s32.totalorder %s719, %s722
      %p728 = scmp.eq.s32.totalorder %s67, 0
      %p729 = por %p727, %p728
      %p730 = scmp.ne.s32.totalorder %s719, %s722
      %p731 = scmp.eq.s32.totalorder %s72, 3
      %p732 = por %p730, %p731
      %p733 = scmp.ne.s32.totalorder %s722, %s723
      %p734 = scmp.eq.s32.totalorder %s72, 0
      %p735 = por %p733, %p734
      %p736 = scmp.ne.s32.totalorder %s722, %s723
      %p737 = scmp.eq.s32.totalorder %s73, 3
      %p738 = por %p736, %p737
      %p740 = scmp.ne.s32.totalorder %s723, %s739
      %p741 = scmp.eq.s32.totalorder %s73, 0
      %p742 = por %p740, %p741
      %p743 = scmp.le.s32.totalorder 1, %s67
      %p744 = scmp.lt.s32.totalorder %s67, 5
      %p745 = pnand %p743, %p744
      %p746 = pneg %p745
      // Predicated region
      $region9: #{tpu_custom_call.1} parent=5 // pred_check
        _
      $region10: #{tpu_custom_call.1} parent=5 // pred_check_branch
        %748 = sbr.rel (%p745) target = $region12
      $region11: #{tpu_custom_call.1} parent=5 // pred_region
        %s749 = ssub.s32 %s67, 1
        // Predicated region
        $region13: #{tpu_custom_call.1} parent=11 // pred_check
          %p750 = pneg %p224
        $region14: #{tpu_custom_call.1} parent=11 // pred_check_branch
          %752 = sbr.rel (%p750) target = $region16
        $region15: #{tpu_custom_call.1} parent=11 // pred_region
          %754 = vsyncadd [#allocation8], 0
          %s756 = sshll.u32 %s4, 4
          %s757 = int_to_ptr.vmem [resolvable:$true] %s756
          %759 = dma.vmem_to_smem %s757, 16, [#allocation14], [#allocation8]
        $region16: #{tpu_custom_call.1} parent=11 // pred_fallthru
          _
        // Predicated region
        $region17: #{tpu_custom_call.1} parent=11 // pred_check
          %p760 = pneg %p245
        $region18: #{tpu_custom_call.1} parent=11 // pred_check_branch
          %762 = sbr.rel (%p760) target = $region20
        $region19: #{tpu_custom_call.1} parent=11 // pred_region
          _
        $region20: #{tpu_custom_call.1} parent=11 // pred_fallthru
          _
        // Predicated region
        $region21: #{tpu_custom_call.1} parent=11 // pred_check
          %p763 = pneg %p266
        $region22: #{tpu_custom_call.1} parent=11 // pred_check_branch
          %765 = sbr.rel (%p763) target = $region24
        $region23: #{tpu_custom_call.1} parent=11 // pred_region
          %767 = vsyncadd [#allocation16], 0
          %s769 = sshll.u32 %s6, 4
          %s770 = int_to_ptr.vmem [resolvable:$true] %s769
          %772 = dma.vmem_to_smem %s770, 16, [#allocation15], [#allocation16]
        $region24: #{tpu_custom_call.1} parent=11 // pred_fallthru
          _
        // Predicated region
        $region25: #{tpu_custom_call.1} parent=11 // pred_check
          %p773 = pneg %p287
        $region26: #{tpu_custom_call.1} parent=11 // pred_check_branch
          %775 = sbr.rel (%p773) target = $region28
        $region27: #{tpu_custom_call.1} parent=11 // pred_region
          _
        $region28: #{tpu_custom_call.1} parent=11 // pred_fallthru
          _
        // Predicated region
        $region29: #{tpu_custom_call.1} parent=11 // pred_check
          %p776 = pneg %p308
        $region30: #{tpu_custom_call.1} parent=11 // pred_check_branch
          %778 = sbr.rel (%p776) target = $region32
        $region31: #{tpu_custom_call.1} parent=11 // pred_region
          %780 = vsyncadd [#allocation16], 0
          %s782 = sshll.u32 %s8, 4
          %s783 = int_to_ptr.vmem [resolvable:$true] %s782
          %785 = dma.vmem_to_smem %s783, 16, [#allocation17], [#allocation16]
        $region32: #{tpu_custom_call.1} parent=11 // pred_fallthru
          _
        // Predicated region
        $region33: #{tpu_custom_call.1} parent=11 // pred_check
          %p786 = pneg %p329
        $region34: #{tpu_custom_call.1} parent=11 // pred_check_branch
          %788 = sbr.rel (%p786) target = $region36
        $region35: #{tpu_custom_call.1} parent=11 // pred_region
          _
        $region36: #{tpu_custom_call.1} parent=11 // pred_fallthru
          _
        // Predicated region
        $region37: #{tpu_custom_call.1} parent=11 // pred_check
          %p789 = pneg %p350
        $region38: #{tpu_custom_call.1} parent=11 // pred_check_branch
          %791 = sbr.rel (%p789) target = $region40
        $region39: #{tpu_custom_call.1} parent=11 // pred_region
          %793 = vsyncadd [#allocation19], 0
          %s795 = sshll.u32 %s10, 4
          %s796 = int_to_ptr.vmem [resolvable:$true] %s795
          %798 = dma.vmem_to_smem %s796, 16, [#allocation18], [#allocation19]
        $region40: #{tpu_custom_call.1} parent=11 // pred_fallthru
          _
        // Predicated region
        $region41: #{tpu_custom_call.1} parent=11 // pred_check
          %p799 = pneg %p371
        $region42: #{tpu_custom_call.1} parent=11 // pred_check_branch
          %801 = sbr.rel (%p799) target = $region44
        $region43: #{tpu_custom_call.1} parent=11 // pred_region
          %803 = vsyncadd [#allocation19], 0
          %s805 = sshll.u32 %s11, 4
          %s806 = int_to_ptr.vmem [resolvable:$true] %s805
          %808 = dma.vmem_to_smem %s806, 16, [#allocation20], [#allocation19]
        $region44: #{tpu_custom_call.1} parent=11 // pred_fallthru
          _
      $region12: #{tpu_custom_call.1} parent=5 // pred_fallthru
        _
      %p809 = scmp.lt.s32.totalorder %s67, 4
      // Predicated region
      $region45: #{tpu_custom_call.1} parent=5 // pred_check
        %p810 = pneg %p809
      $region46: #{tpu_custom_call.1} parent=5 // pred_check_branch
        %812 = sbr.rel (%p810) target = $region48
      $region47: #{tpu_custom_call.1} parent=5 // pred_region
        // Predicated region
        $region49: #{tpu_custom_call.1} parent=47 // pred_check
          %p813 = pneg %p101
        $region50: #{tpu_custom_call.1} parent=47 // pred_check_branch
          %815 = sbr.rel (%p813) target = $region52
        $region51: #{tpu_custom_call.1} parent=47 // pred_region
          %s816 = sand.u32 %s91, 1
          %s817 = scalar_lea.sflag [#allocation6], %s816
          %s818 = sand.u32 %s91, 1
          %s819 = smul.addr %s818, 24
          %s820 = scalar_lea.vmem [#allocation5], %s819
          %822 = vsyncadd %s817, 0
          %s823 = smul.addr %s74, 6
          %s824 = sadd.s32 %s75, %s823
          %s825 = smul.addr %s824, 8
          %s826 = scalar_lea.hbm %s0, %s825
          %s827 = sshll.u32 %s826, 4
          %s828 = int_to_ptr.hbm [resolvable:$true] %s827
          %s829 = sshll.u32 %s820, 4
          %s830 = int_to_ptr.vmem [resolvable:$true] %s829
          %835 = dma.hbm_to_vmem [thread:$0]  %s828, 384, %s830, %s817, 256, 128, 8
        $region52: #{tpu_custom_call.1} parent=47 // pred_fallthru
          _
        // Predicated region
        $region53: #{tpu_custom_call.1} parent=47 // pred_check
          %p836 = pneg %p135
        $region54: #{tpu_custom_call.1} parent=47 // pred_check_branch
          %838 = sbr.rel (%p836) target = $region56
        $region55: #{tpu_custom_call.1} parent=47 // pred_region
          %s839 = sand.u32 %s67, 1
          %s840 = scalar_lea.sflag [#allocation10], %s839
          %s841 = sand.u32 %s125, 1
          %s842 = smul.addr %s841, 24
          %s843 = scalar_lea.vmem [#allocation9], %s842
          %s844 = ssub.s32 %s75, 1
          %p845 = scmp.gt.s32.totalorder %s844, 0
          %s846 = scalar_select %p845, %s844, 0
          %848 = vsyncadd %s840, 0
          %s849 = smul.addr %s74, 6
          %s850 = sadd.s32 %s846, %s849
          %s851 = smul.addr %s850, 8
          %s852 = scalar_lea.hbm %s1, %s851
          %s853 = sshll.u32 %s852, 4
          %s854 = int_to_ptr.hbm [resolvable:$true] %s853
          %s855 = sshll.u32 %s843, 4
          %s856 = int_to_ptr.vmem [resolvable:$true] %s855
          %861 = dma.hbm_to_vmem [thread:$0]  %s854, 384, %s856, %s840, 256, 128, 8
        $region56: #{tpu_custom_call.1} parent=47 // pred_fallthru
          _
        // Predicated region
        $region57: #{tpu_custom_call.1} parent=47 // pred_check
          %p862 = pneg %p169
        $region58: #{tpu_custom_call.1} parent=47 // pred_check_branch
          %864 = sbr.rel (%p862) target = $region60
        $region59: #{tpu_custom_call.1} parent=47 // pred_region
          %s865 = sand.u32 %s67, 1
          %s866 = scalar_lea.sflag [#allocation10], %s865
          %s867 = sand.u32 %s159, 1
          %s868 = smul.addr %s867, 24
          %s869 = scalar_lea.vmem [#allocation11], %s868
          %s870 = sadd.s32 %s75, 1
          %p871 = scmp.lt.s32.totalorder %s870, 1
          %s872 = scalar_select %p871, %s870, 1
          %874 = vsyncadd %s866, 0
          %s875 = smul.addr %s74, 6
          %s876 = sadd.s32 %s872, %s875
          %s877 = smul.addr %s876, 8
          %s878 = scalar_lea.hbm %s2, %s877
          %s879 = sshll.u32 %s878, 4
          %s880 = int_to_ptr.hbm [resolvable:$true] %s879
          %s881 = sshll.u32 %s869, 4
          %s882 = int_to_ptr.vmem [resolvable:$true] %s881
          %887 = dma.hbm_to_vmem [thread:$0]  %s880, 384, %s882, %s866, 256, 128, 8
        $region60: #{tpu_custom_call.1} parent=47 // pred_fallthru
          _
        // Predicated region
        $region61: #{tpu_custom_call.1} parent=47 // pred_check
          %p888 = pneg %p197
        $region62: #{tpu_custom_call.1} parent=47 // pred_check_branch
          %890 = sbr.rel (%p888) target = $region64
        $region63: #{tpu_custom_call.1} parent=47 // pred_region
          %s891 = sand.u32 %s187, 1
          %s892 = scalar_lea.sflag [#allocation13], %s891
          %s893 = sand.u32 %s187, 1
          %s894 = smul.addr %s893, 24
          %s895 = scalar_lea.vmem [#allocation12], %s894
          %897 = vsyncadd %s892, 0
          %s898 = smul.addr %s74, 6
          %s899 = sadd.s32 %s75, %s898
          %s900 = smul.addr %s899, 8
          %s901 = scalar_lea.hbm %s3, %s900
          %s902 = sshll.u32 %s901, 4
          %s903 = int_to_ptr.hbm [resolvable:$true] %s902
          %s904 = sshll.u32 %s895, 4
          %s905 = int_to_ptr.vmem [resolvable:$true] %s904
          %910 = dma.hbm_to_vmem [thread:$0]  %s903, 384, %s905, %s892, 256, 128, 8
        $region64: #{tpu_custom_call.1} parent=47 // pred_fallthru
          _
      $region48: #{tpu_custom_call.1} parent=5 // pred_fallthru
        _
      %p911 = scmp.le.s32.totalorder 1, %s67
      %p912 = scmp.lt.s32.totalorder %s67, 5
      %p913 = pnand %p911, %p912
      %p914 = pneg %p913
      // Predicated region
      $region65: #{tpu_custom_call.1} parent=5 // pred_check
        _
      $region66: #{tpu_custom_call.1} parent=5 // pred_check_branch
        %916 = sbr.rel (%p913) target = $region68
      $region67: #{tpu_custom_call.1} parent=5 // pred_region
        %s917 = ssub.s32 %s67, 1
        %s918 = sand.u32 %s94, 1
        %s919 = scalar_lea.sflag [#allocation6], %s918
        %s920 = sand.u32 %s94, 1
        %s921 = smul.addr %s920, 24
        %s922 = scalar_lea.vmem [#allocation5], %s921
        // Predicated region
        $region69: #{tpu_custom_call.1} parent=67 // pred_check
          %p923 = pneg %p107
        $region70: #{tpu_custom_call.1} parent=67 // pred_check_branch
          %925 = sbr.rel (%p923) target = $region72
        $region71: #{tpu_custom_call.1} parent=67 // pred_region
          %927 = dma.done %s919, 384
        $region72: #{tpu_custom_call.1} parent=67 // pred_fallthru
          _
        %s928 = sand.u32 %s72, 1
        %s929 = scalar_lea.sflag [#allocation10], %s928
        %s930 = sand.u32 %s128, 1
        %s931 = smul.addr %s930, 24
        %s932 = scalar_lea.vmem [#allocation9], %s931
        // Predicated region
        $region73: #{tpu_custom_call.1} parent=67 // pred_check
          %p933 = pneg %p141
        $region74: #{tpu_custom_call.1} parent=67 // pred_check_branch
          %935 = sbr.rel (%p933) target = $region76
        $region75: #{tpu_custom_call.1} parent=67 // pred_region
          %937 = dma.done %s929, 384
        $region76: #{tpu_custom_call.1} parent=67 // pred_fallthru
          _
        %s938 = sand.u32 %s72, 1
        %s939 = scalar_lea.sflag [#allocation10], %s938
        %s940 = sand.u32 %s162, 1
        %s941 = smul.addr %s940, 24
        %s942 = scalar_lea.vmem [#allocation11], %s941
        // Predicated region
        $region77: #{tpu_custom_call.1} parent=67 // pred_check
          %p943 = pneg %p175
        $region78: #{tpu_custom_call.1} parent=67 // pred_check_branch
          %945 = sbr.rel (%p943) target = $region80
        $region79: #{tpu_custom_call.1} parent=67 // pred_region
          %947 = dma.done %s939, 384
        $region80: #{tpu_custom_call.1} parent=67 // pred_fallthru
          _
        %s948 = sand.u32 %s190, 1
        %s949 = scalar_lea.sflag [#allocation13], %s948
        %s950 = sand.u32 %s190, 1
        %s951 = smul.addr %s950, 24
        %s952 = scalar_lea.vmem [#allocation12], %s951
        // Predicated region
        $region81: #{tpu_custom_call.1} parent=67 // pred_check
          %p953 = pneg %p203
        $region82: #{tpu_custom_call.1} parent=67 // pred_check_branch
          %955 = sbr.rel (%p953) target = $region84
        $region83: #{tpu_custom_call.1} parent=67 // pred_region
          %957 = dma.done %s949, 384
        $region84: #{tpu_custom_call.1} parent=67 // pred_fallthru
          _
        // Predicated region
        $region85: #{tpu_custom_call.1} parent=67 // pred_check
          %p958 = pneg %p224
        $region86: #{tpu_custom_call.1} parent=67 // pred_check_branch
          %960 = sbr.rel (%p958) target = $region88
        $region87: #{tpu_custom_call.1} parent=67 // pred_region
          %962 = dma.done [#allocation8], 16
        $region88: #{tpu_custom_call.1} parent=67 // pred_fallthru
          _
        // Predicated region
        $region89: #{tpu_custom_call.1} parent=67 // pred_check
          %p963 = pneg %p266
        $region90: #{tpu_custom_call.1} parent=67 // pred_check_branch
          %965 = sbr.rel (%p963) target = $region92
        $region91: #{tpu_custom_call.1} parent=67 // pred_region
          %967 = dma.done [#allocation16], 16
        $region92: #{tpu_custom_call.1} parent=67 // pred_fallthru
          _
        // Predicated region
        $region93: #{tpu_custom_call.1} parent=67 // pred_check
          %p968 = pneg %p308
        $region94: #{tpu_custom_call.1} parent=67 // pred_check_branch
          %970 = sbr.rel (%p968) target = $region96
        $region95: #{tpu_custom_call.1} parent=67 // pred_region
          %972 = dma.done [#allocation16], 16
        $region96: #{tpu_custom_call.1} parent=67 // pred_fallthru
          _
        // Predicated region
        $region97: #{tpu_custom_call.1} parent=67 // pred_check
          %p973 = pneg %p350
        $region98: #{tpu_custom_call.1} parent=67 // pred_check_branch
          %975 = sbr.rel (%p973) target = $region100
        $region99: #{tpu_custom_call.1} parent=67 // pred_region
          %977 = dma.done [#allocation19], 16
        $region100: #{tpu_custom_call.1} parent=67 // pred_fallthru
          _
        // Predicated region
        $region101: #{tpu_custom_call.1} parent=67 // pred_check
          %p978 = pneg %p371
        $region102: #{tpu_custom_call.1} parent=67 // pred_check_branch
          %980 = sbr.rel (%p978) target = $region104
        $region103: #{tpu_custom_call.1} parent=67 // pred_region
          %982 = dma.done [#allocation19], 16
        $region104: #{tpu_custom_call.1} parent=67 // pred_fallthru
          _
        %983 = sfence
        %s984 = sand.u32 %s94, 1
        %s985 = scalar_lea.sflag [#allocation6], %s984
        %s986 = sand.u32 %s94, 1
        %s987 = smul.addr %s986, 24
        %s988 = scalar_lea.vmem [#allocation5], %s987
        %p989 = pneg %p107
        %p990 = pneg %p104
        %s991 = sand.u32 %s72, 1
        %s992 = scalar_lea.sflag [#allocation10], %s991
        %s993 = sand.u32 %s128, 1
        %s994 = smul.addr %s993, 24
        %s995 = scalar_lea.vmem [#allocation9], %s994
        %p996 = pneg %p141
        %p997 = pneg %p138
        %s998 = sand.u32 %s72, 1
        %s999 = scalar_lea.sflag [#allocation10], %s998
        %s1000 = sand.u32 %s162, 1
        %s1001 = smul.addr %s1000, 24
        %s1002 = scalar_lea.vmem [#allocation11], %s1001
        %p1003 = pneg %p175
        %p1004 = pneg %p172
        %s1005 = sand.u32 %s190, 1
        %s1006 = scalar_lea.sflag [#allocation13], %s1005
        %s1007 = sand.u32 %s190, 1
        %s1008 = smul.addr %s1007, 24
        %s1009 = scalar_lea.vmem [#allocation12], %s1008
        %p1010 = pneg %p203
        %p1011 = pneg %p200
        %p1012 = pneg %p224
        %p1013 = pneg %p221
        %p1014 = pneg %p245
        %p1015 = pneg %p242
        %p1016 = pneg %p266
        %p1017 = pneg %p263
        %p1018 = pneg %p287
        %p1019 = pneg %p284
        %p1020 = pneg %p308
        %p1021 = pneg %p305
        %p1022 = pneg %p329
        %p1023 = pneg %p326
        %p1024 = pneg %p350
        %p1025 = pneg %p347
        %p1026 = pneg %p371
        %p1027 = pneg %p368
        %p1028 = pneg %p399
        %p1029 = pneg %p396
        %s1030 = sand.u32 %s386, 1
        %s1031 = scalar_lea.sflag [#allocation7], %s1030
        %s1032 = sand.u32 %s386, 1
        %s1033 = smul.addr %s1032, 8
        %s1034 = scalar_lea.vmem [#allocation21], %s1033
        %p1035 = pneg %p427
        %p1036 = pneg %p424
        %s1037 = sand.u32 %s72, 1
        %s1038 = scalar_lea.sflag [#allocation23], %s1037
        %s1039 = sand.u32 %s414, 1
        %s1040 = smul.addr %s1039, 8
        %s1041 = scalar_lea.vmem [#allocation22], %s1040
        %p1042 = pneg %p455
        %p1043 = pneg %p452
        %s1044 = sand.u32 %s72, 1
        %s1045 = scalar_lea.sflag [#allocation23], %s1044
        %s1046 = sand.u32 %s442, 1
        %s1047 = smul.addr %s1046, 40
        %s1048 = scalar_lea.vmem [#allocation24], %s1047
        %p1049 = pneg %p483
        %p1050 = pneg %p480
        %s1051 = sand.u32 %s72, 1
        %s1052 = scalar_lea.sflag [#allocation26], %s1051
        %s1053 = sand.u32 %s470, 1
        %s1054 = smul.addr %s1053, 8
        %s1055 = scalar_lea.vmem [#allocation25], %s1054
        %p1056 = pneg %p511
        %p1057 = pneg %p508
        %s1058 = sand.u32 %s72, 1
        %s1059 = scalar_lea.sflag [#allocation26], %s1058
        %s1060 = sand.u32 %s498, 1
        %s1061 = smul.addr %s1060, 40
        %s1062 = scalar_lea.vmem [#allocation27], %s1061
        %p1063 = pneg %p539
        %p1064 = pneg %p536
        %s1065 = sand.u32 %s72, 1
        %s1066 = scalar_lea.sflag [#allocation29], %s1065
        %s1067 = sand.u32 %s526, 1
        %s1068 = smul.addr %s1067, 40
        %s1069 = scalar_lea.vmem [#allocation28], %s1068
        %p1070 = pneg %p567
        %p1071 = pneg %p564
        %s1072 = sand.u32 %s72, 1
        %s1073 = scalar_lea.sflag [#allocation29], %s1072
        %s1074 = sand.u32 %s554, 1
        %s1075 = smul.addr %s1074, 8
        %s1076 = scalar_lea.vmem [#allocation30], %s1075
        %p1077 = pneg %p595
        %p1078 = pneg %p592
        %s1079 = sand.u32 %s72, 1
        %s1080 = scalar_lea.sflag [#allocation32], %s1079
        %s1081 = sand.u32 %s582, 1
        %s1082 = smul.addr %s1081, 24
        %s1083 = scalar_lea.vmem [#allocation31], %s1082
        %p1084 = pneg %p623
        %p1085 = pneg %p620
        %s1086 = sand.u32 %s72, 1
        %s1087 = scalar_lea.sflag [#allocation32], %s1086
        %s1088 = sand.u32 %s610, 1
        %s1089 = smul.addr %s1088, 8
        %s1090 = scalar_lea.vmem [#allocation33], %s1089
        %p1091 = pneg %p651
        %p1092 = pneg %p648
        %s1093 = sand.u32 %s72, 1
        %s1094 = scalar_lea.sflag [#allocation35], %s1093
        %s1095 = sand.u32 %s638, 1
        %s1096 = smul.addr %s1095, 8
        %s1097 = scalar_lea.vmem [#allocation34], %s1096
        %p1098 = pneg %p679
        %p1099 = pneg %p676
        %s1100 = sand.u32 %s72, 1
        %s1101 = scalar_lea.sflag [#allocation35], %s1100
        %s1102 = sand.u32 %s666, 1
        %s1103 = smul.addr %s1102, 8
        %s1104 = scalar_lea.vmem [#allocation36], %s1103
        %p1105 = pneg %p707
        %p1106 = pneg %p704
        %s1107 = sand.u32 %s72, 1
        %s1108 = scalar_lea.sflag [#allocation38], %s1107
        %s1109 = sand.u32 %s694, 1
        %s1110 = smul.addr %s1109, 8
        %s1111 = scalar_lea.vmem [#allocation37], %s1110
        %p1112 = pneg %p735
        %p1113 = pneg %p732
        %s1114 = sand.u32 %s72, 1
        %s1115 = scalar_lea.sflag [#allocation38], %s1114
        %s1116 = sand.u32 %s722, 1
        %s1117 = smul.addr %s1116, 8
        %s1118 = scalar_lea.vmem [#allocation39], %s1117
        %s1119 = ssub.s32 %s77, 1
        %p1120 = scmp.gt.s32.totalorder %s1119, 0
        %s1121 = scalar_select %p1120, %s1119, 0
        %s1122 = sadd.s32 %s77, 1
        %p1123 = scmp.lt.s32.totalorder %s1122, 1
        %s1124 = scalar_select %p1123, %s1122, 1
        %p1125 = scmp.eq.s32.totalorder %s77, 0
        %p1126 = scmp.eq.s32.totalorder %s77, 1
        %v1127 = vld [vmem:[%s932] sm:$0xff]
        %s1128 = scalar_select %p1125, 1, 0
        %v1129 = vstv %s1128
        %vm1130 = vcmp.eq.s32.totalorder %v1129, 1
        %v1131 = vsel %vm1130, 0.0, %v1127
        %v1132 = vld [vmem:[%s942] sm:$0xff]
        %s1133 = scalar_select %p1126, 1, 0
        %v1134 = vstv %s1133
        %vm1135 = vcmp.eq.s32.totalorder %v1134, 1
        %v1136 = vsel %vm1135, 0.0, %v1132
        %v1137 = vld [vmem:[%s922] sm:$0xff]
        %s1138 = scalar_lea.vmem %s932, 8 [#allocation9]
        %v1139 = vld [vmem:[%s1138] sm:$0xff]
        %v1140 = vsel %vm1130, 0.0, %v1139
        %s1141 = scalar_lea.vmem %s942, 8 [#allocation11]
        %v1142 = vld [vmem:[%s1141] sm:$0xff]
        %v1143 = vsel %vm1135, 0.0, %v1142
        %s1144 = scalar_lea.vmem %s922, 8 [#allocation5]
        %v1145 = vld [vmem:[%s1144] sm:$0xff]
        %s1146 = scalar_lea.vmem %s932, 16 [#allocation9]
        %v1147 = vld [vmem:[%s1146] sm:$0xff]
        %v1148 = vsel %vm1130, 0.0, %v1147
        %s1149 = scalar_lea.vmem %s942, 16 [#allocation11]
        %v1150 = vld [vmem:[%s1149] sm:$0xff]
        %v1151 = vsel %vm1135, 0.0, %v1150
        %s1152 = scalar_lea.vmem %s922, 16 [#allocation5]
        %v1153 = vld [vmem:[%s1152] sm:$0xff]
        %s1154 = smul.u32 %s77, 8
        %s1155 = ssub.s32 %s1154, 8
        %v1156 = vlaneseq
        %v1157 = vshrl.u32 %v1156, 7
        %v1158 = vadd.s32 %v1157, 8
        %v1159 = vadd.s32 %v1157, 16
        %v1160 = vstv %s1155
        %v1161 = vadd.s32 %v1160, %v1157
        %v1162 = vadd.s32 %v1160, %v1158
        %v1163 = vadd.s32 %v1160, %v1159
        %v1164 = vlaneseq
        %v1165 = vand.u32 %v1164, 127
        %vm1166 = vcmp.ge.s32.totalorder %v1161, 0
        %vm1167 = vcmp.ge.s32.totalorder %v1162, 0
        %vm1168 = vcmp.ge.s32.totalorder %v1163, 0
        %vm1169 = vcmp.lt.s32.totalorder %v1161, 16
        %vm1170 = vcmp.lt.s32.totalorder %v1162, 16
        %vm1171 = vcmp.lt.s32.totalorder %v1163, 16
        %vm1172 = vmand %vm1166, %vm1169
        %vm1173 = vmand %vm1167, %vm1170
        %vm1174 = vmand %vm1168, %vm1171
        %vm1175 = vcmp.lt.s32.totalorder %v1165, 16
        %vm1176 = vmand %vm1172, %vm1175
        %vm1177 = vmand %vm1173, %vm1175
        %vm1178 = vmand %vm1174, %vm1175
        %v1179 = vmul.f32 %v1131, 0.299
        %v1180 = vmul.f32 %v1137, 0.299
        %v1181 = vmul.f32 %v1136, 0.299
        %v1182 = vmul.f32 %v1140, 0.587
        %v1183 = vmul.f32 %v1145, 0.587
        %v1184 = vmul.f32 %v1143, 0.587
        %v1185 = vadd.f32 %v1179, %v1182
        %v1186 = vadd.f32 %v1180, %v1183
        %v1187 = vadd.f32 %v1181, %v1184
        %v1188 = vmul.f32 %v1148, 0.114
        %v1189 = vmul.f32 %v1153, 0.114
        %v1190 = vmul.f32 %v1151, 0.114
        %v1191 = vadd.f32 %v1185, %v1188
        %v1192 = vadd.f32 %v1186, %v1189
        %v1193 = vadd.f32 %v1187, %v1190
        %v1194 = vsub.f32 %v1148, %v1191
        %v1195 = vsub.f32 %v1153, %v1192
        %v1196 = vsub.f32 %v1151, %v1193
        %v1197 = vmul.f32 %v1194, 0.564
        %v1198 = vmul.f32 %v1195, 0.564
        %v1199 = vmul.f32 %v1196, 0.564
        %v1200 = vadd.f32 %v1197, 0.5
        %v1201 = vadd.f32 %v1198, 0.5
        %v1202 = vadd.f32 %v1199, 0.5
        %v1203 = vsub.f32 %v1131, %v1191
        %v1204 = vsub.f32 %v1137, %v1192
        %v1205 = vsub.f32 %v1136, %v1193
        %v1206 = vmul.f32 %v1203, 0.713
        %v1207 = vmul.f32 %v1204, 0.713
        %v1208 = vmul.f32 %v1205, 0.713
        %v1209 = vadd.f32 %v1206, 0.5
        %v1210 = vadd.f32 %v1207, 0.5
        %v1211 = vadd.f32 %v1208, 0.5
        %1212 = vrot.lane.b32.xlu0 %v1191, 1
        %v1213 = vpop.permute.xlu0 %1212
        %1214 = vrot.lane.b32.xlu0 %v1192, 1
        %v1215 = vpop.permute.xlu0 %1214
        %1216 = vrot.lane.b32.xlu0 %v1193, 1
        %v1217 = vpop.permute.xlu0 %1216
        %v1218 = vrot.slane %v1213, 7
        %v1219 = vrot.slane %v1215, 7
        %v1220 = vrot.slane %v1217, 7
        %vm1221 = vcmp.lt.s32.totalorder %v1157, 1
        %v1222 = vsel %vm1221, %v1219, %v1220
        %v1223 = vsel %vm1221, %v1218, %v1219
        %v1224 = vsel %vm1221, %v1220, %v1218
        %s1225 = sld [smem:[#allocation14]]
        %v1226 = vstv %s1225
        %v1227 = vmul.f32 %v1224, %v1226
        %v1228 = vmul.f32 %v1223, %v1226
        %v1229 = vmul.f32 %v1222, %v1226
        %s1230 = sld [smem:[#allocation14 + $0x3]]
        %v1231 = vstv %s1230
        %v1232 = vmul.f32 %v1213, %v1231
        %v1233 = vmul.f32 %v1215, %v1231
        %v1234 = vmul.f32 %v1217, %v1231
        %v1235 = vadd.f32 %v1227, %v1232
        %v1236 = vadd.f32 %v1228, %v1233
        %v1237 = vadd.f32 %v1229, %v1234
        %v1238 = vrot.slane %v1213, 1
        %v1239 = vrot.slane %v1215, 1
        %v1240 = vrot.slane %v1217, 1
        %vm1241 = vcmp.lt.s32.totalorder %v1157, 7
        %v1242 = vsel %vm1241, %v1239, %v1240
        %v1243 = vsel %vm1241, %v1238, %v1239
        %v1244 = vsel %vm1241, %v1240, %v1238
        %s1245 = sld [smem:[#allocation14 + $0x6]]
        %v1246 = vstv %s1245
        %v1247 = vmul.f32 %v1243, %v1246
        %v1248 = vmul.f32 %v1242, %v1246
        %v1249 = vmul.f32 %v1244, %v1246
        %v1250 = vadd.f32 %v1235, %v1247
        %v1251 = vadd.f32 %v1236, %v1248
        %v1252 = vadd.f32 %v1237, %v1249
        %v1253 = vrot.slane %v1191, 7
        %v1254 = vrot.slane %v1192, 7
        %v1255 = vrot.slane %v1193, 7
        %v1256 = vsel %vm1221, %v1254, %v1255
        %v1257 = vsel %vm1221, %v1253, %v1254
        %v1258 = vsel %vm1221, %v1255, %v1253
        %s1259 = sld [smem:[#allocation14 + $0x1]]
        %v1260 = vstv %s1259
        %v1261 = vmul.f32 %v1258, %v1260
        %v1262 = vmul.f32 %v1257, %v1260
        %v1263 = vmul.f32 %v1256, %v1260
        %v1264 = vadd.f32 %v1250, %v1261
        %v1265 = vadd.f32 %v1251, %v1262
        %v1266 = vadd.f32 %v1252, %v1263
        %s1267 = sld [smem:[#allocation14 + $0x4]]
        %v1268 = vstv %s1267
        %v1269 = vmul.f32 %v1191, %v1268
        %v1270 = vmul.f32 %v1192, %v1268
        %v1271 = vmul.f32 %v1193, %v1268
        %v1272 = vadd.f32 %v1264, %v1269
        %v1273 = vadd.f32 %v1265, %v1270
        %v1274 = vadd.f32 %v1266, %v1271
        %v1275 = vrot.slane %v1191, 1
        %v1276 = vrot.slane %v1192, 1
        %v1277 = vrot.slane %v1193, 1
        %v1278 = vsel %vm1241, %v1276, %v1277
        %v1279 = vsel %vm1241, %v1275, %v1276
        %v1280 = vsel %vm1241, %v1277, %v1275
        %s1281 = sld [smem:[#allocation14 + $0x7]]
        %v1282 = vstv %s1281
        %v1283 = vmul.f32 %v1279, %v1282
        %v1284 = vmul.f32 %v1278, %v1282
        %v1285 = vmul.f32 %v1280, %v1282
        %v1286 = vadd.f32 %v1272, %v1283
        %v1287 = vadd.f32 %v1273, %v1284
        %v1288 = vadd.f32 %v1274, %v1285
        %1289 = vrot.lane.b32.xlu0 %v1191, 127
        %v1290 = vpop.permute.xlu0 %1289
        %1291 = vrot.lane.b32.xlu0 %v1192, 127
        %v1292 = vpop.permute.xlu0 %1291
        %1293 = vrot.lane.b32.xlu0 %v1193, 127
        %v1294 = vpop.permute.xlu0 %1293
        %v1295 = vrot.slane %v1290, 7
        %v1296 = vrot.slane %v1292, 7
        %v1297 = vrot.slane %v1294, 7
        %v1298 = vsel %vm1221, %v1296, %v1297
        %v1299 = vsel %vm1221, %v1295, %v1296
        %v1300 = vsel %vm1221, %v1297, %v1295
        %s1301 = sld [smem:[#allocation14 + $0x2]]
        %v1302 = vstv %s1301
        %v1303 = vmul.f32 %v1300, %v1302
        %v1304 = vmul.f32 %v1299, %v1302
        %v1305 = vmul.f32 %v1298, %v1302
        %v1306 = vadd.f32 %v1286, %v1303
        %v1307 = vadd.f32 %v1287, %v1304
        %v1308 = vadd.f32 %v1288, %v1305
        %s1309 = sld [smem:[#allocation14 + $0x5]]
        %v1310 = vstv %s1309
        %v1311 = vmul.f32 %v1290, %v1310
        %v1312 = vmul.f32 %v1292, %v1310
        %v1313 = vmul.f32 %v1294, %v1310
        %v1314 = vadd.f32 %v1306, %v1311
        %v1315 = vadd.f32 %v1307, %v1312
        %v1316 = vadd.f32 %v1308, %v1313
        %v1317 = vrot.slane %v1290, 1
        %v1318 = vrot.slane %v1292, 1
        %v1319 = vrot.slane %v1294, 1
        %v1320 = vsel %vm1241, %v1318, %v1319
        %v1321 = vsel %vm1241, %v1317, %v1318
        %v1322 = vsel %vm1241, %v1319, %v1317
        %s1323 = sld [smem:[#allocation14 + $0x8]]
        %v1324 = vstv %s1323
        %v1325 = vmul.f32 %v1321, %v1324
        %v1326 = vmul.f32 %v1320, %v1324
        %v1327 = vmul.f32 %v1322, %v1324
        %v1328 = vadd.f32 %v1314, %v1325
        %v1329 = vadd.f32 %v1315, %v1326
        %v1330 = vadd.f32 %v1316, %v1327
        %s1331 = sld [smem:[#allocation2]]
        %v1332 = vstv %s1331
        %v1333 = vadd.f32 %v1328, %v1332
        %v1334 = vadd.f32 %v1329, %v1332
        %v1335 = vadd.f32 %v1330, %v1332
        %v1336 = vmax.f32 %v1333, 0.0
        %v1337 = vmax.f32 %v1334, 0.0
        %v1338 = vmax.f32 %v1335, 0.0
        %v1339 = vmin.f32 %v1336, 1.0
        %v1340 = vmin.f32 %v1337, 1.0
        %v1341 = vmin.f32 %v1338, 1.0
        %v1342 = vmax.f32 %v1339, 1e-06
        %v1343 = vmax.f32 %v1340, 1e-06
        %v1344 = vmax.f32 %v1341, 1e-06
        %v1345 = vrcp.pop %v1342
        %v1346 = vmul.f32 %v1342, %v1345
        %v1347 = vsub.f32 1.0, %v1346
        %v1348 = vmul.f32 %v1345, %v1347
        %v1349 = vadd.f32 %v1345, %v1348
        %vm1350 = vweird.f32 %v1342
        %vm1351 = vweird.f32 %v1345
        %vm1352 = vmor %vm1350, %vm1351
        %v1353 = vsel %vm1352, %v1345, %v1349
        %v1354 = vand.u32 2147483647, %v1342
        %vm1355 = vcmp.eq.f32.partialorder %v1354, 8.507059e+37
        %v1356 = vand.u32 %v1342, 2147483648
        %v1357 = vor.u32 1.1754944e-38, %v1356
        %v1358 = vsel %vm1355, %v1357, %v1353
        %v1359 = vmul.f32 %v1191, %v1358
        %v1360 = vrcp.pop %v1343
        %v1361 = vmul.f32 %v1343, %v1360
        %v1362 = vsub.f32 1.0, %v1361
        %v1363 = vmul.f32 %v1360, %v1362
        %v1364 = vadd.f32 %v1360, %v1363
        %vm1365 = vweird.f32 %v1343
        %vm1366 = vweird.f32 %v1360
        %vm1367 = vmor %vm1365, %vm1366
        %v1368 = vsel %vm1367, %v1360, %v1364
        %v1369 = vand.u32 2147483647, %v1343
        %vm1370 = vcmp.eq.f32.partialorder %v1369, 8.507059e+37
        %v1371 = vand.u32 %v1343, 2147483648
        %v1372 = vor.u32 1.1754944e-38, %v1371
        %v1373 = vsel %vm1370, %v1372, %v1368
        %v1374 = vmul.f32 %v1192, %v1373
        %v1375 = vrcp.pop %v1344
        %v1376 = vmul.f32 %v1344, %v1375
        %v1377 = vsub.f32 1.0, %v1376
        %v1378 = vmul.f32 %v1375, %v1377
        %v1379 = vadd.f32 %v1375, %v1378
        %vm1380 = vweird.f32 %v1344
        %vm1381 = vweird.f32 %v1375
        %vm1382 = vmor %vm1380, %vm1381
        %v1383 = vsel %vm1382, %v1375, %v1379
        %v1384 = vand.u32 2147483647, %v1344
        %vm1385 = vcmp.eq.f32.partialorder %v1384, 8.507059e+37
        %v1386 = vand.u32 %v1344, 2147483648
        %v1387 = vor.u32 1.1754944e-38, %v1386
        %v1388 = vsel %vm1385, %v1387, %v1383
        %v1389 = vmul.f32 %v1193, %v1388
        %v1390 = vsub.f32 0.0, %v1339
        %v1391 = vsub.f32 0.0, %v1340
        %v1392 = vsub.f32 0.0, %v1341
        %v1393 = vmul.f32 %v1390, 1.442695
        %v1394 = vpow.pop %v1393
        %v1395 = vmul.f32 %v1391, 1.442695
        %v1396 = vpow.pop %v1395
        %v1397 = vmul.f32 %v1392, 1.442695
        %v1398 = vpow.pop %v1397
        %v1399 = vmul.f32 %v1394, %v1333
        %v1400 = vmul.f32 %v1396, %v1334
        %v1401 = vmul.f32 %v1398, %v1335
        %v1402 = vsel %vm1176, %v1399, 0.0
        %v1403 = vsel %vm1177, %v1400, 0.0
        %v1404 = vsel %vm1178, %v1401, 0.0
        %1405 = vrot.lane.b32.xlu0 %v1359, 1
        %v1406 = vpop.permute.xlu0 %1405
        %1407 = vrot.lane.b32.xlu0 %v1374, 1
        %v1408 = vpop.permute.xlu0 %1407
        %1409 = vrot.lane.b32.xlu0 %v1389, 1
        %v1410 = vpop.permute.xlu0 %1409
        %v1411 = vrot.slane %v1406, 7
        %v1412 = vrot.slane %v1408, 7
        %v1413 = vrot.slane %v1410, 7
        %v1414 = vsel %vm1221, %v1412, %v1413
        %v1415 = vsel %vm1221, %v1411, %v1412
        %v1416 = vsel %vm1221, %v1413, %v1411
        %s1417 = sld [smem:[#allocation15]]
        %v1418 = vstv %s1417
        %v1419 = vmul.f32 %v1416, %v1418
        %v1420 = vmul.f32 %v1415, %v1418
        %v1421 = vmul.f32 %v1414, %v1418
        %s1422 = sld [smem:[#allocation15 + $0x3]]
        %v1423 = vstv %s1422
        %v1424 = vmul.f32 %v1406, %v1423
        %v1425 = vmul.f32 %v1408, %v1423
        %v1426 = vmul.f32 %v1410, %v1423
        %v1427 = vadd.f32 %v1419, %v1424
        %v1428 = vadd.f32 %v1420, %v1425
        %v1429 = vadd.f32 %v1421, %v1426
        %v1430 = vrot.slane %v1406, 1
        %v1431 = vrot.slane %v1408, 1
        %v1432 = vrot.slane %v1410, 1
        %v1433 = vsel %vm1241, %v1431, %v1432
        %v1434 = vsel %vm1241, %v1430, %v1431
        %v1435 = vsel %vm1241, %v1432, %v1430
        %s1436 = sld [smem:[#allocation15 + $0x6]]
        %v1437 = vstv %s1436
        %v1438 = vmul.f32 %v1434, %v1437
        %v1439 = vmul.f32 %v1433, %v1437
        %v1440 = vmul.f32 %v1435, %v1437
        %v1441 = vadd.f32 %v1427, %v1438
        %v1442 = vadd.f32 %v1428, %v1439
        %v1443 = vadd.f32 %v1429, %v1440
        %v1444 = vrot.slane %v1359, 7
        %v1445 = vrot.slane %v1374, 7
        %v1446 = vrot.slane %v1389, 7
        %v1447 = vsel %vm1221, %v1445, %v1446
        %v1448 = vsel %vm1221, %v1444, %v1445
        %v1449 = vsel %vm1221, %v1446, %v1444
        %s1450 = sld [smem:[#allocation15 + $0x1]]
        %v1451 = vstv %s1450
        %v1452 = vmul.f32 %v1449, %v1451
        %v1453 = vmul.f32 %v1448, %v1451
        %v1454 = vmul.f32 %v1447, %v1451
        %v1455 = vadd.f32 %v1441, %v1452
        %v1456 = vadd.f32 %v1442, %v1453
        %v1457 = vadd.f32 %v1443, %v1454
        %s1458 = sld [smem:[#allocation15 + $0x4]]
        %v1459 = vstv %s1458
        %v1460 = vmul.f32 %v1359, %v1459
        %v1461 = vmul.f32 %v1374, %v1459
        %v1462 = vmul.f32 %v1389, %v1459
        %v1463 = vadd.f32 %v1455, %v1460
        %v1464 = vadd.f32 %v1456, %v1461
        %v1465 = vadd.f32 %v1457, %v1462
        %v1466 = vrot.slane %v1359, 1
        %v1467 = vrot.slane %v1374, 1
        %v1468 = vrot.slane %v1389, 1
        %v1469 = vsel %vm1241, %v1467, %v1468
        %v1470 = vsel %vm1241, %v1466, %v1467
        %v1471 = vsel %vm1241, %v1468, %v1466
        %s1472 = sld [smem:[#allocation15 + $0x7]]
        %v1473 = vstv %s1472
        %v1474 = vmul.f32 %v1470, %v1473
        %v1475 = vmul.f32 %v1469, %v1473
        %v1476 = vmul.f32 %v1471, %v1473
        %v1477 = vadd.f32 %v1463, %v1474
        %v1478 = vadd.f32 %v1464, %v1475
        %v1479 = vadd.f32 %v1465, %v1476
        %1480 = vrot.lane.b32.xlu0 %v1359, 127
        %v1481 = vpop.permute.xlu0 %1480
        %1482 = vrot.lane.b32.xlu0 %v1374, 127
        %v1483 = vpop.permute.xlu0 %1482
        %1484 = vrot.lane.b32.xlu0 %v1389, 127
        %v1485 = vpop.permute.xlu0 %1484
        %v1486 = vrot.slane %v1481, 7
        %v1487 = vrot.slane %v1483, 7
        %v1488 = vrot.slane %v1485, 7
        %v1489 = vsel %vm1221, %v1487, %v1488
        %v1490 = vsel %vm1221, %v1486, %v1487
        %v1491 = vsel %vm1221, %v1488, %v1486
        %s1492 = sld [smem:[#allocation15 + $0x2]]
        %v1493 = vstv %s1492
        %v1494 = vmul.f32 %v1491, %v1493
        %v1495 = vmul.f32 %v1490, %v1493
        %v1496 = vmul.f32 %v1489, %v1493
        %v1497 = vadd.f32 %v1477, %v1494
        %v1498 = vadd.f32 %v1478, %v1495
        %v1499 = vadd.f32 %v1479, %v1496
        %s1500 = sld [smem:[#allocation15 + $0x5]]
        %v1501 = vstv %s1500
        %v1502 = vmul.f32 %v1481, %v1501
        %v1503 = vmul.f32 %v1483, %v1501
        %v1504 = vmul.f32 %v1485, %v1501
        %v1505 = vadd.f32 %v1497, %v1502
        %v1506 = vadd.f32 %v1498, %v1503
        %v1507 = vadd.f32 %v1499, %v1504
        %v1508 = vrot.slane %v1481, 1
        %v1509 = vrot.slane %v1483, 1
        %v1510 = vrot.slane %v1485, 1
        %v1511 = vsel %vm1241, %v1509, %v1510
        %v1512 = vsel %vm1241, %v1508, %v1509
        %v1513 = vsel %vm1241, %v1510, %v1508
        %s1514 = sld [smem:[#allocation15 + $0x8]]
        %v1515 = vstv %s1514
        %v1516 = vmul.f32 %v1512, %v1515
        %v1517 = vmul.f32 %v1511, %v1515
        %v1518 = vmul.f32 %v1513, %v1515
        %v1519 = vadd.f32 %v1505, %v1516
        %v1520 = vadd.f32 %v1506, %v1517
        %v1521 = vadd.f32 %v1507, %v1518
        %s1522 = sld [smem:[#allocation3]]
        %v1523 = vstv %s1522
        %v1524 = vadd.f32 %v1519, %v1523
        %v1525 = vadd.f32 %v1520, %v1523
        %v1526 = vadd.f32 %v1521, %v1523
        %1527 = vrot.lane.b32.xlu0 %v1402, 1
        %v1528 = vpop.permute.xlu0 %1527
        %1529 = vrot.lane.b32.xlu0 %v1403, 1
        %v1530 = vpop.permute.xlu0 %1529
        %1531 = vrot.lane.b32.xlu0 %v1404, 1
        %v1532 = vpop.permute.xlu0 %1531
        %v1533 = vrot.slane %v1528, 7
        %v1534 = vrot.slane %v1530, 7
        %v1535 = vrot.slane %v1532, 7
        %v1536 = vsel %vm1221, %v1534, %v1535
        %v1537 = vsel %vm1221, %v1533, %v1534
        %v1538 = vsel %vm1221, %v1535, %v1533
        %s1539 = sld [smem:[#allocation15 + $0x9]]
        %v1540 = vstv %s1539
        %v1541 = vmul.f32 %v1538, %v1540
        %v1542 = vmul.f32 %v1537, %v1540
        %v1543 = vmul.f32 %v1536, %v1540
        %s1544 = sld [smem:[#allocation15 + $0xc]]
        %v1545 = vstv %s1544
        %v1546 = vmul.f32 %v1528, %v1545
        %v1547 = vmul.f32 %v1530, %v1545
        %v1548 = vmul.f32 %v1532, %v1545
        %v1549 = vadd.f32 %v1541, %v1546
        %v1550 = vadd.f32 %v1542, %v1547
        %v1551 = vadd.f32 %v1543, %v1548
        %v1552 = vrot.slane %v1528, 1
        %v1553 = vrot.slane %v1530, 1
        %v1554 = vrot.slane %v1532, 1
        %v1555 = vsel %vm1241, %v1553, %v1554
        %v1556 = vsel %vm1241, %v1552, %v1553
        %v1557 = vsel %vm1241, %v1554, %v1552
        %s1558 = sld [smem:[#allocation15 + $0xf]]
        %v1559 = vstv %s1558
        %v1560 = vmul.f32 %v1556, %v1559
        %v1561 = vmul.f32 %v1555, %v1559
        %v1562 = vmul.f32 %v1557, %v1559
        %v1563 = vadd.f32 %v1549, %v1560
        %v1564 = vadd.f32 %v1550, %v1561
        %v1565 = vadd.f32 %v1551, %v1562
        %v1566 = vrot.slane %v1402, 7
        %v1567 = vrot.slane %v1403, 7
        %v1568 = vrot.slane %v1404, 7
        %v1569 = vsel %vm1221, %v1567, %v1568
        %v1570 = vsel %vm1221, %v1566, %v1567
        %v1571 = vsel %vm1221, %v1568, %v1566
        %s1572 = sld [smem:[#allocation15 + $0xa]]
        %v1573 = vstv %s1572
        %v1574 = vmul.f32 %v1571, %v1573
        %v1575 = vmul.f32 %v1570, %v1573
        %v1576 = vmul.f32 %v1569, %v1573
        %v1577 = vadd.f32 %v1563, %v1574
        %v1578 = vadd.f32 %v1564, %v1575
        %v1579 = vadd.f32 %v1565, %v1576
        %s1580 = sld [smem:[#allocation15 + $0xd]]
        %v1581 = vstv %s1580
        %v1582 = vmul.f32 %v1402, %v1581
        %v1583 = vmul.f32 %v1403, %v1581
        %v1584 = vmul.f32 %v1404, %v1581
        %v1585 = vadd.f32 %v1577, %v1582
        %v1586 = vadd.f32 %v1578, %v1583
        %v1587 = vadd.f32 %v1579, %v1584
        %v1588 = vrot.slane %v1402, 1
        %v1589 = vrot.slane %v1403, 1
        %v1590 = vrot.slane %v1404, 1
        %v1591 = vsel %vm1241, %v1589, %v1590
        %v1592 = vsel %vm1241, %v1588, %v1589
        %v1593 = vsel %vm1241, %v1590, %v1588
        %s1594 = sld [smem:[#allocation15 + $0x10]]
        %v1595 = vstv %s1594
        %v1596 = vmul.f32 %v1592, %v1595
        %v1597 = vmul.f32 %v1591, %v1595
        %v1598 = vmul.f32 %v1593, %v1595
        %v1599 = vadd.f32 %v1585, %v1596
        %v1600 = vadd.f32 %v1586, %v1597
        %v1601 = vadd.f32 %v1587, %v1598
        %1602 = vrot.lane.b32.xlu0 %v1402, 127
        %v1603 = vpop.permute.xlu0 %1602
        %1604 = vrot.lane.b32.xlu0 %v1403, 127
        %v1605 = vpop.permute.xlu0 %1604
        %1606 = vrot.lane.b32.xlu0 %v1404, 127
        %v1607 = vpop.permute.xlu0 %1606
        %v1608 = vrot.slane %v1603, 7
        %v1609 = vrot.slane %v1605, 7
        %v1610 = vrot.slane %v1607, 7
        %v1611 = vsel %vm1221, %v1609, %v1610
        %v1612 = vsel %vm1221, %v1608, %v1609
        %v1613 = vsel %vm1221, %v1610, %v1608
        %s1614 = sld [smem:[#allocation15 + $0xb]]
        %v1615 = vstv %s1614
        %v1616 = vmul.f32 %v1613, %v1615
        %v1617 = vmul.f32 %v1612, %v1615
        %v1618 = vmul.f32 %v1611, %v1615
        %v1619 = vadd.f32 %v1599, %v1616
        %v1620 = vadd.f32 %v1600, %v1617
        %v1621 = vadd.f32 %v1601, %v1618
        %s1622 = sld [smem:[#allocation15 + $0xe]]
        %v1623 = vstv %s1622
        %v1624 = vmul.f32 %v1603, %v1623
        %v1625 = vmul.f32 %v1605, %v1623
        %v1626 = vmul.f32 %v1607, %v1623
        %v1627 = vadd.f32 %v1619, %v1624
        %v1628 = vadd.f32 %v1620, %v1625
        %v1629 = vadd.f32 %v1621, %v1626
        %v1630 = vrot.slane %v1603, 1
        %v1631 = vrot.slane %v1605, 1
        %v1632 = vrot.slane %v1607, 1
        %v1633 = vsel %vm1241, %v1631, %v1632
        %v1634 = vsel %vm1241, %v1630, %v1631
        %v1635 = vsel %vm1241, %v1632, %v1630
        %s1636 = sld [smem:[#allocation15 + $0x11]]
        %v1637 = vstv %s1636
        %v1638 = vmul.f32 %v1634, %v1637
        %v1639 = vmul.f32 %v1633, %v1637
        %v1640 = vmul.f32 %v1635, %v1637
        %v1641 = vadd.f32 %v1627, %v1638
        %v1642 = vadd.f32 %v1628, %v1639
        %v1643 = vadd.f32 %v1629, %v1640
        %v1644 = vadd.f32 %v1359, %v1524
        %v1645 = vadd.f32 %v1374, %v1525
        %v1646 = vadd.f32 %v1389, %v1526
        %v1647 = vsel %vm1176, %v1644, 0.0
        %v1648 = vsel %vm1177, %v1645, 0.0
        %v1649 = vsel %vm1178, %v1646, 0.0
        %v1650 = vsel %vm1176, %v1641, 0.0
        %v1651 = vsel %vm1177, %v1642, 0.0
        %v1652 = vsel %vm1178, %v1643, 0.0
        %1653 = vrot.lane.b32.xlu0 %v1647, 1
        %v1654 = vpop.permute.xlu0 %1653
        %1655 = vrot.lane.b32.xlu0 %v1648, 1
        %v1656 = vpop.permute.xlu0 %1655
        %1657 = vrot.lane.b32.xlu0 %v1649, 1
        %v1658 = vpop.permute.xlu0 %1657
        %v1659 = vrot.slane %v1654, 7
        %v1660 = vrot.slane %v1656, 7
        %v1661 = vrot.slane %v1658, 7
        %v1662 = vsel %vm1221, %v1660, %v1661
        %v1663 = vsel %vm1221, %v1659, %v1660
        %v1664 = vsel %vm1221, %v1661, %v1659
        %s1665 = sld [smem:[#allocation17]]
        %v1666 = vstv %s1665
        %v1667 = vmul.f32 %v1664, %v1666
        %v1668 = vmul.f32 %v1663, %v1666
        %v1669 = vmul.f32 %v1662, %v1666
        %s1670 = sld [smem:[#allocation17 + $0x3]]
        %v1671 = vstv %s1670
        %v1672 = vmul.f32 %v1654, %v1671
        %v1673 = vmul.f32 %v1656, %v1671
        %v1674 = vmul.f32 %v1658, %v1671
        %v1675 = vadd.f32 %v1667, %v1672
        %v1676 = vadd.f32 %v1668, %v1673
        %v1677 = vadd.f32 %v1669, %v1674
        %v1678 = vrot.slane %v1654, 1
        %v1679 = vrot.slane %v1656, 1
        %v1680 = vrot.slane %v1658, 1
        %v1681 = vsel %vm1241, %v1679, %v1680
        %v1682 = vsel %vm1241, %v1678, %v1679
        %v1683 = vsel %vm1241, %v1680, %v1678
        %s1684 = sld [smem:[#allocation17 + $0x6]]
        %v1685 = vstv %s1684
        %v1686 = vmul.f32 %v1682, %v1685
        %v1687 = vmul.f32 %v1681, %v1685
        %v1688 = vmul.f32 %v1683, %v1685
        %v1689 = vadd.f32 %v1675, %v1686
        %v1690 = vadd.f32 %v1676, %v1687
        %v1691 = vadd.f32 %v1677, %v1688
        %v1692 = vrot.slane %v1647, 7
        %v1693 = vrot.slane %v1648, 7
        %v1694 = vrot.slane %v1649, 7
        %v1695 = vsel %vm1221, %v1693, %v1694
        %v1696 = vsel %vm1221, %v1692, %v1693
        %v1697 = vsel %vm1221, %v1694, %v1692
        %s1698 = sld [smem:[#allocation17 + $0x1]]
        %v1699 = vstv %s1698
        %v1700 = vmul.f32 %v1697, %v1699
        %v1701 = vmul.f32 %v1696, %v1699
        %v1702 = vmul.f32 %v1695, %v1699
        %v1703 = vadd.f32 %v1689, %v1700
        %v1704 = vadd.f32 %v1690, %v1701
        %v1705 = vadd.f32 %v1691, %v1702
        %s1706 = sld [smem:[#allocation17 + $0x4]]
        %v1707 = vstv %s1706
        %v1708 = vmul.f32 %v1647, %v1707
        %v1709 = vmul.f32 %v1648, %v1707
        %v1710 = vmul.f32 %v1649, %v1707
        %v1711 = vadd.f32 %v1703, %v1708
        %v1712 = vadd.f32 %v1704, %v1709
        %v1713 = vadd.f32 %v1705, %v1710
        %v1714 = vrot.slane %v1647, 1
        %v1715 = vrot.slane %v1648, 1
        %v1716 = vrot.slane %v1649, 1
        %v1717 = vsel %vm1241, %v1715, %v1716
        %v1718 = vsel %vm1241, %v1714, %v1715
        %v1719 = vsel %vm1241, %v1716, %v1714
        %s1720 = sld [smem:[#allocation17 + $0x7]]
        %v1721 = vstv %s1720
        %v1722 = vmul.f32 %v1718, %v1721
        %v1723 = vmul.f32 %v1717, %v1721
        %v1724 = vmul.f32 %v1719, %v1721
        %v1725 = vadd.f32 %v1711, %v1722
        %v1726 = vadd.f32 %v1712, %v1723
        %v1727 = vadd.f32 %v1713, %v1724
        %1728 = vrot.lane.b32.xlu0 %v1647, 127
        %v1729 = vpop.permute.xlu0 %1728
        %1730 = vrot.lane.b32.xlu0 %v1648, 127
        %v1731 = vpop.permute.xlu0 %1730
        %1732 = vrot.lane.b32.xlu0 %v1649, 127
        %v1733 = vpop.permute.xlu0 %1732
        %v1734 = vrot.slane %v1729, 7
        %v1735 = vrot.slane %v1731, 7
        %v1736 = vrot.slane %v1733, 7
        %v1737 = vsel %vm1221, %v1735, %v1736
        %v1738 = vsel %vm1221, %v1734, %v1735
        %v1739 = vsel %vm1221, %v1736, %v1734
        %s1740 = sld [smem:[#allocation17 + $0x2]]
        %v1741 = vstv %s1740
        %v1742 = vmul.f32 %v1739, %v1741
        %v1743 = vmul.f32 %v1738, %v1741
        %v1744 = vmul.f32 %v1737, %v1741
        %v1745 = vadd.f32 %v1725, %v1742
        %v1746 = vadd.f32 %v1726, %v1743
        %v1747 = vadd.f32 %v1727, %v1744
        %s1748 = sld [smem:[#allocation17 + $0x5]]
        %v1749 = vstv %s1748
        %v1750 = vmul.f32 %v1729, %v1749
        %v1751 = vmul.f32 %v1731, %v1749
        %v1752 = vmul.f32 %v1733, %v1749
        %v1753 = vadd.f32 %v1745, %v1750
        %v1754 = vadd.f32 %v1746, %v1751
        %v1755 = vadd.f32 %v1747, %v1752
        %v1756 = vrot.slane %v1729, 1
        %v1757 = vrot.slane %v1731, 1
        %v1758 = vrot.slane %v1733, 1
        %v1759 = vsel %vm1241, %v1757, %v1758
        %v1760 = vsel %vm1241, %v1756, %v1757
        %v1761 = vsel %vm1241, %v1758, %v1756
        %s1762 = sld [smem:[#allocation17 + $0x8]]
        %v1763 = vstv %s1762
        %v1764 = vmul.f32 %v1760, %v1763
        %v1765 = vmul.f32 %v1759, %v1763
        %v1766 = vmul.f32 %v1761, %v1763
        %v1767 = vadd.f32 %v1753, %v1764
        %v1768 = vadd.f32 %v1754, %v1765
        %v1769 = vadd.f32 %v1755, %v1766
        %1770 = vrot.lane.b32.xlu0 %v1650, 1
        %v1771 = vpop.permute.xlu0 %1770
        %1772 = vrot.lane.b32.xlu0 %v1651, 1
        %v1773 = vpop.permute.xlu0 %1772
        %1774 = vrot.lane.b32.xlu0 %v1652, 1
        %v1775 = vpop.permute.xlu0 %1774
        %v1776 = vrot.slane %v1771, 7
        %v1777 = vrot.slane %v1773, 7
        %v1778 = vrot.slane %v1775, 7
        %v1779 = vsel %vm1221, %v1777, %v1778
        %v1780 = vsel %vm1221, %v1776, %v1777
        %v1781 = vsel %vm1221, %v1778, %v1776
        %s1782 = sld [smem:[#allocation17 + $0x9]]
        %v1783 = vstv %s1782
        %v1784 = vmul.f32 %v1781, %v1783
        %v1785 = vmul.f32 %v1780, %v1783
        %v1786 = vmul.f32 %v1779, %v1783
        %s1787 = sld [smem:[#allocation17 + $0xc]]
        %v1788 = vstv %s1787
        %v1789 = vmul.f32 %v1771, %v1788
        %v1790 = vmul.f32 %v1773, %v1788
        %v1791 = vmul.f32 %v1775, %v1788
        %v1792 = vadd.f32 %v1784, %v1789
        %v1793 = vadd.f32 %v1785, %v1790
        %v1794 = vadd.f32 %v1786, %v1791
        %v1795 = vrot.slane %v1771, 1
        %v1796 = vrot.slane %v1773, 1
        %v1797 = vrot.slane %v1775, 1
        %v1798 = vsel %vm1241, %v1796, %v1797
        %v1799 = vsel %vm1241, %v1795, %v1796
        %v1800 = vsel %vm1241, %v1797, %v1795
        %s1801 = sld [smem:[#allocation17 + $0xf]]
        %v1802 = vstv %s1801
        %v1803 = vmul.f32 %v1799, %v1802
        %v1804 = vmul.f32 %v1798, %v1802
        %v1805 = vmul.f32 %v1800, %v1802
        %v1806 = vadd.f32 %v1792, %v1803
        %v1807 = vadd.f32 %v1793, %v1804
        %v1808 = vadd.f32 %v1794, %v1805
        %v1809 = vrot.slane %v1650, 7
        %v1810 = vrot.slane %v1651, 7
        %v1811 = vrot.slane %v1652, 7
        %v1812 = vsel %vm1221, %v1810, %v1811
        %v1813 = vsel %vm1221, %v1809, %v1810
        %v1814 = vsel %vm1221, %v1811, %v1809
        %s1815 = sld [smem:[#allocation17 + $0xa]]
        %v1816 = vstv %s1815
        %v1817 = vmul.f32 %v1814, %v1816
        %v1818 = vmul.f32 %v1813, %v1816
        %v1819 = vmul.f32 %v1812, %v1816
        %v1820 = vadd.f32 %v1806, %v1817
        %v1821 = vadd.f32 %v1807, %v1818
        %v1822 = vadd.f32 %v1808, %v1819
        %s1823 = sld [smem:[#allocation17 + $0xd]]
        %v1824 = vstv %s1823
        %v1825 = vmul.f32 %v1650, %v1824
        %v1826 = vmul.f32 %v1651, %v1824
        %v1827 = vmul.f32 %v1652, %v1824
        %v1828 = vadd.f32 %v1820, %v1825
        %v1829 = vadd.f32 %v1821, %v1826
        %v1830 = vadd.f32 %v1822, %v1827
        %v1831 = vrot.slane %v1650, 1
        %v1832 = vrot.slane %v1651, 1
        %v1833 = vrot.slane %v1652, 1
        %v1834 = vsel %vm1241, %v1832, %v1833
        %v1835 = vsel %vm1241, %v1831, %v1832
        %v1836 = vsel %vm1241, %v1833, %v1831
        %s1837 = sld [smem:[#allocation17 + $0x10]]
        %v1838 = vstv %s1837
        %v1839 = vmul.f32 %v1835, %v1838
        %v1840 = vmul.f32 %v1834, %v1838
        %v1841 = vmul.f32 %v1836, %v1838
        %v1842 = vadd.f32 %v1828, %v1839
        %v1843 = vadd.f32 %v1829, %v1840
        %v1844 = vadd.f32 %v1830, %v1841
        %1845 = vrot.lane.b32.xlu0 %v1650, 127
        %v1846 = vpop.permute.xlu0 %1845
        %1847 = vrot.lane.b32.xlu0 %v1651, 127
        %v1848 = vpop.permute.xlu0 %1847
        %1849 = vrot.lane.b32.xlu0 %v1652, 127
        %v1850 = vpop.permute.xlu0 %1849
        %v1851 = vrot.slane %v1846, 7
        %v1852 = vrot.slane %v1848, 7
        %v1853 = vrot.slane %v1850, 7
        %v1854 = vsel %vm1221, %v1852, %v1853
        %v1855 = vsel %vm1221, %v1851, %v1852
        %v1856 = vsel %vm1221, %v1853, %v1851
        %s1857 = sld [smem:[#allocation17 + $0xb]]
        %v1858 = vstv %s1857
        %v1859 = vmul.f32 %v1856, %v1858
        %v1860 = vmul.f32 %v1855, %v1858
        %v1861 = vmul.f32 %v1854, %v1858
        %v1862 = vadd.f32 %v1842, %v1859
        %v1863 = vadd.f32 %v1843, %v1860
        %v1864 = vadd.f32 %v1844, %v1861
        %s1865 = sld [smem:[#allocation17 + $0xe]]
        %v1866 = vstv %s1865
        %v1867 = vmul.f32 %v1846, %v1866
        %v1868 = vmul.f32 %v1848, %v1866
        %v1869 = vmul.f32 %v1850, %v1866
        %v1870 = vadd.f32 %v1862, %v1867
        %v1871 = vadd.f32 %v1863, %v1868
        %v1872 = vadd.f32 %v1864, %v1869
        %v1873 = vrot.slane %v1846, 1
        %v1874 = vrot.slane %v1848, 1
        %v1875 = vrot.slane %v1850, 1
        %v1876 = vsel %vm1241, %v1874, %v1875
        %v1877 = vsel %vm1241, %v1873, %v1874
        %v1878 = vsel %vm1241, %v1875, %v1873
        %s1879 = sld [smem:[#allocation17 + $0x11]]
        %v1880 = vstv %s1879
        %v1881 = vmul.f32 %v1877, %v1880
        %v1882 = vmul.f32 %v1876, %v1880
        %v1883 = vmul.f32 %v1878, %v1880
        %v1884 = vadd.f32 %v1870, %v1881
        %v1885 = vadd.f32 %v1871, %v1882
        %v1886 = vadd.f32 %v1872, %v1883
        %v1887 = vadd.f32 %v1767, %v1884
        %v1888 = vadd.f32 %v1768, %v1885
        %v1889 = vadd.f32 %v1769, %v1886
        %s1890 = sld [smem:[#allocation4]]
        %v1891 = vstv %s1890
        %v1892 = vadd.f32 %v1887, %v1891
        %v1893 = vadd.f32 %v1888, %v1891
        %v1894 = vadd.f32 %v1889, %v1891
        %v1895 = vadd.f32 %v1339, 1e-06
        %v1896 = vadd.f32 %v1340, 1e-06
        %v1897 = vadd.f32 %v1341, 1e-06
        %v1898 = vrcp.pop %v1895
        %v1899 = vmul.f32 %v1895, %v1898
        %v1900 = vsub.f32 1.0, %v1899
        %v1901 = vmul.f32 %v1898, %v1900
        %v1902 = vadd.f32 %v1898, %v1901
        %vm1903 = vweird.f32 %v1895
        %vm1904 = vweird.f32 %v1898
        %vm1905 = vmor %vm1903, %vm1904
        %v1906 = vsel %vm1905, %v1898, %v1902
        %v1907 = vand.u32 2147483647, %v1895
        %vm1908 = vcmp.eq.f32.partialorder %v1907, 8.507059e+37
        %v1909 = vand.u32 %v1895, 2147483648
        %v1910 = vor.u32 1.1754944e-38, %v1909
        %v1911 = vsel %vm1908, %v1910, %v1906
        %v1912 = vmul.f32 1.0, %v1911
        %v1913 = vrcp.pop %v1896
        %v1914 = vmul.f32 %v1896, %v1913
        %v1915 = vsub.f32 1.0, %v1914
        %v1916 = vmul.f32 %v1913, %v1915
        %v1917 = vadd.f32 %v1913, %v1916
        %vm1918 = vweird.f32 %v1896
        %vm1919 = vweird.f32 %v1913
        %vm1920 = vmor %vm1918, %vm1919
        %v1921 = vsel %vm1920, %v1913, %v1917
        %v1922 = vand.u32 2147483647, %v1896
        %vm1923 = vcmp.eq.f32.partialorder %v1922, 8.507059e+37
        %v1924 = vand.u32 %v1896, 2147483648
        %v1925 = vor.u32 1.1754944e-38, %v1924
        %v1926 = vsel %vm1923, %v1925, %v1921
        %v1927 = vmul.f32 1.0, %v1926
        %v1928 = vrcp.pop %v1897
        %v1929 = vmul.f32 %v1897, %v1928
        %v1930 = vsub.f32 1.0, %v1929
        %v1931 = vmul.f32 %v1928, %v1930
        %v1932 = vadd.f32 %v1928, %v1931
        %vm1933 = vweird.f32 %v1897
        %vm1934 = vweird.f32 %v1928
        %vm1935 = vmor %vm1933, %vm1934
        %v1936 = vsel %vm1935, %v1928, %v1932
        %v1937 = vand.u32 2147483647, %v1897
        %vm1938 = vcmp.eq.f32.partialorder %v1937, 8.507059e+37
        %v1939 = vand.u32 %v1897, 2147483648
        %v1940 = vor.u32 1.1754944e-38, %v1939
        %v1941 = vsel %vm1938, %v1940, %v1936
        %v1942 = vmul.f32 1.0, %v1941
        %v1943 = vmul.f32 %v1131, %v1912
        %v1944 = vmul.f32 %v1137, %v1927
        %v1945 = vmul.f32 %v1136, %v1942
        %v1946 = vmax.f32 %v1943, 0.0
        %v1947 = vmax.f32 %v1944, 0.0
        %v1948 = vmax.f32 %v1945, 0.0
        %v1949 = vmin.f32 %v1946, 1.0
        %v1950 = vmin.f32 %v1947, 1.0
        %v1951 = vmin.f32 %v1948, 1.0
        %v1952 = vmul.f32 %v1140, %v1912
        %v1953 = vmul.f32 %v1145, %v1927
        %v1954 = vmul.f32 %v1143, %v1942
        %v1955 = vmax.f32 %v1952, 0.0
        %v1956 = vmax.f32 %v1953, 0.0
        %v1957 = vmax.f32 %v1954, 0.0
        %v1958 = vmin.f32 %v1955, 1.0
        %v1959 = vmin.f32 %v1956, 1.0
        %v1960 = vmin.f32 %v1957, 1.0
        %v1961 = vmul.f32 %v1148, %v1912
        %v1962 = vmul.f32 %v1153, %v1927
        %v1963 = vmul.f32 %v1151, %v1942
        %v1964 = vmax.f32 %v1961, 0.0
        %v1965 = vmax.f32 %v1962, 0.0
        %v1966 = vmax.f32 %v1963, 0.0
        %v1967 = vmin.f32 %v1964, 1.0
        %v1968 = vmin.f32 %v1965, 1.0
        %v1969 = vmin.f32 %v1966, 1.0
        %v1970 = vmul.f32 %v1949, 0.299
        %v1971 = vmul.f32 %v1950, 0.299
        %v1972 = vmul.f32 %v1951, 0.299
        %v1973 = vmul.f32 %v1958, 0.587
        %v1974 = vmul.f32 %v1959, 0.587
        %v1975 = vmul.f32 %v1960, 0.587
        %v1976 = vadd.f32 %v1970, %v1973
        %v1977 = vadd.f32 %v1971, %v1974
        %v1978 = vadd.f32 %v1972, %v1975
        %v1979 = vmul.f32 %v1967, 0.114
        %v1980 = vmul.f32 %v1968, 0.114
        %v1981 = vmul.f32 %v1969, 0.114
        %v1982 = vadd.f32 %v1976, %v1979
        %v1983 = vadd.f32 %v1977, %v1980
        %v1984 = vadd.f32 %v1978, %v1981
        %v1985 = vsub.f32 %v1967, %v1982
        %v1986 = vsub.f32 %v1968, %v1983
        %v1987 = vsub.f32 %v1969, %v1984
        %v1988 = vmul.f32 %v1985, 0.564
        %v1989 = vmul.f32 %v1986, 0.564
        %v1990 = vmul.f32 %v1987, 0.564
        %v1991 = vadd.f32 %v1988, 0.5
        %v1992 = vadd.f32 %v1989, 0.5
        %v1993 = vadd.f32 %v1990, 0.5
        %v1994 = vsub.f32 %v1949, %v1982
        %v1995 = vsub.f32 %v1950, %v1983
        %v1996 = vsub.f32 %v1951, %v1984
        %v1997 = vmul.f32 %v1994, 0.713
        %v1998 = vmul.f32 %v1995, 0.713
        %v1999 = vmul.f32 %v1996, 0.713
        %v2000 = vadd.f32 %v1997, 0.5
        %v2001 = vadd.f32 %v1998, 0.5
        %v2002 = vadd.f32 %v1999, 0.5
        %v2003 = vsel %vm1176, %v1200, 0.0
        %v2004 = vsel %vm1177, %v1201, 0.0
        %v2005 = vsel %vm1178, %v1202, 0.0
        %v2006 = vsel %vm1176, %v1209, 0.0
        %v2007 = vsel %vm1177, %v1210, 0.0
        %v2008 = vsel %vm1178, %v1211, 0.0
        %v2009 = vsel %vm1176, %v1892, 0.0
        %v2010 = vsel %vm1177, %v1893, 0.0
        %v2011 = vsel %vm1178, %v1894, 0.0
        %v2012 = vsel %vm1176, %v1991, 0.0
        %v2013 = vsel %vm1177, %v1992, 0.0
        %v2014 = vsel %vm1178, %v1993, 0.0
        %v2015 = vsel %vm1176, %v2000, 0.0
        %v2016 = vsel %vm1177, %v2001, 0.0
        %v2017 = vsel %vm1178, %v2002, 0.0
        %s2018 = sld [smem:[#allocation18]]
        %v2019 = vstv %s2018
        %v2020 = vmul.f32 %v1223, %v2019
        %s2021 = sld [smem:[#allocation18 + $0x36]]
        %v2022 = vstv %s2021
        %v2023 = vmul.f32 %v1223, %v2022
        %s2024 = sld [smem:[#allocation18 + $0x3]]
        %v2025 = vstv %s2024
        %v2026 = vmul.f32 %v1215, %v2025
        %v2027 = vadd.f32 %v2020, %v2026
        %s2028 = sld [smem:[#allocation18 + $0x39]]
        %v2029 = vstv %s2028
        %v2030 = vmul.f32 %v1215, %v2029
        %v2031 = vadd.f32 %v2023, %v2030
        %s2032 = sld [smem:[#allocation18 + $0x6]]
        %v2033 = vstv %s2032
        %v2034 = vmul.f32 %v1242, %v2033
        %v2035 = vadd.f32 %v2027, %v2034
        %s2036 = sld [smem:[#allocation18 + $0x3c]]
        %v2037 = vstv %s2036
        %v2038 = vmul.f32 %v1242, %v2037
        %v2039 = vadd.f32 %v2031, %v2038
        %s2040 = sld [smem:[#allocation18 + $0x1]]
        %v2041 = vstv %s2040
        %v2042 = vmul.f32 %v1257, %v2041
        %v2043 = vadd.f32 %v2035, %v2042
        %s2044 = sld [smem:[#allocation18 + $0x37]]
        %v2045 = vstv %s2044
        %v2046 = vmul.f32 %v1257, %v2045
        %v2047 = vadd.f32 %v2039, %v2046
        %s2048 = sld [smem:[#allocation18 + $0x4]]
        %v2049 = vstv %s2048
        %v2050 = vmul.f32 %v1192, %v2049
        %v2051 = vadd.f32 %v2043, %v2050
        %s2052 = sld [smem:[#allocation18 + $0x3a]]
        %v2053 = vstv %s2052
        %v2054 = vmul.f32 %v1192, %v2053
        %v2055 = vadd.f32 %v2047, %v2054
        %s2056 = sld [smem:[#allocation18 + $0x7]]
        %v2057 = vstv %s2056
        %v2058 = vmul.f32 %v1278, %v2057
        %v2059 = vadd.f32 %v2051, %v2058
        %s2060 = sld [smem:[#allocation18 + $0x3d]]
        %v2061 = vstv %s2060
        %v2062 = vmul.f32 %v1278, %v2061
        %v2063 = vadd.f32 %v2055, %v2062
        %s2064 = sld [smem:[#allocation18 + $0x2]]
        %v2065 = vstv %s2064
        %v2066 = vmul.f32 %v1299, %v2065
        %v2067 = vadd.f32 %v2059, %v2066
        %s2068 = sld [smem:[#allocation18 + $0x38]]
        %v2069 = vstv %s2068
        %v2070 = vmul.f32 %v1299, %v2069
        %v2071 = vadd.f32 %v2063, %v2070
        %s2072 = sld [smem:[#allocation18 + $0x5]]
        %v2073 = vstv %s2072
        %v2074 = vmul.f32 %v1292, %v2073
        %v2075 = vadd.f32 %v2067, %v2074
        %s2076 = sld [smem:[#allocation18 + $0x3b]]
        %v2077 = vstv %s2076
        %v2078 = vmul.f32 %v1292, %v2077
        %v2079 = vadd.f32 %v2071, %v2078
        %s2080 = sld [smem:[#allocation18 + $0x8]]
        %v2081 = vstv %s2080
        %v2082 = vmul.f32 %v1320, %v2081
        %v2083 = vadd.f32 %v2075, %v2082
        %s2084 = sld [smem:[#allocation18 + $0x3e]]
        %v2085 = vstv %s2084
        %v2086 = vmul.f32 %v1320, %v2085
        %v2087 = vadd.f32 %v2079, %v2086
        %2088 = vrot.lane.b32.xlu0 %v2003, 1
        %v2089 = vpop.permute.xlu0 %2088
        %2090 = vrot.lane.b32.xlu0 %v2004, 1
        %v2091 = vpop.permute.xlu0 %2090
        %2092 = vrot.lane.b32.xlu0 %v2005, 1
        %v2093 = vpop.permute.xlu0 %2092
        %v2094 = vrot.slane %v2089, 7
        %v2095 = vrot.slane %v2091, 7
        %v2096 = vsel %vm1221, %v2094, %v2095
        %s2097 = sld [smem:[#allocation18 + $0x9]]
        %v2098 = vstv %s2097
        %v2099 = vmul.f32 %v2096, %v2098
        %v2100 = vadd.f32 %v2083, %v2099
        %s2101 = sld [smem:[#allocation18 + $0x3f]]
        %v2102 = vstv %s2101
        %v2103 = vmul.f32 %v2096, %v2102
        %v2104 = vadd.f32 %v2087, %v2103
        %s2105 = sld [smem:[#allocation18 + $0xc]]
        %v2106 = vstv %s2105
        %v2107 = vmul.f32 %v2091, %v2106
        %v2108 = vadd.f32 %v2100, %v2107
        %s2109 = sld [smem:[#allocation18 + $0x42]]
        %v2110 = vstv %s2109
        %v2111 = vmul.f32 %v2091, %v2110
        %v2112 = vadd.f32 %v2104, %v2111
        %v2113 = vrot.slane %v2091, 1
        %v2114 = vrot.slane %v2093, 1
        %v2115 = vsel %vm1241, %v2113, %v2114
        %s2116 = sld [smem:[#allocation18 + $0xf]]
        %v2117 = vstv %s2116
        %v2118 = vmul.f32 %v2115, %v2117
        %v2119 = vadd.f32 %v2108, %v2118
        %s2120 = sld [smem:[#allocation18 + $0x45]]
        %v2121 = vstv %s2120
        %v2122 = vmul.f32 %v2115, %v2121
        %v2123 = vadd.f32 %v2112, %v2122
        %v2124 = vrot.slane %v2003, 7
        %v2125 = vrot.slane %v2004, 7
        %v2126 = vsel %vm1221, %v2124, %v2125
        %s2127 = sld [smem:[#allocation18 + $0xa]]
        %v2128 = vstv %s2127
        %v2129 = vmul.f32 %v2126, %v2128
        %v2130 = vadd.f32 %v2119, %v2129
        %s2131 = sld [smem:[#allocation18 + $0x40]]
        %v2132 = vstv %s2131
        %v2133 = vmul.f32 %v2126, %v2132
        %v2134 = vadd.f32 %v2123, %v2133
        %s2135 = sld [smem:[#allocation18 + $0xd]]
        %v2136 = vstv %s2135
        %v2137 = vmul.f32 %v2004, %v2136
        %v2138 = vadd.f32 %v2130, %v2137
        %s2139 = sld [smem:[#allocation18 + $0x43]]
        %v2140 = vstv %s2139
        %v2141 = vmul.f32 %v2004, %v2140
        %v2142 = vadd.f32 %v2134, %v2141
        %v2143 = vrot.slane %v2004, 1
        %v2144 = vrot.slane %v2005, 1
        %v2145 = vsel %vm1241, %v2143, %v2144
        %s2146 = sld [smem:[#allocation18 + $0x10]]
        %v2147 = vstv %s2146
        %v2148 = vmul.f32 %v2145, %v2147
        %v2149 = vadd.f32 %v2138, %v2148
        %s2150 = sld [smem:[#allocation18 + $0x46]]
        %v2151 = vstv %s2150
        %v2152 = vmul.f32 %v2145, %v2151
        %v2153 = vadd.f32 %v2142, %v2152
        %2154 = vrot.lane.b32.xlu0 %v2003, 127
        %v2155 = vpop.permute.xlu0 %2154
        %2156 = vrot.lane.b32.xlu0 %v2004, 127
        %v2157 = vpop.permute.xlu0 %2156
        %2158 = vrot.lane.b32.xlu0 %v2005, 127
        %v2159 = vpop.permute.xlu0 %2158
        %v2160 = vrot.slane %v2155, 7
        %v2161 = vrot.slane %v2157, 7
        %v2162 = vsel %vm1221, %v2160, %v2161
        %s2163 = sld [smem:[#allocation18 + $0xb]]
        %v2164 = vstv %s2163
        %v2165 = vmul.f32 %v2162, %v2164
        %v2166 = vadd.f32 %v2149, %v2165
        %s2167 = sld [smem:[#allocation18 + $0x41]]
        %v2168 = vstv %s2167
        %v2169 = vmul.f32 %v2162, %v2168
        %v2170 = vadd.f32 %v2153, %v2169
        %s2171 = sld [smem:[#allocation18 + $0xe]]
        %v2172 = vstv %s2171
        %v2173 = vmul.f32 %v2157, %v2172
        %v2174 = vadd.f32 %v2166, %v2173
        %s2175 = sld [smem:[#allocation18 + $0x44]]
        %v2176 = vstv %s2175
        %v2177 = vmul.f32 %v2157, %v2176
        %v2178 = vadd.f32 %v2170, %v2177
        %v2179 = vrot.slane %v2157, 1
        %v2180 = vrot.slane %v2159, 1
        %v2181 = vsel %vm1241, %v2179, %v2180
        %s2182 = sld [smem:[#allocation18 + $0x11]]
        %v2183 = vstv %s2182
        %v2184 = vmul.f32 %v2181, %v2183
        %v2185 = vadd.f32 %v2174, %v2184
        %s2186 = sld [smem:[#allocation18 + $0x47]]
        %v2187 = vstv %s2186
        %v2188 = vmul.f32 %v2181, %v2187
        %v2189 = vadd.f32 %v2178, %v2188
        %2190 = vrot.lane.b32.xlu0 %v2006, 1
        %v2191 = vpop.permute.xlu0 %2190
        %2192 = vrot.lane.b32.xlu0 %v2007, 1
        %v2193 = vpop.permute.xlu0 %2192
        %2194 = vrot.lane.b32.xlu0 %v2008, 1
        %v2195 = vpop.permute.xlu0 %2194
        %v2196 = vrot.slane %v2191, 7
        %v2197 = vrot.slane %v2193, 7
        %v2198 = vsel %vm1221, %v2196, %v2197
        %s2199 = sld [smem:[#allocation18 + $0x12]]
        %v2200 = vstv %s2199
        %v2201 = vmul.f32 %v2198, %v2200
        %v2202 = vadd.f32 %v2185, %v2201
        %s2203 = sld [smem:[#allocation18 + $0x48]]
        %v2204 = vstv %s2203
        %v2205 = vmul.f32 %v2198, %v2204
        %v2206 = vadd.f32 %v2189, %v2205
        %s2207 = sld [smem:[#allocation18 + $0x15]]
        %v2208 = vstv %s2207
        %v2209 = vmul.f32 %v2193, %v2208
        %v2210 = vadd.f32 %v2202, %v2209
        %s2211 = sld [smem:[#allocation18 + $0x4b]]
        %v2212 = vstv %s2211
        %v2213 = vmul.f32 %v2193, %v2212
        %v2214 = vadd.f32 %v2206, %v2213
        %v2215 = vrot.slane %v2193, 1
        %v2216 = vrot.slane %v2195, 1
        %v2217 = vsel %vm1241, %v2215, %v2216
        %s2218 = sld [smem:[#allocation18 + $0x18]]
        %v2219 = vstv %s2218
        %v2220 = vmul.f32 %v2217, %v2219
        %v2221 = vadd.f32 %v2210, %v2220
        %s2222 = sld [smem:[#allocation18 + $0x4e]]
        %v2223 = vstv %s2222
        %v2224 = vmul.f32 %v2217, %v2223
        %v2225 = vadd.f32 %v2214, %v2224
        %v2226 = vrot.slane %v2006, 7
        %v2227 = vrot.slane %v2007, 7
        %v2228 = vsel %vm1221, %v2226, %v2227
        %s2229 = sld [smem:[#allocation18 + $0x13]]
        %v2230 = vstv %s2229
        %v2231 = vmul.f32 %v2228, %v2230
        %v2232 = vadd.f32 %v2221, %v2231
        %s2233 = sld [smem:[#allocation18 + $0x49]]
        %v2234 = vstv %s2233
        %v2235 = vmul.f32 %v2228, %v2234
        %v2236 = vadd.f32 %v2225, %v2235
        %s2237 = sld [smem:[#allocation18 + $0x16]]
        %v2238 = vstv %s2237
        %v2239 = vmul.f32 %v2007, %v2238
        %v2240 = vadd.f32 %v2232, %v2239
        %s2241 = sld [smem:[#allocation18 + $0x4c]]
        %v2242 = vstv %s2241
        %v2243 = vmul.f32 %v2007, %v2242
        %v2244 = vadd.f32 %v2236, %v2243
        %v2245 = vrot.slane %v2007, 1
        %v2246 = vrot.slane %v2008, 1
        %v2247 = vsel %vm1241, %v2245, %v2246
        %s2248 = sld [smem:[#allocation18 + $0x19]]
        %v2249 = vstv %s2248
        %v2250 = vmul.f32 %v2247, %v2249
        %v2251 = vadd.f32 %v2240, %v2250
        %s2252 = sld [smem:[#allocation18 + $0x4f]]
        %v2253 = vstv %s2252
        %v2254 = vmul.f32 %v2247, %v2253
        %v2255 = vadd.f32 %v2244, %v2254
        %2256 = vrot.lane.b32.xlu0 %v2006, 127
        %v2257 = vpop.permute.xlu0 %2256
        %2258 = vrot.lane.b32.xlu0 %v2007, 127
        %v2259 = vpop.permute.xlu0 %2258
        %2260 = vrot.lane.b32.xlu0 %v2008, 127
        %v2261 = vpop.permute.xlu0 %2260
        %v2262 = vrot.slane %v2257, 7
        %v2263 = vrot.slane %v2259, 7
        %v2264 = vsel %vm1221, %v2262, %v2263
        %s2265 = sld [smem:[#allocation18 + $0x14]]
        %v2266 = vstv %s2265
        %v2267 = vmul.f32 %v2264, %v2266
        %v2268 = vadd.f32 %v2251, %v2267
        %s2269 = sld [smem:[#allocation18 + $0x4a]]
        %v2270 = vstv %s2269
        %v2271 = vmul.f32 %v2264, %v2270
        %v2272 = vadd.f32 %v2255, %v2271
        %s2273 = sld [smem:[#allocation18 + $0x17]]
        %v2274 = vstv %s2273
        %v2275 = vmul.f32 %v2259, %v2274
        %v2276 = vadd.f32 %v2268, %v2275
        %s2277 = sld [smem:[#allocation18 + $0x4d]]
        %v2278 = vstv %s2277
        %v2279 = vmul.f32 %v2259, %v2278
        %v2280 = vadd.f32 %v2272, %v2279
        %v2281 = vrot.slane %v2259, 1
        %v2282 = vrot.slane %v2261, 1
        %v2283 = vsel %vm1241, %v2281, %v2282
        %s2284 = sld [smem:[#allocation18 + $0x1a]]
        %v2285 = vstv %s2284
        %v2286 = vmul.f32 %v2283, %v2285
        %v2287 = vadd.f32 %v2276, %v2286
        %s2288 = sld [smem:[#allocation18 + $0x50]]
        %v2289 = vstv %s2288
        %v2290 = vmul.f32 %v2283, %v2289
        %v2291 = vadd.f32 %v2280, %v2290
        %2292 = vrot.lane.b32.xlu0 %v2009, 1
        %v2293 = vpop.permute.xlu0 %2292
        %2294 = vrot.lane.b32.xlu0 %v2010, 1
        %v2295 = vpop.permute.xlu0 %2294
        %2296 = vrot.lane.b32.xlu0 %v2011, 1
        %v2297 = vpop.permute.xlu0 %2296
        %v2298 = vrot.slane %v2293, 7
        %v2299 = vrot.slane %v2295, 7
        %v2300 = vsel %vm1221, %v2298, %v2299
        %s2301 = sld [smem:[#allocation18 + $0x1b]]
        %v2302 = vstv %s2301
        %v2303 = vmul.f32 %v2300, %v2302
        %v2304 = vadd.f32 %v2287, %v2303
        %s2305 = sld [smem:[#allocation18 + $0x51]]
        %v2306 = vstv %s2305
        %v2307 = vmul.f32 %v2300, %v2306
        %v2308 = vadd.f32 %v2291, %v2307
        %s2309 = sld [smem:[#allocation18 + $0x1e]]
        %v2310 = vstv %s2309
        %v2311 = vmul.f32 %v2295, %v2310
        %v2312 = vadd.f32 %v2304, %v2311
        %s2313 = sld [smem:[#allocation18 + $0x54]]
        %v2314 = vstv %s2313
        %v2315 = vmul.f32 %v2295, %v2314
        %v2316 = vadd.f32 %v2308, %v2315
        %v2317 = vrot.slane %v2295, 1
        %v2318 = vrot.slane %v2297, 1
        %v2319 = vsel %vm1241, %v2317, %v2318
        %s2320 = sld [smem:[#allocation18 + $0x21]]
        %v2321 = vstv %s2320
        %v2322 = vmul.f32 %v2319, %v2321
        %v2323 = vadd.f32 %v2312, %v2322
        %s2324 = sld [smem:[#allocation18 + $0x57]]
        %v2325 = vstv %s2324
        %v2326 = vmul.f32 %v2319, %v2325
        %v2327 = vadd.f32 %v2316, %v2326
        %v2328 = vrot.slane %v2009, 7
        %v2329 = vrot.slane %v2010, 7
        %v2330 = vsel %vm1221, %v2328, %v2329
        %s2331 = sld [smem:[#allocation18 + $0x1c]]
        %v2332 = vstv %s2331
        %v2333 = vmul.f32 %v2330, %v2332
        %v2334 = vadd.f32 %v2323, %v2333
        %s2335 = sld [smem:[#allocation18 + $0x52]]
        %v2336 = vstv %s2335
        %v2337 = vmul.f32 %v2330, %v2336
        %v2338 = vadd.f32 %v2327, %v2337
        %s2339 = sld [smem:[#allocation18 + $0x1f]]
        %v2340 = vstv %s2339
        %v2341 = vmul.f32 %v2010, %v2340
        %v2342 = vadd.f32 %v2334, %v2341
        %s2343 = sld [smem:[#allocation18 + $0x55]]
        %v2344 = vstv %s2343
        %v2345 = vmul.f32 %v2010, %v2344
        %v2346 = vadd.f32 %v2338, %v2345
        %v2347 = vrot.slane %v2010, 1
        %v2348 = vrot.slane %v2011, 1
        %v2349 = vsel %vm1241, %v2347, %v2348
        %s2350 = sld [smem:[#allocation18 + $0x22]]
        %v2351 = vstv %s2350
        %v2352 = vmul.f32 %v2349, %v2351
        %v2353 = vadd.f32 %v2342, %v2352
        %s2354 = sld [smem:[#allocation18 + $0x58]]
        %v2355 = vstv %s2354
        %v2356 = vmul.f32 %v2349, %v2355
        %v2357 = vadd.f32 %v2346, %v2356
        %2358 = vrot.lane.b32.xlu0 %v2009, 127
        %v2359 = vpop.permute.xlu0 %2358
        %2360 = vrot.lane.b32.xlu0 %v2010, 127
        %v2361 = vpop.permute.xlu0 %2360
        %2362 = vrot.lane.b32.xlu0 %v2011, 127
        %v2363 = vpop.permute.xlu0 %2362
        %v2364 = vrot.slane %v2359, 7
        %v2365 = vrot.slane %v2361, 7
        %v2366 = vsel %vm1221, %v2364, %v2365
        %s2367 = sld [smem:[#allocation18 + $0x1d]]
        %v2368 = vstv %s2367
        %v2369 = vmul.f32 %v2366, %v2368
        %v2370 = vadd.f32 %v2353, %v2369
        %s2371 = sld [smem:[#allocation18 + $0x53]]
        %v2372 = vstv %s2371
        %v2373 = vmul.f32 %v2366, %v2372
        %v2374 = vadd.f32 %v2357, %v2373
        %s2375 = sld [smem:[#allocation18 + $0x20]]
        %v2376 = vstv %s2375
        %v2377 = vmul.f32 %v2361, %v2376
        %v2378 = vadd.f32 %v2370, %v2377
        %s2379 = sld [smem:[#allocation18 + $0x56]]
        %v2380 = vstv %s2379
        %v2381 = vmul.f32 %v2361, %v2380
        %v2382 = vadd.f32 %v2374, %v2381
        %v2383 = vrot.slane %v2361, 1
        %v2384 = vrot.slane %v2363, 1
        %v2385 = vsel %vm1241, %v2383, %v2384
        %s2386 = sld [smem:[#allocation18 + $0x23]]
        %v2387 = vstv %s2386
        %v2388 = vmul.f32 %v2385, %v2387
        %v2389 = vadd.f32 %v2378, %v2388
        %s2390 = sld [smem:[#allocation18 + $0x59]]
        %v2391 = vstv %s2390
        %v2392 = vmul.f32 %v2385, %v2391
        %v2393 = vadd.f32 %v2382, %v2392
        %2394 = vrot.lane.b32.xlu0 %v2012, 1
        %v2395 = vpop.permute.xlu0 %2394
        %2396 = vrot.lane.b32.xlu0 %v2013, 1
        %v2397 = vpop.permute.xlu0 %2396
        %2398 = vrot.lane.b32.xlu0 %v2014, 1
        %v2399 = vpop.permute.xlu0 %2398
        %v2400 = vrot.slane %v2395, 7
        %v2401 = vrot.slane %v2397, 7
        %v2402 = vsel %vm1221, %v2400, %v2401
        %s2403 = sld [smem:[#allocation18 + $0x24]]
        %v2404 = vstv %s2403
        %v2405 = vmul.f32 %v2402, %v2404
        %v2406 = vadd.f32 %v2389, %v2405
        %s2407 = sld [smem:[#allocation18 + $0x5a]]
        %v2408 = vstv %s2407
        %v2409 = vmul.f32 %v2402, %v2408
        %v2410 = vadd.f32 %v2393, %v2409
        %s2411 = sld [smem:[#allocation18 + $0x27]]
        %v2412 = vstv %s2411
        %v2413 = vmul.f32 %v2397, %v2412
        %v2414 = vadd.f32 %v2406, %v2413
        %s2415 = sld [smem:[#allocation18 + $0x5d]]
        %v2416 = vstv %s2415
        %v2417 = vmul.f32 %v2397, %v2416
        %v2418 = vadd.f32 %v2410, %v2417
        %v2419 = vrot.slane %v2397, 1
        %v2420 = vrot.slane %v2399, 1
        %v2421 = vsel %vm1241, %v2419, %v2420
        %s2422 = sld [smem:[#allocation18 + $0x2a]]
        %v2423 = vstv %s2422
        %v2424 = vmul.f32 %v2421, %v2423
        %v2425 = vadd.f32 %v2414, %v2424
        %s2426 = sld [smem:[#allocation18 + $0x60]]
        %v2427 = vstv %s2426
        %v2428 = vmul.f32 %v2421, %v2427
        %v2429 = vadd.f32 %v2418, %v2428
        %v2430 = vrot.slane %v2012, 7
        %v2431 = vrot.slane %v2013, 7
        %v2432 = vsel %vm1221, %v2430, %v2431
        %s2433 = sld [smem:[#allocation18 + $0x25]]
        %v2434 = vstv %s2433
        %v2435 = vmul.f32 %v2432, %v2434
        %v2436 = vadd.f32 %v2425, %v2435
        %s2437 = sld [smem:[#allocation18 + $0x5b]]
        %v2438 = vstv %s2437
        %v2439 = vmul.f32 %v2432, %v2438
        %v2440 = vadd.f32 %v2429, %v2439
        %s2441 = sld [smem:[#allocation18 + $0x28]]
        %v2442 = vstv %s2441
        %v2443 = vmul.f32 %v2013, %v2442
        %v2444 = vadd.f32 %v2436, %v2443
        %s2445 = sld [smem:[#allocation18 + $0x5e]]
        %v2446 = vstv %s2445
        %v2447 = vmul.f32 %v2013, %v2446
        %v2448 = vadd.f32 %v2440, %v2447
        %v2449 = vrot.slane %v2013, 1
        %v2450 = vrot.slane %v2014, 1
        %v2451 = vsel %vm1241, %v2449, %v2450
        %s2452 = sld [smem:[#allocation18 + $0x2b]]
        %v2453 = vstv %s2452
        %v2454 = vmul.f32 %v2451, %v2453
        %v2455 = vadd.f32 %v2444, %v2454
        %s2456 = sld [smem:[#allocation18 + $0x61]]
        %v2457 = vstv %s2456
        %v2458 = vmul.f32 %v2451, %v2457
        %v2459 = vadd.f32 %v2448, %v2458
        %2460 = vrot.lane.b32.xlu0 %v2012, 127
        %v2461 = vpop.permute.xlu0 %2460
        %2462 = vrot.lane.b32.xlu0 %v2013, 127
        %v2463 = vpop.permute.xlu0 %2462
        %2464 = vrot.lane.b32.xlu0 %v2014, 127
        %v2465 = vpop.permute.xlu0 %2464
        %v2466 = vrot.slane %v2461, 7
        %v2467 = vrot.slane %v2463, 7
        %v2468 = vsel %vm1221, %v2466, %v2467
        %s2469 = sld [smem:[#allocation18 + $0x26]]
        %v2470 = vstv %s2469
        %v2471 = vmul.f32 %v2468, %v2470
        %v2472 = vadd.f32 %v2455, %v2471
        %s2473 = sld [smem:[#allocation18 + $0x5c]]
        %v2474 = vstv %s2473
        %v2475 = vmul.f32 %v2468, %v2474
        %v2476 = vadd.f32 %v2459, %v2475
        %s2477 = sld [smem:[#allocation18 + $0x29]]
        %v2478 = vstv %s2477
        %v2479 = vmul.f32 %v2463, %v2478
        %v2480 = vadd.f32 %v2472, %v2479
        %s2481 = sld [smem:[#allocation18 + $0x5f]]
        %v2482 = vstv %s2481
        %v2483 = vmul.f32 %v2463, %v2482
        %v2484 = vadd.f32 %v2476, %v2483
        %v2485 = vrot.slane %v2463, 1
        %v2486 = vrot.slane %v2465, 1
        %v2487 = vsel %vm1241, %v2485, %v2486
        %s2488 = sld [smem:[#allocation18 + $0x2c]]
        %v2489 = vstv %s2488
        %v2490 = vmul.f32 %v2487, %v2489
        %v2491 = vadd.f32 %v2480, %v2490
        %s2492 = sld [smem:[#allocation18 + $0x62]]
        %v2493 = vstv %s2492
        %v2494 = vmul.f32 %v2487, %v2493
        %v2495 = vadd.f32 %v2484, %v2494
        %2496 = vrot.lane.b32.xlu0 %v2015, 1
        %v2497 = vpop.permute.xlu0 %2496
        %2498 = vrot.lane.b32.xlu0 %v2016, 1
        %v2499 = vpop.permute.xlu0 %2498
        %2500 = vrot.lane.b32.xlu0 %v2017, 1
        %v2501 = vpop.permute.xlu0 %2500
        %v2502 = vrot.slane %v2497, 7
        %v2503 = vrot.slane %v2499, 7
        %v2504 = vsel %vm1221, %v2502, %v2503
        %s2505 = sld [smem:[#allocation18 + $0x2d]]
        %v2506 = vstv %s2505
        %v2507 = vmul.f32 %v2504, %v2506
        %v2508 = vadd.f32 %v2491, %v2507
        %s2509 = sld [smem:[#allocation18 + $0x63]]
        %v2510 = vstv %s2509
        %v2511 = vmul.f32 %v2504, %v2510
        %v2512 = vadd.f32 %v2495, %v2511
        %s2513 = sld [smem:[#allocation18 + $0x30]]
        %v2514 = vstv %s2513
        %v2515 = vmul.f32 %v2499, %v2514
        %v2516 = vadd.f32 %v2508, %v2515
        %s2517 = sld [smem:[#allocation18 + $0x66]]
        %v2518 = vstv %s2517
        %v2519 = vmul.f32 %v2499, %v2518
        %v2520 = vadd.f32 %v2512, %v2519
        %v2521 = vrot.slane %v2499, 1
        %v2522 = vrot.slane %v2501, 1
        %v2523 = vsel %vm1241, %v2521, %v2522
        %s2524 = sld [smem:[#allocation18 + $0x33]]
        %v2525 = vstv %s2524
        %v2526 = vmul.f32 %v2523, %v2525
        %v2527 = vadd.f32 %v2516, %v2526
        %s2528 = sld [smem:[#allocation18 + $0x69]]
        %v2529 = vstv %s2528
        %v2530 = vmul.f32 %v2523, %v2529
        %v2531 = vadd.f32 %v2520, %v2530
        %v2532 = vrot.slane %v2015, 7
        %v2533 = vrot.slane %v2016, 7
        %v2534 = vsel %vm1221, %v2532, %v2533
        %s2535 = sld [smem:[#allocation18 + $0x2e]]
        %v2536 = vstv %s2535
        %v2537 = vmul.f32 %v2534, %v2536
        %v2538 = vadd.f32 %v2527, %v2537
        %s2539 = sld [smem:[#allocation18 + $0x64]]
        %v2540 = vstv %s2539
        %v2541 = vmul.f32 %v2534, %v2540
        %v2542 = vadd.f32 %v2531, %v2541
        %s2543 = sld [smem:[#allocation18 + $0x31]]
        %v2544 = vstv %s2543
        %v2545 = vmul.f32 %v2016, %v2544
        %v2546 = vadd.f32 %v2538, %v2545
        %s2547 = sld [smem:[#allocation18 + $0x67]]
        %v2548 = vstv %s2547
        %v2549 = vmul.f32 %v2016, %v2548
        %v2550 = vadd.f32 %v2542, %v2549
        %v2551 = vrot.slane %v2016, 1
        %v2552 = vrot.slane %v2017, 1
        %v2553 = vsel %vm1241, %v2551, %v2552
        %s2554 = sld [smem:[#allocation18 + $0x34]]
        %v2555 = vstv %s2554
        %v2556 = vmul.f32 %v2553, %v2555
        %v2557 = vadd.f32 %v2546, %v2556
        %s2558 = sld [smem:[#allocation18 + $0x6a]]
        %v2559 = vstv %s2558
        %v2560 = vmul.f32 %v2553, %v2559
        %v2561 = vadd.f32 %v2550, %v2560
        %2562 = vrot.lane.b32.xlu0 %v2015, 127
        %v2563 = vpop.permute.xlu0 %2562
        %2564 = vrot.lane.b32.xlu0 %v2016, 127
        %v2565 = vpop.permute.xlu0 %2564
        %2566 = vrot.lane.b32.xlu0 %v2017, 127
        %v2567 = vpop.permute.xlu0 %2566
        %v2568 = vrot.slane %v2563, 7
        %v2569 = vrot.slane %v2565, 7
        %v2570 = vsel %vm1221, %v2568, %v2569
        %s2571 = sld [smem:[#allocation18 + $0x2f]]
        %v2572 = vstv %s2571
        %v2573 = vmul.f32 %v2570, %v2572
        %v2574 = vadd.f32 %v2557, %v2573
        %s2575 = sld [smem:[#allocation18 + $0x65]]
        %v2576 = vstv %s2575
        %v2577 = vmul.f32 %v2570, %v2576
        %v2578 = vadd.f32 %v2561, %v2577
        %s2579 = sld [smem:[#allocation18 + $0x32]]
        %v2580 = vstv %s2579
        %v2581 = vmul.f32 %v2565, %v2580
        %v2582 = vadd.f32 %v2574, %v2581
        %s2583 = sld [smem:[#allocation18 + $0x68]]
        %v2584 = vstv %s2583
        %v2585 = vmul.f32 %v2565, %v2584
        %v2586 = vadd.f32 %v2578, %v2585
        %v2587 = vrot.slane %v2565, 1
        %v2588 = vrot.slane %v2567, 1
        %v2589 = vsel %vm1241, %v2587, %v2588
        %s2590 = sld [smem:[#allocation18 + $0x35]]
        %v2591 = vstv %s2590
        %v2592 = vmul.f32 %v2589, %v2591
        %v2593 = vadd.f32 %v2582, %v2592
        %s2594 = sld [smem:[#allocation18 + $0x6b]]
        %v2595 = vstv %s2594
        %v2596 = vmul.f32 %v2589, %v2595
        %v2597 = vadd.f32 %v2586, %v2596
        %s2598 = sld [smem:[#allocation20]]
        %v2599 = vstv %s2598
        %v2600 = vadd.f32 %v2593, %v2599
        %v2601 = vmax.f32 %v2600, 0.0
        %v2602 = vmin.f32 %v2601, 1.0
        %s2603 = sld [smem:[#allocation20 + $0x1]]
        %v2604 = vstv %s2603
        %v2605 = vadd.f32 %v2597, %v2604
        %v2606 = vmax.f32 %v2605, 0.0
        %v2607 = vmin.f32 %v2606, 1.0
        %2608 = vst [vmem:[%s1034] sm:$0xff] %v1340
        %2609 = vst [vmem:[%s1041] sm:$0xff] %v1374
        %2610 = vst [vmem:[%s1076] sm:$0xff] %v1893
        %2611 = vst [vmem:[%s1090] sm:$0xff] %v2602
        %2612 = vst [vmem:[%s1097] sm:$0xff] %v2607
        %2613 = vst [vmem:[%s1048] sm:$0xff] 0.0
        %s2614 = scalar_lea.vmem %s1048, 8 [#allocation24]
        %2615 = vst [vmem:[%s2614] sm:$0xff] %v1403
        %v2616 = vmul.f32 %v1403, 2.0
        %s2617 = scalar_lea.vmem %s1048, 16 [#allocation24]
        %2618 = vst [vmem:[%s2617] sm:$0xff] %v2616
        %v2619 = vmul.f32 %v1403, 3.0
        %s2620 = scalar_lea.vmem %s1048, 24 [#allocation24]
        %2621 = vst [vmem:[%s2620] sm:$0xff] %v2619
        %v2622 = vmul.f32 %v1403, 4.0
        %s2623 = scalar_lea.vmem %s1048, 32 [#allocation24]
        %2624 = vst [vmem:[%s2623] sm:$0xff] %v2622
        %v2625 = vmul.f32 %v1642, 0.0
        %v2626 = vadd.f32 %v1525, %v2625
        %2627 = vst [vmem:[%s1062] sm:$0xff] %v2626
        %v2628 = vadd.f32 %v1374, %v2626
        %2629 = vst [vmem:[%s1069] sm:$0xff] %v2628
        %v2630 = vadd.f32 %v1525, %v1642
        %s2631 = scalar_lea.vmem %s1062, 8 [#allocation27]
        %2632 = vst [vmem:[%s2631] sm:$0xff] %v2630
        %v2633 = vadd.f32 %v1374, %v2630
        %s2634 = scalar_lea.vmem %s1069, 8 [#allocation28]
        %2635 = vst [vmem:[%s2634] sm:$0xff] %v2633
        %v2636 = vmul.f32 %v1642, 2.0
        %v2637 = vadd.f32 %v1525, %v2636
        %s2638 = scalar_lea.vmem %s1062, 16 [#allocation27]
        %2639 = vst [vmem:[%s2638] sm:$0xff] %v2637
        %v2640 = vadd.f32 %v1374, %v2637
        %s2641 = scalar_lea.vmem %s1069, 16 [#allocation28]
        %2642 = vst [vmem:[%s2641] sm:$0xff] %v2640
        %v2643 = vmul.f32 %v1642, 3.0
        %v2644 = vadd.f32 %v1525, %v2643
        %s2645 = scalar_lea.vmem %s1062, 24 [#allocation27]
        %2646 = vst [vmem:[%s2645] sm:$0xff] %v2644
        %v2647 = vadd.f32 %v1374, %v2644
        %s2648 = scalar_lea.vmem %s1069, 24 [#allocation28]
        %2649 = vst [vmem:[%s2648] sm:$0xff] %v2647
        %v2650 = vmul.f32 %v1642, 4.0
        %v2651 = vadd.f32 %v1525, %v2650
        %s2652 = scalar_lea.vmem %s1062, 32 [#allocation27]
        %2653 = vst [vmem:[%s2652] sm:$0xff] %v2651
        %v2654 = vadd.f32 %v1374, %v2651
        %s2655 = scalar_lea.vmem %s1069, 32 [#allocation28]
        %2656 = vst [vmem:[%s2655] sm:$0xff] %v2654
        %v2657 = vsub.f32 %v2602, 0.5
        %v2658 = vsub.f32 %v2607, 0.5
        %v2659 = vmul.f32 %v2658, 1.403
        %v2660 = vadd.f32 %v1893, %v2659
        %v2661 = vmax.f32 %v2660, 0.0
        %v2662 = vmin.f32 %v2661, 1.0
        %v2663 = vmul.f32 %v2658, 0.714
        %v2664 = vsub.f32 %v1893, %v2663
        %v2665 = vmul.f32 %v2657, 0.344
        %v2666 = vsub.f32 %v2664, %v2665
        %v2667 = vmax.f32 %v2666, 0.0
        %v2668 = vmin.f32 %v2667, 1.0
        %v2669 = vmul.f32 %v2657, 1.773
        %v2670 = vadd.f32 %v1893, %v2669
        %v2671 = vmax.f32 %v2670, 0.0
        %v2672 = vmin.f32 %v2671, 1.0
        %2673 = vst [vmem:[%s1083] sm:$0xff] %v2662
        %s2674 = scalar_lea.vmem %s1083, 8 [#allocation31]
        %2675 = vst [vmem:[%s2674] sm:$0xff] %v2668
        %s2676 = scalar_lea.vmem %s1083, 16 [#allocation31]
        %2677 = vst [vmem:[%s2676] sm:$0xff] %v2672
        %v2678 = vld [vmem:[%s922] sm:$0xff]
        %v2679 = vld [vmem:[%s1144] sm:$0xff]
        %v2680 = vld [vmem:[%s1152] sm:$0xff]
        %v2681 = vmul.f32 1.0, %v1373
        %v2682 = vmul.f32 %v2678, %v2681
        %v2683 = vmul.f32 %v2679, %v2681
        %v2684 = vmul.f32 %v2680, %v2681
        %v2685 = vmul.f32 %v2682, 0.299
        %v2686 = vmul.f32 %v2683, 0.587
        %v2687 = vadd.f32 %v2685, %v2686
        %v2688 = vmul.f32 %v2684, 0.114
        %v2689 = vadd.f32 %v2687, %v2688
        %v2690 = vsub.f32 %v2684, %v2689
        %v2691 = vmul.f32 %v2690, 0.564
        %v2692 = vadd.f32 %v2691, 0.5
        %v2693 = vsub.f32 %v2682, %v2689
        %v2694 = vmul.f32 %v2693, 0.713
        %v2695 = vadd.f32 %v2694, 0.5
        %2696 = vst [vmem:[%s1104] sm:$0xff] %v2692
        %2697 = vst [vmem:[%s1111] sm:$0xff] %v2695
        %v2698 = vld [vmem:[%s952] sm:$0xff]
        %s2699 = scalar_lea.vmem %s952, 8 [#allocation12]
        %v2700 = vld [vmem:[%s2699] sm:$0xff]
        %s2701 = scalar_lea.vmem %s952, 16 [#allocation12]
        %v2702 = vld [vmem:[%s2701] sm:$0xff]
        %v2703 = vmul.f32 %v2698, 0.299
        %v2704 = vmul.f32 %v2700, 0.587
        %v2705 = vadd.f32 %v2703, %v2704
        %v2706 = vmul.f32 %v2702, 0.114
        %v2707 = vadd.f32 %v2705, %v2706
        %v2708 = vsub.f32 %v2707, %v1374
        %2709 = vst [vmem:[%s1055] sm:$0xff] %v2708
        %v2710 = vld [vmem:[%s952] sm:$0xff]
        %v2711 = vsub.f32 %v2662, %v2710
        %v2712 = vsel %vm1177, %v2711, 0.0
        %v2713 = vld [vmem:[%s2699] sm:$0xff]
        %v2714 = vsub.f32 %v2668, %v2713
        %v2715 = vsel %vm1177, %v2714, 0.0
        %v2716 = vld [vmem:[%s2701] sm:$0xff]
        %v2717 = vsub.f32 %v2672, %v2716
        %v2718 = vsel %vm1177, %v2717, 0.0
        %v2719 = vmul.f32 %v2712, %v2712
        %2720 = vadd.xlane.f32.xlu0 %v2719
        %v2721 = vpop.xlane.xlu0 %2720
        %v2722 = vrot.slane %v2721, 4
        %v2723 = vadd.f32 %v2721, %v2722
        %v2724 = vrot.slane %v2723, 2
        %v2725 = vadd.f32 %v2723, %v2724
        %v2726 = vrot.slane %v2725, 1
        %v2727 = vadd.f32 %v2725, %v2726
        %s2728 = vtos %v2727
        %v2729 = vmul.f32 %v2715, %v2715
        %2730 = vadd.xlane.f32.xlu0 %v2729
        %v2731 = vpop.xlane.xlu0 %2730
        %v2732 = vrot.slane %v2731, 4
        %v2733 = vadd.f32 %v2731, %v2732
        %v2734 = vrot.slane %v2733, 2
        %v2735 = vadd.f32 %v2733, %v2734
        %v2736 = vrot.slane %v2735, 1
        %v2737 = vadd.f32 %v2735, %v2736
        %s2738 = vtos %v2737
        %s2739 = sadd.f32 %s2728, %s2738
        %v2740 = vmul.f32 %v2718, %v2718
        %2741 = vadd.xlane.f32.xlu0 %v2740
        %v2742 = vpop.xlane.xlu0 %2741
        %v2743 = vrot.slane %v2742, 4
        %v2744 = vadd.f32 %v2742, %v2743
        %v2745 = vrot.slane %v2744, 2
        %v2746 = vadd.f32 %v2744, %v2745
        %v2747 = vrot.slane %v2746, 1
        %v2748 = vadd.f32 %v2746, %v2747
        %s2749 = vtos %v2748
        %s2750 = sadd.f32 %s2739, %s2749
        %v2751 = vstv %s2750
        %v2752 = vadd.f32 %v2751, 0.0
        %2753 = vst [vmem:[%s1118] sm:$0xff] %v2752
        %s2754 = sand.u32 %s386, 1
        %s2755 = scalar_lea.sflag [#allocation7], %s2754
        %s2756 = sand.u32 %s386, 1
        %s2757 = smul.addr %s2756, 8
        %s2758 = scalar_lea.vmem [#allocation21], %s2757
        %s2759 = sand.u32 %s72, 1
        %s2760 = scalar_lea.sflag [#allocation23], %s2759
        %s2761 = sand.u32 %s414, 1
        %s2762 = smul.addr %s2761, 8
        %s2763 = scalar_lea.vmem [#allocation22], %s2762
        %s2764 = sand.u32 %s72, 1
        %s2765 = scalar_lea.sflag [#allocation23], %s2764
        %s2766 = sand.u32 %s442, 1
        %s2767 = smul.addr %s2766, 40
        %s2768 = scalar_lea.vmem [#allocation24], %s2767
        %s2769 = sand.u32 %s72, 1
        %s2770 = scalar_lea.sflag [#allocation26], %s2769
        %s2771 = sand.u32 %s470, 1
        %s2772 = smul.addr %s2771, 8
        %s2773 = scalar_lea.vmem [#allocation25], %s2772
        %s2774 = sand.u32 %s72, 1
        %s2775 = scalar_lea.sflag [#allocation26], %s2774
        %s2776 = sand.u32 %s498, 1
        %s2777 = smul.addr %s2776, 40
        %s2778 = scalar_lea.vmem [#allocation27], %s2777
        %s2779 = sand.u32 %s72, 1
        %s2780 = scalar_lea.sflag [#allocation29], %s2779
        %s2781 = sand.u32 %s526, 1
        %s2782 = smul.addr %s2781, 40
        %s2783 = scalar_lea.vmem [#allocation28], %s2782
        %s2784 = sand.u32 %s72, 1
        %s2785 = scalar_lea.sflag [#allocation29], %s2784
        %s2786 = sand.u32 %s554, 1
        %s2787 = smul.addr %s2786, 8
        %s2788 = scalar_lea.vmem [#allocation30], %s2787
        %s2789 = sand.u32 %s72, 1
        %s2790 = scalar_lea.sflag [#allocation32], %s2789
        %s2791 = sand.u32 %s582, 1
        %s2792 = smul.addr %s2791, 24
        %s2793 = scalar_lea.vmem [#allocation31], %s2792
        %s2794 = sand.u32 %s72, 1
        %s2795 = scalar_lea.sflag [#allocation32], %s2794
        %s2796 = sand.u32 %s610, 1
        %s2797 = smul.addr %s2796, 8
        %s2798 = scalar_lea.vmem [#allocation33], %s2797
        %s2799 = sand.u32 %s72, 1
        %s2800 = scalar_lea.sflag [#allocation35], %s2799
        %s2801 = sand.u32 %s638, 1
        %s2802 = smul.addr %s2801, 8
        %s2803 = scalar_lea.vmem [#allocation34], %s2802
        %s2804 = sand.u32 %s72, 1
        %s2805 = scalar_lea.sflag [#allocation35], %s2804
        %s2806 = sand.u32 %s666, 1
        %s2807 = smul.addr %s2806, 8
        %s2808 = scalar_lea.vmem [#allocation36], %s2807
        %s2809 = sand.u32 %s72, 1
        %s2810 = scalar_lea.sflag [#allocation38], %s2809
        %s2811 = sand.u32 %s694, 1
        %s2812 = smul.addr %s2811, 8
        %s2813 = scalar_lea.vmem [#allocation37], %s2812
        %s2814 = sand.u32 %s72, 1
        %s2815 = scalar_lea.sflag [#allocation38], %s2814
        %s2816 = sand.u32 %s722, 1
        %s2817 = smul.addr %s2816, 8
        %s2818 = scalar_lea.vmem [#allocation39], %s2817
        // Predicated region
        $region105: #{tpu_custom_call.1} parent=67 // pred_check
          %p2819 = pneg %p396
        $region106: #{tpu_custom_call.1} parent=67 // pred_check_branch
          %2821 = sbr.rel (%p2819) target = $region108
        $region107: #{tpu_custom_call.1} parent=67 // pred_region
          %2823 = vsyncadd %s2755, 0
          %s2824 = smul.addr %s76, 2
          %s2825 = sadd.s32 %s77, %s2824
          %s2826 = smul.addr %s2825, 8
          %s2827 = scalar_lea.hbm %s12, %s2826
          %s2829 = sshll.u32 %s2758, 4
          %s2830 = int_to_ptr.vmem [resolvable:$true] %s2829
          %s2831 = sshll.u32 %s2827, 4
          %s2832 = int_to_ptr.hbm [resolvable:$true] %s2831
          %2834 = dma.vmem_to_hbm [thread:$0]  %s2830, 128, %s2832, %s2755
        $region108: #{tpu_custom_call.1} parent=67 // pred_fallthru
          _
        // Predicated region
        $region109: #{tpu_custom_call.1} parent=67 // pred_check
          %p2835 = pneg %p424
        $region110: #{tpu_custom_call.1} parent=67 // pred_check_branch
          %2837 = sbr.rel (%p2835) target = $region112
        $region111: #{tpu_custom_call.1} parent=67 // pred_region
          %2839 = vsyncadd %s2760, 0
          %s2840 = smul.addr %s76, 2
          %s2841 = sadd.s32 %s77, %s2840
          %s2842 = smul.addr %s2841, 8
          %s2843 = scalar_lea.hbm %s13, %s2842
          %s2845 = sshll.u32 %s2763, 4
          %s2846 = int_to_ptr.vmem [resolvable:$true] %s2845
          %s2847 = sshll.u32 %s2843, 4
          %s2848 = int_to_ptr.hbm [resolvable:$true] %s2847
          %2850 = dma.vmem_to_hbm [thread:$0]  %s2846, 128, %s2848, %s2760
        $region112: #{tpu_custom_call.1} parent=67 // pred_fallthru
          _
        // Predicated region
        $region113: #{tpu_custom_call.1} parent=67 // pred_check
          %p2851 = pneg %p452
        $region114: #{tpu_custom_call.1} parent=67 // pred_check_branch
          %2853 = sbr.rel (%p2851) target = $region116
        $region115: #{tpu_custom_call.1} parent=67 // pred_region
          %2855 = vsyncadd %s2765, 0
          %s2856 = smul.addr %s76, 10
          %s2857 = sadd.s32 %s77, %s2856
          %s2858 = smul.addr %s2857, 8
          %s2859 = scalar_lea.hbm %s14, %s2858
          %s2860 = sshll.u32 %s2768, 4
          %s2861 = int_to_ptr.vmem [resolvable:$true] %s2860
          %s2862 = sshll.u32 %s2859, 4
          %s2863 = int_to_ptr.hbm [resolvable:$true] %s2862
          %2868 = dma.vmem_to_hbm [thread:$0]  %s2861, 640, %s2863, %s2765, 128, 256, 8
        $region116: #{tpu_custom_call.1} parent=67 // pred_fallthru
          _
        // Predicated region
        $region117: #{tpu_custom_call.1} parent=67 // pred_check
          %p2869 = pneg %p480
        $region118: #{tpu_custom_call.1} parent=67 // pred_check_branch
          %2871 = sbr.rel (%p2869) target = $region120
        $region119: #{tpu_custom_call.1} parent=67 // pred_region
          %2873 = vsyncadd %s2770, 0
          %s2874 = smul.addr %s76, 2
          %s2875 = sadd.s32 %s77, %s2874
          %s2876 = smul.addr %s2875, 8
          %s2877 = scalar_lea.hbm %s15, %s2876
          %s2879 = sshll.u32 %s2773, 4
          %s2880 = int_to_ptr.vmem [resolvable:$true] %s2879
          %s2881 = sshll.u32 %s2877, 4
          %s2882 = int_to_ptr.hbm [resolvable:$true] %s2881
          %2884 = dma.vmem_to_hbm [thread:$0]  %s2880, 128, %s2882, %s2770
        $region120: #{tpu_custom_call.1} parent=67 // pred_fallthru
          _
        // Predicated region
        $region121: #{tpu_custom_call.1} parent=67 // pred_check
          %p2885 = pneg %p508
        $region122: #{tpu_custom_call.1} parent=67 // pred_check_branch
          %2887 = sbr.rel (%p2885) target = $region124
        $region123: #{tpu_custom_call.1} parent=67 // pred_region
          %2889 = vsyncadd %s2775, 0
          %s2890 = smul.addr %s76, 10
          %s2891 = sadd.s32 %s77, %s2890
          %s2892 = smul.addr %s2891, 8
          %s2893 = scalar_lea.hbm %s16, %s2892
          %s2894 = sshll.u32 %s2778, 4
          %s2895 = int_to_ptr.vmem [resolvable:$true] %s2894
          %s2896 = sshll.u32 %s2893, 4
          %s2897 = int_to_ptr.hbm [resolvable:$true] %s2896
          %2902 = dma.vmem_to_hbm [thread:$0]  %s2895, 640, %s2897, %s2775, 128, 256, 8
        $region124: #{tpu_custom_call.1} parent=67 // pred_fallthru
          _
        // Predicated region
        $region125: #{tpu_custom_call.1} parent=67 // pred_check
          %p2903 = pneg %p536
        $region126: #{tpu_custom_call.1} parent=67 // pred_check_branch
          %2905 = sbr.rel (%p2903) target = $region128
        $region127: #{tpu_custom_call.1} parent=67 // pred_region
          %2907 = vsyncadd %s2780, 0
          %s2908 = smul.addr %s76, 10
          %s2909 = sadd.s32 %s77, %s2908
          %s2910 = smul.addr %s2909, 8
          %s2911 = scalar_lea.hbm %s17, %s2910
          %s2912 = sshll.u32 %s2783, 4
          %s2913 = int_to_ptr.vmem [resolvable:$true] %s2912
          %s2914 = sshll.u32 %s2911, 4
          %s2915 = int_to_ptr.hbm [resolvable:$true] %s2914
          %2920 = dma.vmem_to_hbm [thread:$0]  %s2913, 640, %s2915, %s2780, 128, 256, 8
        $region128: #{tpu_custom_call.1} parent=67 // pred_fallthru
          _
        // Predicated region
        $region129: #{tpu_custom_call.1} parent=67 // pred_check
          %p2921 = pneg %p564
        $region130: #{tpu_custom_call.1} parent=67 // pred_check_branch
          %2923 = sbr.rel (%p2921) target = $region132
        $region131: #{tpu_custom_call.1} parent=67 // pred_region
          %2925 = vsyncadd %s2785, 0
          %s2926 = smul.addr %s76, 2
          %s2927 = sadd.s32 %s77, %s2926
          %s2928 = smul.addr %s2927, 8
          %s2929 = scalar_lea.hbm %s18, %s2928
          %s2931 = sshll.u32 %s2788, 4
          %s2932 = int_to_ptr.vmem [resolvable:$true] %s2931
          %s2933 = sshll.u32 %s2929, 4
          %s2934 = int_to_ptr.hbm [resolvable:$true] %s2933
          %2936 = dma.vmem_to_hbm [thread:$0]  %s2932, 128, %s2934, %s2785
        $region132: #{tpu_custom_call.1} parent=67 // pred_fallthru
          _
        // Predicated region
        $region133: #{tpu_custom_call.1} parent=67 // pred_check
          %p2937 = pneg %p592
        $region134: #{tpu_custom_call.1} parent=67 // pred_check_branch
          %2939 = sbr.rel (%p2937) target = $region136
        $region135: #{tpu_custom_call.1} parent=67 // pred_region
          %2941 = vsyncadd %s2790, 0
          %s2942 = smul.addr %s76, 6
          %s2943 = sadd.s32 %s77, %s2942
          %s2944 = smul.addr %s2943, 8
          %s2945 = scalar_lea.hbm %s19, %s2944
          %s2946 = sshll.u32 %s2793, 4
          %s2947 = int_to_ptr.vmem [resolvable:$true] %s2946
          %s2948 = sshll.u32 %s2945, 4
          %s2949 = int_to_ptr.hbm [resolvable:$true] %s2948
          %2954 = dma.vmem_to_hbm [thread:$0]  %s2947, 384, %s2949, %s2790, 128, 256, 8
        $region136: #{tpu_custom_call.1} parent=67 // pred_fallthru
          _
        // Predicated region
        $region137: #{tpu_custom_call.1} parent=67 // pred_check
          %p2955 = pneg %p620
        $region138: #{tpu_custom_call.1} parent=67 // pred_check_branch
          %2957 = sbr.rel (%p2955) target = $region140
        $region139: #{tpu_custom_call.1} parent=67 // pred_region
          %2959 = vsyncadd %s2795, 0
          %s2960 = smul.addr %s76, 2
          %s2961 = sadd.s32 %s77, %s2960
          %s2962 = smul.addr %s2961, 8
          %s2963 = scalar_lea.hbm %s20, %s2962
          %s2965 = sshll.u32 %s2798, 4
          %s2966 = int_to_ptr.vmem [resolvable:$true] %s2965
          %s2967 = sshll.u32 %s2963, 4
          %s2968 = int_to_ptr.hbm [resolvable:$true] %s2967
          %2970 = dma.vmem_to_hbm [thread:$0]  %s2966, 128, %s2968, %s2795
        $region140: #{tpu_custom_call.1} parent=67 // pred_fallthru
          _
        // Predicated region
        $region141: #{tpu_custom_call.1} parent=67 // pred_check
          %p2971 = pneg %p648
        $region142: #{tpu_custom_call.1} parent=67 // pred_check_branch
          %2973 = sbr.rel (%p2971) target = $region144
        $region143: #{tpu_custom_call.1} parent=67 // pred_region
          %2975 = vsyncadd %s2800, 0
          %s2976 = smul.addr %s76, 2
          %s2977 = sadd.s32 %s77, %s2976
          %s2978 = smul.addr %s2977, 8
          %s2979 = scalar_lea.hbm %s21, %s2978
          %s2981 = sshll.u32 %s2803, 4
          %s2982 = int_to_ptr.vmem [resolvable:$true] %s2981
          %s2983 = sshll.u32 %s2979, 4
          %s2984 = int_to_ptr.hbm [resolvable:$true] %s2983
          %2986 = dma.vmem_to_hbm [thread:$0]  %s2982, 128, %s2984, %s2800
        $region144: #{tpu_custom_call.1} parent=67 // pred_fallthru
          _
        // Predicated region
        $region145: #{tpu_custom_call.1} parent=67 // pred_check
          %p2987 = pneg %p676
        $region146: #{tpu_custom_call.1} parent=67 // pred_check_branch
          %2989 = sbr.rel (%p2987) target = $region148
        $region147: #{tpu_custom_call.1} parent=67 // pred_region
          %2991 = vsyncadd %s2805, 0
          %s2992 = smul.addr %s76, 2
          %s2993 = sadd.s32 %s77, %s2992
          %s2994 = smul.addr %s2993, 8
          %s2995 = scalar_lea.hbm %s22, %s2994
          %s2997 = sshll.u32 %s2808, 4
          %s2998 = int_to_ptr.vmem [resolvable:$true] %s2997
          %s2999 = sshll.u32 %s2995, 4
          %s3000 = int_to_ptr.hbm [resolvable:$true] %s2999
          %3002 = dma.vmem_to_hbm [thread:$0]  %s2998, 128, %s3000, %s2805
        $region148: #{tpu_custom_call.1} parent=67 // pred_fallthru
          _
        // Predicated region
        $region149: #{tpu_custom_call.1} parent=67 // pred_check
          %p3003 = pneg %p704
        $region150: #{tpu_custom_call.1} parent=67 // pred_check_branch
          %3005 = sbr.rel (%p3003) target = $region152
        $region151: #{tpu_custom_call.1} parent=67 // pred_region
          %3007 = vsyncadd %s2810, 0
          %s3008 = smul.addr %s76, 2
          %s3009 = sadd.s32 %s77, %s3008
          %s3010 = smul.addr %s3009, 8
          %s3011 = scalar_lea.hbm %s23, %s3010
          %s3013 = sshll.u32 %s2813, 4
          %s3014 = int_to_ptr.vmem [resolvable:$true] %s3013
          %s3015 = sshll.u32 %s3011, 4
          %s3016 = int_to_ptr.hbm [resolvable:$true] %s3015
          %3018 = dma.vmem_to_hbm [thread:$0]  %s3014, 128, %s3016, %s2810
        $region152: #{tpu_custom_call.1} parent=67 // pred_fallthru
          _
        // Predicated region
        $region153: #{tpu_custom_call.1} parent=67 // pred_check
          %p3019 = pneg %p732
        $region154: #{tpu_custom_call.1} parent=67 // pred_check_branch
          %3021 = sbr.rel (%p3019) target = $region156
        $region155: #{tpu_custom_call.1} parent=67 // pred_region
          %3023 = vsyncadd %s2815, 0
          %s3024 = smul.addr %s76, 2
          %s3025 = sadd.s32 %s77, %s3024
          %s3026 = smul.addr %s3025, 8
          %s3027 = scalar_lea.hbm %s24, %s3026
          %s3029 = sshll.u32 %s2818, 4
          %s3030 = int_to_ptr.vmem [resolvable:$true] %s3029
          %s3031 = sshll.u32 %s3027, 4
          %s3032 = int_to_ptr.hbm [resolvable:$true] %s3031
          %3034 = dma.vmem_to_hbm [thread:$0]  %s3030, 128, %s3032, %s2815
        $region156: #{tpu_custom_call.1} parent=67 // pred_fallthru
          _
      $region68: #{tpu_custom_call.1} parent=5 // pred_fallthru
        _
      %p3035 = scmp.le.s32.totalorder 2, %s67
      // Predicated region
      $region157: #{tpu_custom_call.1} parent=5 // pred_check
        %p3036 = pneg %p3035
      $region158: #{tpu_custom_call.1} parent=5 // pred_check_branch
        %3038 = sbr.rel (%p3036) target = $region160
      $region159: #{tpu_custom_call.1} parent=5 // pred_region
        %s3039 = ssub.s32 %s67, 2
        // Predicated region
        $region161: #{tpu_custom_call.1} parent=159 // pred_check
          %p3040 = pneg %p402
        $region162: #{tpu_custom_call.1} parent=159 // pred_check_branch
          %3042 = sbr.rel (%p3040) target = $region164
        $region163: #{tpu_custom_call.1} parent=159 // pred_region
          %s3043 = sand.u32 %s387, 1
          %s3044 = scalar_lea.sflag [#allocation7], %s3043
          %s3045 = sand.u32 %s387, 1
          %s3046 = smul.addr %s3045, 8
          %s3047 = scalar_lea.vmem [#allocation21], %s3046
          %3049 = dma.done %s3044, 128
        $region164: #{tpu_custom_call.1} parent=159 // pred_fallthru
          _
        // Predicated region
        $region165: #{tpu_custom_call.1} parent=159 // pred_check
          %p3050 = pneg %p430
        $region166: #{tpu_custom_call.1} parent=159 // pred_check_branch
          %3052 = sbr.rel (%p3050) target = $region168
        $region167: #{tpu_custom_call.1} parent=159 // pred_region
          %s3053 = sand.u32 %s73, 1
          %s3054 = scalar_lea.sflag [#allocation23], %s3053
          %s3055 = sand.u32 %s415, 1
          %s3056 = smul.addr %s3055, 8
          %s3057 = scalar_lea.vmem [#allocation22], %s3056
          %3059 = dma.done %s3054, 128
        $region168: #{tpu_custom_call.1} parent=159 // pred_fallthru
          _
        // Predicated region
        $region169: #{tpu_custom_call.1} parent=159 // pred_check
          %p3060 = pneg %p458
        $region170: #{tpu_custom_call.1} parent=159 // pred_check_branch
          %3062 = sbr.rel (%p3060) target = $region172
        $region171: #{tpu_custom_call.1} parent=159 // pred_region
          %s3063 = sand.u32 %s73, 1
          %s3064 = scalar_lea.sflag [#allocation23], %s3063
          %s3065 = sand.u32 %s443, 1
          %s3066 = smul.addr %s3065, 40
          %s3067 = scalar_lea.vmem [#allocation24], %s3066
          %3069 = dma.done %s3064, 640
        $region172: #{tpu_custom_call.1} parent=159 // pred_fallthru
          _
        // Predicated region
        $region173: #{tpu_custom_call.1} parent=159 // pred_check
          %p3070 = pneg %p486
        $region174: #{tpu_custom_call.1} parent=159 // pred_check_branch
          %3072 = sbr.rel (%p3070) target = $region176
        $region175: #{tpu_custom_call.1} parent=159 // pred_region
          %s3073 = sand.u32 %s73, 1
          %s3074 = scalar_lea.sflag [#allocation26], %s3073
          %s3075 = sand.u32 %s471, 1
          %s3076 = smul.addr %s3075, 8
          %s3077 = scalar_lea.vmem [#allocation25], %s3076
          %3079 = dma.done %s3074, 128
        $region176: #{tpu_custom_call.1} parent=159 // pred_fallthru
          _
        // Predicated region
        $region177: #{tpu_custom_call.1} parent=159 // pred_check
          %p3080 = pneg %p514
        $region178: #{tpu_custom_call.1} parent=159 // pred_check_branch
          %3082 = sbr.rel (%p3080) target = $region180
        $region179: #{tpu_custom_call.1} parent=159 // pred_region
          %s3083 = sand.u32 %s73, 1
          %s3084 = scalar_lea.sflag [#allocation26], %s3083
          %s3085 = sand.u32 %s499, 1
          %s3086 = smul.addr %s3085, 40
          %s3087 = scalar_lea.vmem [#allocation27], %s3086
          %3089 = dma.done %s3084, 640
        $region180: #{tpu_custom_call.1} parent=159 // pred_fallthru
          _
        // Predicated region
        $region181: #{tpu_custom_call.1} parent=159 // pred_check
          %p3090 = pneg %p542
        $region182: #{tpu_custom_call.1} parent=159 // pred_check_branch
          %3092 = sbr.rel (%p3090) target = $region184
        $region183: #{tpu_custom_call.1} parent=159 // pred_region
          %s3093 = sand.u32 %s73, 1
          %s3094 = scalar_lea.sflag [#allocation29], %s3093
          %s3095 = sand.u32 %s527, 1
          %s3096 = smul.addr %s3095, 40
          %s3097 = scalar_lea.vmem [#allocation28], %s3096
          %3099 = dma.done %s3094, 640
        $region184: #{tpu_custom_call.1} parent=159 // pred_fallthru
          _
        // Predicated region
        $region185: #{tpu_custom_call.1} parent=159 // pred_check
          %p3100 = pneg %p570
        $region186: #{tpu_custom_call.1} parent=159 // pred_check_branch
          %3102 = sbr.rel (%p3100) target = $region188
        $region187: #{tpu_custom_call.1} parent=159 // pred_region
          %s3103 = sand.u32 %s73, 1
          %s3104 = scalar_lea.sflag [#allocation29], %s3103
          %s3105 = sand.u32 %s555, 1
          %s3106 = smul.addr %s3105, 8
          %s3107 = scalar_lea.vmem [#allocation30], %s3106
          %3109 = dma.done %s3104, 128
        $region188: #{tpu_custom_call.1} parent=159 // pred_fallthru
          _
        // Predicated region
        $region189: #{tpu_custom_call.1} parent=159 // pred_check
          %p3110 = pneg %p598
        $region190: #{tpu_custom_call.1} parent=159 // pred_check_branch
          %3112 = sbr.rel (%p3110) target = $region192
        $region191: #{tpu_custom_call.1} parent=159 // pred_region
          %s3113 = sand.u32 %s73, 1
          %s3114 = scalar_lea.sflag [#allocation32], %s3113
          %s3115 = sand.u32 %s583, 1
          %s3116 = smul.addr %s3115, 24
          %s3117 = scalar_lea.vmem [#allocation31], %s3116
          %3119 = dma.done %s3114, 384
        $region192: #{tpu_custom_call.1} parent=159 // pred_fallthru
          _
        // Predicated region
        $region193: #{tpu_custom_call.1} parent=159 // pred_check
          %p3120 = pneg %p626
        $region194: #{tpu_custom_call.1} parent=159 // pred_check_branch
          %3122 = sbr.rel (%p3120) target = $region196
        $region195: #{tpu_custom_call.1} parent=159 // pred_region
          %s3123 = sand.u32 %s73, 1
          %s3124 = scalar_lea.sflag [#allocation32], %s3123
          %s3125 = sand.u32 %s611, 1
          %s3126 = smul.addr %s3125, 8
          %s3127 = scalar_lea.vmem [#allocation33], %s3126
          %3129 = dma.done %s3124, 128
        $region196: #{tpu_custom_call.1} parent=159 // pred_fallthru
          _
        // Predicated region
        $region197: #{tpu_custom_call.1} parent=159 // pred_check
          %p3130 = pneg %p654
        $region198: #{tpu_custom_call.1} parent=159 // pred_check_branch
          %3132 = sbr.rel (%p3130) target = $region200
        $region199: #{tpu_custom_call.1} parent=159 // pred_region
          %s3133 = sand.u32 %s73, 1
          %s3134 = scalar_lea.sflag [#allocation35], %s3133
          %s3135 = sand.u32 %s639, 1
          %s3136 = smul.addr %s3135, 8
          %s3137 = scalar_lea.vmem [#allocation34], %s3136
          %3139 = dma.done %s3134, 128
        $region200: #{tpu_custom_call.1} parent=159 // pred_fallthru
          _
        // Predicated region
        $region201: #{tpu_custom_call.1} parent=159 // pred_check
          %p3140 = pneg %p682
        $region202: #{tpu_custom_call.1} parent=159 // pred_check_branch
          %3142 = sbr.rel (%p3140) target = $region204
        $region203: #{tpu_custom_call.1} parent=159 // pred_region
          %s3143 = sand.u32 %s73, 1
          %s3144 = scalar_lea.sflag [#allocation35], %s3143
          %s3145 = sand.u32 %s667, 1
          %s3146 = smul.addr %s3145, 8
          %s3147 = scalar_lea.vmem [#allocation36], %s3146
          %3149 = dma.done %s3144, 128
        $region204: #{tpu_custom_call.1} parent=159 // pred_fallthru
          _
        // Predicated region
        $region205: #{tpu_custom_call.1} parent=159 // pred_check
          %p3150 = pneg %p710
        $region206: #{tpu_custom_call.1} parent=159 // pred_check_branch
          %3152 = sbr.rel (%p3150) target = $region208
        $region207: #{tpu_custom_call.1} parent=159 // pred_region
          %s3153 = sand.u32 %s73, 1
          %s3154 = scalar_lea.sflag [#allocation38], %s3153
          %s3155 = sand.u32 %s695, 1
          %s3156 = smul.addr %s3155, 8
          %s3157 = scalar_lea.vmem [#allocation37], %s3156
          %3159 = dma.done %s3154, 128
        $region208: #{tpu_custom_call.1} parent=159 // pred_fallthru
          _
        // Predicated region
        $region209: #{tpu_custom_call.1} parent=159 // pred_check
          %p3160 = pneg %p738
        $region210: #{tpu_custom_call.1} parent=159 // pred_check_branch
          %3162 = sbr.rel (%p3160) target = $region212
        $region211: #{tpu_custom_call.1} parent=159 // pred_region
          %s3163 = sand.u32 %s73, 1
          %s3164 = scalar_lea.sflag [#allocation38], %s3163
          %s3165 = sand.u32 %s723, 1
          %s3166 = smul.addr %s3165, 8
          %s3167 = scalar_lea.vmem [#allocation39], %s3166
          %3169 = dma.done %s3164, 128
        $region212: #{tpu_custom_call.1} parent=159 // pred_fallthru
          _
      $region160: #{tpu_custom_call.1} parent=5 // pred_fallthru
        _
    $region6: #{tpu_custom_call.1} parent=1 // loop_footer
      %s71 = sadd.s32 1, %s67
    $region7: #{tpu_custom_call.1} parent=1 // loop_footer_branch
      %66 = sbr.rel target = $region3
    $region8: #{tpu_custom_call.1} parent=1 // loop_exit
      _
    %3170 = vsyncpa [#allocation6], 1
    %s3171 = scalar_lea.sflag [#allocation6], 1
    %3172 = vsyncpa %s3171, 1
    %3173 = vsyncpa [#allocation10], 1
    %s3174 = scalar_lea.sflag [#allocation10], 1
    %3175 = vsyncpa %s3174, 1
    %3176 = vsyncpa [#allocation13], 1
    %s3177 = scalar_lea.sflag [#allocation13], 1
    %3178 = vsyncpa %s3177, 1
    %3179 = vsyncpa [#allocation7], 1
    %s3180 = scalar_lea.sflag [#allocation7], 1
    %3181 = vsyncpa %s3180, 1
    %3182 = vsyncpa [#allocation23], 1
    %s3183 = scalar_lea.sflag [#allocation23], 1
    %3184 = vsyncpa %s3183, 1
    %3185 = vsyncpa [#allocation26], 1
    %s3186 = scalar_lea.sflag [#allocation26], 1
    %3187 = vsyncpa %s3186, 1
    %3188 = vsyncpa [#allocation29], 1
    %s3189 = scalar_lea.sflag [#allocation29], 1
    %3190 = vsyncpa %s3189, 1
    %3191 = vsyncpa [#allocation32], 1
    %s3192 = scalar_lea.sflag [#allocation32], 1
    %3193 = vsyncpa %s3192, 1
    %3194 = vsyncpa [#allocation35], 1
    %s3195 = scalar_lea.sflag [#allocation35], 1
    %3196 = vsyncpa %s3195, 1
    %3197 = vsyncpa [#allocation38], 1
    %s3198 = scalar_lea.sflag [#allocation38], 1
    %3199 = vsyncpa %s3198, 1
    %3200 = vsyncpa [#allocation8], 1
    %s3201 = scalar_lea.sflag [#allocation8], 1
    %3202 = vsyncpa %s3201, 1
    %3203 = vsyncpa [#allocation16], 1
    %3204 = vsyncpa [#allocation19], 1

</llo_original>
